<compile_context>
chip_gen: v5e
topology: v5e:2x2
jax: 0.10.0
libtpu: 0.0.40
codegen_flags: <defaults>
</compile_context>

<pallas_src>
import jax
import jax.numpy as jnp
from jax import lax
from jax.experimental import pallas as pl
from jax.experimental.pallas import tpu as pltpu

# ---- scaled-down dimensions (structurally identical to the module) ----------
B = 2                       # batch per siamese branch
C, H, W = 128, 4, 4         # feature-extractor output (real module: 2048, 8, 8)
D0 = C * H * W              # 2048   (real: 2048*8*8 = 131072)
D1 = 512                    # real: 2048
D2 = 256                    # real: 1024
D3 = 128                    # real: 512
BN_EPS = 1e-5               # nn.BatchNorm1d default
NORM_EPS = 1e-12            # F.normalize default

TM = 16                     # row tile: bf16 native (16,128) vreg packing; raise
                            # to 128 (v5e) / 256 (v6e/v7x) once 3*B is that big
TK = 1024                   # layer-1 K tile (real scale: ~4096 on v7x,
                            # ~8192 on v5e/v6e — see header notes)


def fc1_head_kernel(x_ref, w1_ref, s1_ref, t1_ref, w2_ref, s2_ref, t2_ref,
                    w3_ref, s3_ref, t3_ref, o_ref, acc_ref):
    """fc1 MLP + row L2 normalize.

    Weights are int8 (per-output-column quantized); dequant*BN scale is one f32
    per-column multiply after each matmul; all accumulation is f32.
    Grid = (row tiles, layer-1 K tiles): layer 1 accumulates into acc_ref,
    layers 2/3 + normalize run on the last K step.
    """
    k = pl.program_id(1)

    @pl.when(k == 0)
    def _():
        acc_ref[...] = jnp.zeros_like(acc_ref)

    # Layer 1 partial: (TM, TK) bf16 @ (TK, D1) int8->bf16, f32 accumulate.
    acc_ref[...] += jnp.dot(x_ref[...], w1_ref[...].astype(jnp.bfloat16),
                            preferred_element_type=jnp.float32)

    @pl.when(k == pl.num_programs(1) - 1)
    def _():
        # Layer 1 epilogue: per-column (dequant * BN) scale, BN shift, ReLU.
        h = jnp.maximum(acc_ref[...] * s1_ref[...] + t1_ref[...], 0.0)

        # Layer 2: Linear(D1->D2, bias=False) [int8 weight] + scale/shift + ReLU.
        h = jnp.dot(h.astype(jnp.bfloat16), w2_ref[...].astype(jnp.bfloat16),
                    preferred_element_type=jnp.float32)
        h = jnp.maximum(h * s2_ref[...] + t2_ref[...], 0.0)

        # Layer 3: Linear(D2->D3, bias=False) [int8 weight] + scale/shift.
        h = jnp.dot(h.astype(jnp.bfloat16), w3_ref[...].astype(jnp.bfloat16),
                    preferred_element_type=jnp.float32)
        h = h * s3_ref[...] + t3_ref[...]

        # F.normalize: x / max(||x||_2, eps) == x * rsqrt(max(sum(x^2), eps^2)).
        sumsq = jnp.sum(h * h, axis=-1, keepdims=True)
        inv = lax.rsqrt(jnp.maximum(sumsq, NORM_EPS * NORM_EPS))
        o_ref[...] = (h * inv).astype(o_ref.dtype)


def fused_fc1_head(x_bf16, params):
    """x_bf16: (M_pad, D0) stacked+padded bf16 features -> (M_pad, D3) f32."""
    (w1q, s1, t1, w2q, s2, t2, w3q, s3, t3) = params
    m_pad = x_bf16.shape[0]
    assert m_pad % TM == 0 and D0 % TK == 0
    grid = (m_pad // TM, D0 // TK)

    in_specs = [
        pl.BlockSpec((TM, TK), lambda i, k: (i, k)),   # x row/K tile   (bf16)
        pl.BlockSpec((TK, D1), lambda i, k: (k, 0)),   # w1 K tile      (int8)
        pl.BlockSpec((1, D1), lambda i, k: (0, 0)),    # s1 dequant*BN scale
        pl.BlockSpec((1, D1), lambda i, k: (0, 0)),    # t1 BN shift
        pl.BlockSpec((D1, D2), lambda i, k: (0, 0)),   # w2             (int8)
        pl.BlockSpec((1, D2), lambda i, k: (0, 0)),    # s2
        pl.BlockSpec((1, D2), lambda i, k: (0, 0)),    # t2
        pl.BlockSpec((D2, D3), lambda i, k: (0, 0)),   # w3             (int8)
        pl.BlockSpec((1, D3), lambda i, k: (0, 0)),    # s3
        pl.BlockSpec((1, D3), lambda i, k: (0, 0)),    # t3
    ]
    out_spec = pl.BlockSpec((TM, D3), lambda i, k: (i, 0))

    weight_bytes = D0 * D1 + D1 * D2 + D2 * D3                   # int8 weights
    vec_bytes = 4 * 2 * (D1 + D2 + D3)                           # f32 scales+shifts
    io_bytes = 2 * m_pad * D0 + 4 * m_pad * D3                   # bf16 x, f32 out
    cost = pl.CostEstimate(
        flops=2 * m_pad * (D0 * D1 + D1 * D2 + D2 * D3),
        transcendentals=m_pad,                                   # one rsqrt / row
        bytes_accessed=weight_bytes + vec_bytes + io_bytes,
    )

    return pl.pallas_call(
        fc1_head_kernel,
        out_shape=jax.ShapeDtypeStruct((m_pad, D3), jnp.float32),
        grid=grid,
        in_specs=in_specs,
        out_specs=out_spec,
        scratch_shapes=[pltpu.VMEM((TM, D1), jnp.float32)],      # layer-1 f32 acc
        compiler_params=pltpu.CompilerParams(
            # Row tiles are independent ("parallel"; no-op at grid size 1);
            # K is the layer-1 reduction -> innermost + "arbitrary".
            dimension_semantics=("parallel", "arbitrary"),
        ),
        cost_estimate=cost,
    )(x_bf16, w1q, s1, t1, w2q, s2, t2, w3q, s3, t3)


def siamese_forward(input1, input2, input3, params):
    """Mirrors SiameseNetworkL2Net1WithOrthoNet.forward; the three shared-weight
    branches are fused into one Pallas call (weights leave HBM exactly once)."""
    b = input1.shape[0]
    # torch.flatten(x, 1) on the NCHW features; cast to bf16 *before* the single
    # concatenate and fold the row pad into it (one cheap XLA op, no extra
    # pad/astype HBM round trips).
    xs = [x.reshape(b, -1).astype(jnp.bfloat16) for x in (input1, input2, input3)]
    m = 3 * b
    m_pad = ((m + TM - 1) // TM) * TM
    if m_pad != m:
        xs.append(jnp.zeros((m_pad - m, D0), jnp.bfloat16))
    x = jnp.concatenate(xs, axis=0)                              # (m_pad, D0) bf16
    out = fused_fc1_head(x, params)                              # (m_pad, D3) f32
    return out[:b], out[b:2 * b], out[2 * b:3 * b]


def make_params(key):
    """Deterministic init mirroring _init_params():
       Linear: xavier_normal_, bias=False.  BatchNorm1d (eval semantics):
       weight=1, bias=0, running_mean=0, running_var=1.
       Weights are quantized to int8 per output column; the dequant scale is
       folded with the BN scale into a single f32 per-column multiply."""
    k1, k2, k3 = jax.random.split(key, 3)

    def xavier_normal(k, fan_in, fan_out):
        std = (2.0 / (fan_in + fan_out)) ** 0.5
        return std * jax.random.normal(k, (fan_in, fan_out), dtype=jnp.float32)

    def bn_fold(dim):
        gamma = jnp.ones((1, dim), jnp.float32)
        beta = jnp.zeros((1, dim), jnp.float32)
        mean = jnp.zeros((1, dim), jnp.float32)
        var = jnp.ones((1, dim), jnp.float32)
        scale = gamma / jnp.sqrt(var + BN_EPS)
        shift = beta - mean * scale
        return scale, shift

    def quant_int8(w):
        amax = jnp.max(jnp.abs(w), axis=0, keepdims=True)        # (1, out)
        qscale = jnp.where(amax > 0, amax / 127.0, 1.0)
        q = jnp.clip(jnp.round(w / qscale), -127, 127).astype(jnp.int8)
        return q, qscale

    def layer(k, fan_in, fan_out):
        bn_scale, bn_shift = bn_fold(fan_out)
        q, qscale = quant_int8(xavier_normal(k, fan_in, fan_out))
        return q, (qscale * bn_scale), bn_shift                  # int8, f32, f32

    w1q, s1, t1 = layer(k1, D0, D1)
    w2q, s2, t2 = layer(k2, D1, D2)
    w3q, s3, t3 = layer(k3, D2, D3)
    return (w1q, s1, t1, w2q, s2, t2, w3q, s3, t3)


if __name__ == "__main__":
    key = jax.random.PRNGKey(0)
    k_in1, k_in2, k_in3, k_param = jax.random.split(key, 4)

    # TODO(synk): orthonet_mod_50 / timm resnetv2_50x1_bit feature extractor
    # (pretrained, checkpoint-loaded) is not translated; the kernel consumes
    # its NCHW output features directly.
    input1 = jax.random.normal(k_in1, (B, C, H, W), dtype=jnp.float32)
    input2 = jax.random.normal(k_in2, (B, C, H, W), dtype=jnp.float32)
    input3 = jax.random.normal(k_in3, (B, C, H, W), dtype=jnp.float32)

    params = make_params(k_param)

    o1, o2, o3 = siamese_forward(input1, input2, input3, params)
    jax.block_until_ready((o1, o2, o3))

    # Sanity: shapes, unit L2 norm per row (normalize is done in f32), and the
    # module's check(): no NaN / Inf.
    assert o1.shape == (B, D3) and o2.shape == (B, D3) and o3.shape == (B, D3)
    for o in (o1, o2, o3):
        norms = jnp.linalg.norm(o, axis=1)
        assert bool(jnp.all(jnp.abs(norms - 1.0) < 1e-3))
        assert not bool(jnp.any(jnp.isnan(o)) or jnp.any(jnp.isinf(o)))

    print("KERNEL_OK")
</pallas_src>

<mosaic_0001>
module attributes {stable_mosaic.version = 11 : i64} {
  func.func @fc1_head_kernel(%arg0: i32, %arg1: i32, %arg2: memref<16x1024xbf16, #tpu.memory_space<vmem>>, %arg3: memref<1024x512xi8, #tpu.memory_space<vmem>>, %arg4: memref<1x512xf32, #tpu.memory_space<vmem>>, %arg5: memref<1x512xf32, #tpu.memory_space<vmem>>, %arg6: memref<512x256xi8, #tpu.memory_space<vmem>>, %arg7: memref<1x256xf32, #tpu.memory_space<vmem>>, %arg8: memref<1x256xf32, #tpu.memory_space<vmem>>, %arg9: memref<256x128xi8, #tpu.memory_space<vmem>>, %arg10: memref<1x128xf32, #tpu.memory_space<vmem>>, %arg11: memref<1x128xf32, #tpu.memory_space<vmem>>, %arg12: memref<16x128xf32, #tpu.memory_space<vmem>>, %arg13: memref<16x512xf32, #tpu.memory_space<vmem>>) attributes {dimension_semantics = [#tpu.dimension_semantics<parallel>, #tpu.dimension_semantics<arbitrary>], iteration_bounds = array<i64: 1, 2>, scalar_prefetch = 0 : i64, scratch_operands = 1 : i64, tpu.core_type = #tpu.core_type<tc>, window_params = [{transform_indices = @transform_0, window_bounds = array<i64: 16, 1024>}, {transform_indices = @transform_1, window_bounds = array<i64: 1024, 512>}, {pipeline_mode = #tpu.pipeline_mode<synchronous>, transform_indices = @transform_2, window_bounds = array<i64: 1, 512>}, {pipeline_mode = #tpu.pipeline_mode<synchronous>, transform_indices = @transform_3, window_bounds = array<i64: 1, 512>}, {pipeline_mode = #tpu.pipeline_mode<synchronous>, transform_indices = @transform_4, window_bounds = array<i64: 512, 256>}, {pipeline_mode = #tpu.pipeline_mode<synchronous>, transform_indices = @transform_5, window_bounds = array<i64: 1, 256>}, {pipeline_mode = #tpu.pipeline_mode<synchronous>, transform_indices = @transform_6, window_bounds = array<i64: 1, 256>}, {pipeline_mode = #tpu.pipeline_mode<synchronous>, transform_indices = @transform_7, window_bounds = array<i64: 256, 128>}, {pipeline_mode = #tpu.pipeline_mode<synchronous>, transform_indices = @transform_8, window_bounds = array<i64: 1, 128>}, {pipeline_mode = #tpu.pipeline_mode<synchronous>, transform_indices = @transform_9, window_bounds = array<i64: 1, 128>}, {transform_indices = @transform_10, window_bounds = array<i64: 16, 128>}]} {
    %c0_i32 = arith.constant 0 : i32
    %0 = arith.cmpi eq, %arg1, %c0_i32 : i32
    %1 = arith.extui %0 : i1 to i32
    %c0_i32_0 = arith.constant 0 : i32
    %2 = arith.cmpi ne, %1, %c0_i32_0 : i32
    scf.if %2 {
      %cst_9 = arith.constant 0.000000e+00 : f32
      %13 = vector.broadcast %cst_9 : f32 to vector<16x512xf32>
      %c0_10 = arith.constant 0 : index
      %c0_11 = arith.constant 0 : index
      %14 = vector.load %arg13[%c0_10, %c0_11] : memref<16x512xf32, #tpu.memory_space<vmem>>, vector<16x512xf32>
      tpu.vector_store %arg13[%c0_10, %c0_11], %13 {strides = array<i32>} : memref<16x512xf32, #tpu.memory_space<vmem>>, vector<16x512xf32>,
    } else {
    }
    %c0 = arith.constant 0 : index
    %c0_1 = arith.constant 0 : index
    %3 = vector.load %arg13[%c0, %c0_1] : memref<16x512xf32, #tpu.memory_space<vmem>>, vector<16x512xf32>
    %c0_2 = arith.constant 0 : index
    %c0_3 = arith.constant 0 : index
    %4 = vector.load %arg2[%c0_2, %c0_3] : memref<16x1024xbf16, #tpu.memory_space<vmem>>, vector<16x1024xbf16>
    %c0_4 = arith.constant 0 : index
    %c0_5 = arith.constant 0 : index
    %5 = vector.load %arg3[%c0_4, %c0_5] : memref<1024x512xi8, #tpu.memory_space<vmem>>, vector<1024x512xi8>
    %6 = arith.sitofp %5 : vector<1024x512xi8> to vector<1024x512xbf16>
    %cst = arith.constant dense<0.000000e+00> : vector<16x512xf32>
    %7 = tpu.matmul %4, %6, %cst {dimension_numbers = #tpu.dot_dimension_numbers<[1], [0], [0], [1], [0, 0, 1, 1], [], []>} : vector<16x1024xbf16>, vector<1024x512xbf16>, vector<16x512xf32> -> vector<16x512xf32>
    %8 = arith.addf %3, %7 : vector<16x512xf32>
    %c0_6 = arith.constant 0 : index
    %c0_7 = arith.constant 0 : index
    %9 = vector.load %arg13[%c0_6, %c0_7] : memref<16x512xf32, #tpu.memory_space<vmem>>, vector<16x512xf32>
    tpu.vector_store %arg13[%c0_6, %c0_7], %8 {strides = array<i32>} : memref<16x512xf32, #tpu.memory_space<vmem>>, vector<16x512xf32>,
    %c1_i32 = arith.constant 1 : i32
    %10 = arith.cmpi eq, %arg1, %c1_i32 : i32
    %11 = arith.extui %10 : i1 to i32
    %c0_i32_8 = arith.constant 0 : i32
    %12 = arith.cmpi ne, %11, %c0_i32_8 : i32
    scf.if %12 {
      %c0_9 = arith.constant 0 : index
      %c0_10 = arith.constant 0 : index
      %13 = vector.load %arg13[%c0_9, %c0_10] : memref<16x512xf32, #tpu.memory_space<vmem>>, vector<16x512xf32>
      %c0_11 = arith.constant 0 : index
      %c0_12 = arith.constant 0 : index
      %14 = vector.load %arg4[%c0_11, %c0_12] : memref<1x512xf32, #tpu.memory_space<vmem>>, vector<1x512xf32>
      %15 = vector.broadcast %14 : vector<1x512xf32> to vector<16x512xf32>
      %16 = arith.mulf %13, %15 : vector<16x512xf32>
      %c0_13 = arith.constant 0 : index
      %c0_14 = arith.constant 0 : index
      %17 = vector.load %arg5[%c0_13, %c0_14] : memref<1x512xf32, #tpu.memory_space<vmem>>, vector<1x512xf32>
      %18 = vector.broadcast %17 : vector<1x512xf32> to vector<16x512xf32>
      %19 = arith.addf %16, %18 : vector<16x512xf32>
      %cst_15 = arith.constant 0.000000e+00 : f32
      %20 = vector.broadcast %cst_15 : f32 to vector<16x512xf32>
      %21 = arith.maximumf %19, %20 : vector<16x512xf32>
      %22 = arith.truncf %21 : vector<16x512xf32> to vector<16x512xbf16>
      %c0_16 = arith.constant 0 : index
      %c0_17 = arith.constant 0 : index
      %23 = vector.load %arg6[%c0_16, %c0_17] : memref<512x256xi8, #tpu.memory_space<vmem>>, vector<512x256xi8>
      %24 = arith.sitofp %23 : vector<512x256xi8> to vector<512x256xbf16>
      %cst_18 = arith.constant dense<0.000000e+00> : vector<16x256xf32>
      %25 = tpu.matmul %22, %24, %cst_18 {dimension_numbers = #tpu.dot_dimension_numbers<[1], [0], [0], [1], [0, 0, 1, 1], [], []>} : vector<16x512xbf16>, vector<512x256xbf16>, vector<16x256xf32> -> vector<16x256xf32>
      %c0_19 = arith.constant 0 : index
      %c0_20 = arith.constant 0 : index
      %26 = vector.load %arg7[%c0_19, %c0_20] : memref<1x256xf32, #tpu.memory_space<vmem>>, vector<1x256xf32>
      %27 = vector.broadcast %26 : vector<1x256xf32> to vector<16x256xf32>
      %28 = arith.mulf %25, %27 : vector<16x256xf32>
      %c0_21 = arith.constant 0 : index
      %c0_22 = arith.constant 0 : index
      %29 = vector.load %arg8[%c0_21, %c0_22] : memref<1x256xf32, #tpu.memory_space<vmem>>, vector<1x256xf32>
      %30 = vector.broadcast %29 : vector<1x256xf32> to vector<16x256xf32>
      %31 = arith.addf %28, %30 : vector<16x256xf32>
      %cst_23 = arith.constant 0.000000e+00 : f32
      %32 = vector.broadcast %cst_23 : f32 to vector<16x256xf32>
      %33 = arith.maximumf %31, %32 : vector<16x256xf32>
      %34 = arith.truncf %33 : vector<16x256xf32> to vector<16x256xbf16>
      %c0_24 = arith.constant 0 : index
      %c0_25 = arith.constant 0 : index
      %35 = vector.load %arg9[%c0_24, %c0_25] : memref<256x128xi8, #tpu.memory_space<vmem>>, vector<256x128xi8>
      %36 = arith.sitofp %35 : vector<256x128xi8> to vector<256x128xbf16>
      %cst_26 = arith.constant dense<0.000000e+00> : vector<16x128xf32>
      %37 = tpu.matmul %34, %36, %cst_26 {dimension_numbers = #tpu.dot_dimension_numbers<[1], [0], [0], [1], [0, 0, 1, 1], [], []>} : vector<16x256xbf16>, vector<256x128xbf16>, vector<16x128xf32> -> vector<16x128xf32>
      %c0_27 = arith.constant 0 : index
      %c0_28 = arith.constant 0 : index
      %38 = vector.load %arg10[%c0_27, %c0_28] : memref<1x128xf32, #tpu.memory_space<vmem>>, vector<1x128xf32>
      %39 = vector.broadcast %38 : vector<1x128xf32> to vector<16x128xf32>
      %40 = arith.mulf %37, %39 : vector<16x128xf32>
      %c0_29 = arith.constant 0 : index
      %c0_30 = arith.constant 0 : index
      %41 = vector.load %arg11[%c0_29, %c0_30] : memref<1x128xf32, #tpu.memory_space<vmem>>, vector<1x128xf32>
      %42 = vector.broadcast %41 : vector<1x128xf32> to vector<16x128xf32>
      %43 = arith.addf %40, %42 : vector<16x128xf32>
      %44 = arith.mulf %43, %43 : vector<16x128xf32>
      %cst_31 = arith.constant dense<0.000000e+00> : vector<16xf32>
      %45 = vector.multi_reduction <add>, %44, %cst_31 [1] : vector<16x128xf32> to vector<16xf32>
      %46 = vector.shape_cast %45 : vector<16xf32> to vector<16x1xf32>
      %cst_32 = arith.constant 1.000000e-24 : f32
      %47 = vector.broadcast %cst_32 : f32 to vector<16x1xf32>
      %48 = arith.maximumf %46, %47 : vector<16x1xf32>
      %49 = math.rsqrt %48 : vector<16x1xf32>
      %50 = vector.broadcast %49 : vector<16x1xf32> to vector<16x128xf32>
      %51 = arith.mulf %43, %50 : vector<16x128xf32>
      %c0_33 = arith.constant 0 : index
      %c0_34 = arith.constant 0 : index
      %52 = vector.load %arg12[%c0_33, %c0_34] : memref<16x128xf32, #tpu.memory_space<vmem>>, vector<16x128xf32>
      tpu.vector_store %arg12[%c0_33, %c0_34], %51 {strides = array<i32>} : memref<16x128xf32, #tpu.memory_space<vmem>>, vector<16x128xf32>,
    } else {
    }
    return
  }
  func.func @transform_0(%arg0: i32, %arg1: i32) -> (i32, i32) {
    %c0_i32 = arith.constant 0 : i32
    return %arg0, %arg1 : i32, i32
  }
  func.func @transform_1(%arg0: i32, %arg1: i32) -> (i32, i32) {
    %c0_i32 = arith.constant 0 : i32
    %c0_i32_0 = arith.constant 0 : i32
    return %arg1, %c0_i32 : i32, i32
  }
  func.func @transform_2(%arg0: i32, %arg1: i32) -> (i32, i32) {
    %c0_i32 = arith.constant 0 : i32
    %c0_i32_0 = arith.constant 0 : i32
    %c0_i32_1 = arith.constant 0 : i32
    return %c0_i32, %c0_i32_0 : i32, i32
  }
  func.func @transform_3(%arg0: i32, %arg1: i32) -> (i32, i32) {
    %c0_i32 = arith.constant 0 : i32
    %c0_i32_0 = arith.constant 0 : i32
    %c0_i32_1 = arith.constant 0 : i32
    return %c0_i32, %c0_i32_0 : i32, i32
  }
  func.func @transform_4(%arg0: i32, %arg1: i32) -> (i32, i32) {
    %c0_i32 = arith.constant 0 : i32
    %c0_i32_0 = arith.constant 0 : i32
    %c0_i32_1 = arith.constant 0 : i32
    return %c0_i32, %c0_i32_0 : i32, i32
  }
  func.func @transform_5(%arg0: i32, %arg1: i32) -> (i32, i32) {
    %c0_i32 = arith.constant 0 : i32
    %c0_i32_0 = arith.constant 0 : i32
    %c0_i32_1 = arith.constant 0 : i32
    return %c0_i32, %c0_i32_0 : i32, i32
  }
  func.func @transform_6(%arg0: i32, %arg1: i32) -> (i32, i32) {
    %c0_i32 = arith.constant 0 : i32
    %c0_i32_0 = arith.constant 0 : i32
    %c0_i32_1 = arith.constant 0 : i32
    return %c0_i32, %c0_i32_0 : i32, i32
  }
  func.func @transform_7(%arg0: i32, %arg1: i32) -> (i32, i32) {
    %c0_i32 = arith.constant 0 : i32
    %c0_i32_0 = arith.constant 0 : i32
    %c0_i32_1 = arith.constant 0 : i32
    return %c0_i32, %c0_i32_0 : i32, i32
  }
  func.func @transform_8(%arg0: i32, %arg1: i32) -> (i32, i32) {
    %c0_i32 = arith.constant 0 : i32
    %c0_i32_0 = arith.constant 0 : i32
    %c0_i32_1 = arith.constant 0 : i32
    return %c0_i32, %c0_i32_0 : i32, i32
  }
  func.func @transform_9(%arg0: i32, %arg1: i32) -> (i32, i32) {
    %c0_i32 = arith.constant 0 : i32
    %c0_i32_0 = arith.constant 0 : i32
    %c0_i32_1 = arith.constant 0 : i32
    return %c0_i32, %c0_i32_0 : i32, i32
  }
  func.func @transform_10(%arg0: i32, %arg1: i32) -> (i32, i32) {
    %c0_i32 = arith.constant 0 : i32
    %c0_i32_0 = arith.constant 0 : i32
    return %arg0, %c0_i32 : i32, i32
  }
}

</mosaic_0001>

<llo_original>
// kernel: tpu_custom_call.1
$region0: #{tpu_custom_call.1}
  #allocation0 [shape = 'u32[]', space=smem, size = 0x4, offset = 0x4, fixed_abs, tag = 'smem constant byte address 0x4 - core index']
  #allocation1 [shape = 'u32[72,128]{1,0:T(1,128)}', space=vmem, size = 0x9000, scoped, tag = 'internal scratch']
  #allocation2 [shape = 'f32[16,512]{1,0:T(8,128)}', space=vmem, size = 0x8000, scoped, tag = 'scratch operand']
  %s0 = inlined_call_operand.hbm [shape: bf16[16,2048], index: 0, kind: input, shape index: {}]
  %s1 = inlined_call_operand.hbm [shape: s8[2048,512], index: 1, kind: input, shape index: {}]
  %s2 = inlined_call_operand.hbm [shape: f32[1,512], index: 2, kind: input, shape index: {}]
  %s3 = inlined_call_operand.hbm [shape: f32[1,512], index: 3, kind: input, shape index: {}]
  %s4 = inlined_call_operand.hbm [shape: s8[512,256], index: 4, kind: input, shape index: {}]
  %s5 = inlined_call_operand.vmem [shape: f32[1,256], index: 5, kind: input, shape index: {}]
  %s6 = inlined_call_operand.vmem [shape: f32[1,256], index: 6, kind: input, shape index: {}]
  %s7 = inlined_call_operand.hbm [shape: s8[256,128], index: 7, kind: input, shape index: {}]
  %s8 = inlined_call_operand.vmem [shape: f32[1,128], index: 8, kind: input, shape index: {}]
  %s9 = inlined_call_operand.vmem [shape: f32[1,128], index: 9, kind: input, shape index: {}]
  %s10 = inlined_call_operand.hbm [shape: f32[16,128], index: 10, kind: output, shape index: {}]
  %s11 = sld [smem:[#allocation0]]
  $region105: #{tpu_custom_call.1} parent=0
    _
  %s13 = ssub.s32 1, %s11
  %s14 = scalar_select 0, %s13, %s11
  $region1: #{tpu_custom_call.1} parent=0
    #allocation3 [shape = 'u8[65536]{0}', space=vmem, size = 0x10000, scoped, tag = 'input window, operand 0']
    #allocation4 [shape = 's32[2]{0}', space=sflag, size = 0x8, scoped, tag = 'scoped memory for tpu_custom_call.1']
    #allocation5 [shape = 's32[2]{0}', space=sflag, size = 0x8, scoped, tag = 'scoped memory for tpu_custom_call.1']
    #allocation6 [shape = 'u8[1048576]{0}', space=vmem, size = 0x100000, scoped, tag = 'input window, operand 1']
    #allocation7 [shape = 's32[2]{0}', space=sflag, size = 0x8, scoped, tag = 'scoped memory for tpu_custom_call.1']
    #allocation8 [shape = 'u8[2048]{0}', space=vmem, size = 0x800, scoped, tag = 'input window, operand 2, single buffered']
    #allocation9 [shape = 'u8[2048]{0}', space=vmem, size = 0x800, scoped, tag = 'input window, operand 3, single buffered']
    #allocation10 [shape = 's32[1]{0}', space=sflag, size = 0x4, scoped, tag = 'scoped memory for tpu_custom_call.1']
    #allocation11 [shape = 'u8[131072]{0}', space=vmem, size = 0x20000, scoped, tag = 'input window, operand 4, single buffered']
    #allocation12 [shape = 'u8[32768]{0}', space=vmem, size = 0x8000, scoped, tag = 'input window, operand 7, single buffered']
    #allocation13 [shape = 's32[1]{0}', space=sflag, size = 0x4, scoped, tag = 'scoped memory for tpu_custom_call.1']
    #allocation14 [shape = 'u8[8192]{0}', space=vmem, size = 0x2000, scoped, tag = 'output window, operand 0, single buffered']
    %15 = vsyncpa [#allocation4], 0
    %s16 = scalar_lea.sflag [#allocation4], 1
    %17 = vsyncpa %s16, 0
    %18 = vsyncpa [#allocation7], 0
    %s19 = scalar_lea.sflag [#allocation7], 1
    %20 = vsyncpa %s19, 0
    %21 = vsyncpa [#allocation10], 0
    %22 = vsyncpa [#allocation13], 0
    %23 = vsyncpa [#allocation5], 0
    loop: start=0, step=1, limit=4
    $region2: #{tpu_custom_call.1} parent=1 // loop_pre_header
      _
    $region3: #{tpu_custom_call.1} parent=1 // loop_header
      %s25 = sphi 0, %s29
      %p26 = scmp.ge.s32.totalorder %s25, 4
      %s32 = sphi 0, %s44
      %s33 = sphi 0, %s40
      %s34 = sphi 0, %s32
      %s35 = sphi 0, %s33
      %s36 = sphi 0, %s34
      %s37 = sphi 0, %s35
      %s49 = sphi 0, %s51
      %s52 = sphi 0, %s49
      %s53 = sphi 0, %s52
      %s69 = sphi 0, %s53
      %s75 = sphi 0, %s77
      %s78 = sphi 0, %s75
      %s79 = sphi 0, %s78
      %s95 = sphi 0, %s79
      %s99 = sphi 0, %s99
      %s101 = sphi 0, %s99
      %s102 = sphi 0, %s101
      %s116 = sphi 0, %s102
      %s120 = sphi 0, %s120
      %s122 = sphi 0, %s120
      %s123 = sphi 0, %s122
      %s137 = sphi 0, %s123
      %s141 = sphi 0, %s141
      %s143 = sphi 0, %s141
      %s144 = sphi 0, %s143
      %s158 = sphi 0, %s144
      %s162 = sphi 0, %s162
      %s164 = sphi 0, %s162
      %s165 = sphi 0, %s164
      %s179 = sphi 0, %s165
      %s183 = sphi 0, %s183
      %s185 = sphi 0, %s183
      %s186 = sphi 0, %s185
      %s200 = sphi 0, %s186
      %s204 = sphi 0, %s204
      %s206 = sphi 0, %s204
      %s207 = sphi 0, %s206
      %s221 = sphi 0, %s207
      %s225 = sphi 0, %s225
      %s227 = sphi 0, %s225
      %s228 = sphi 0, %s227
      %s242 = sphi 0, %s228
      %s246 = sphi 0, %s246
      %s248 = sphi 0, %s246
      %s249 = sphi 0, %s248
      %s263 = sphi 0, %s249
      %s269 = sphi 0, %s271
      %s272 = sphi 0, %s269
      %s273 = sphi 0, %s272
      %s289 = sphi 0, %s273
    $region4: #{tpu_custom_call.1} parent=1 // loop_header_branch
      %28 = sbr.rel (%p26) target = $region8
    $region5: #{tpu_custom_call.1} parent=1 // loop_body
      %s30 = ssub.s32 %s25, 1
      %s31 = ssub.s32 %s25, 2
      %s38 = sadd.s32 1, %s33
      %p39 = scmp.ge.s32.totalorder %s38, 2
      %s40 = scalar_select %p39, 0, %s38
      %s41 = sadd.s32 1, %s32
      %s42 = scalar_select %p39, %s41, %s32
      %p43 = scmp.ge.s32.totalorder %s42, 1
      %s44 = scalar_select %p43, 0, %s42
      %s45 = ssub.s32 %s32, %s44
      %s46 = ssub.s32 %s33, %s40
      %s47 = sor.u32 %s45, %s46
      %p48 = scmp.eq.s32.totalorder %s47, 0
      %s50 = sadd.s32 %s49, 1
      %s51 = scalar_select %p48, %s49, %s50
      %p54 = pneg %p48
      %p55 = scmp.eq.s32.totalorder %s25, 1
      %p56 = por %p54, %p55
      %p57 = scmp.ne.s32.totalorder %s49, %s52
      %p58 = scmp.eq.s32.totalorder %s25, 0
      %p59 = por %p57, %p58
      %p60 = scmp.ne.s32.totalorder %s49, %s52
      %p61 = scmp.eq.s32.totalorder %s30, 1
      %p62 = por %p60, %p61
      %p63 = scmp.ne.s32.totalorder %s52, %s53
      %p64 = scmp.eq.s32.totalorder %s30, 0
      %p65 = por %p63, %p64
      %p66 = scmp.ne.s32.totalorder %s52, %s53
      %p67 = scmp.eq.s32.totalorder %s31, 1
      %p68 = por %p66, %p67
      %p70 = scmp.ne.s32.totalorder %s53, %s69
      %p71 = scmp.eq.s32.totalorder %s31, 0
      %p72 = por %p70, %p71
      %s73 = ssub.s32 %s33, %s40
      %p74 = scmp.eq.s32.totalorder %s73, 0
      %s76 = sadd.s32 %s75, 1
      %s77 = scalar_select %p74, %s75, %s76
      %p80 = pneg %p74
      %p81 = scmp.eq.s32.totalorder %s25, 1
      %p82 = por %p80, %p81
      %p83 = scmp.ne.s32.totalorder %s75, %s78
      %p84 = scmp.eq.s32.totalorder %s25, 0
      %p85 = por %p83, %p84
      %p86 = scmp.ne.s32.totalorder %s75, %s78
      %p87 = scmp.eq.s32.totalorder %s30, 1
      %p88 = por %p86, %p87
      %p89 = scmp.ne.s32.totalorder %s78, %s79
      %p90 = scmp.eq.s32.totalorder %s30, 0
      %p91 = por %p89, %p90
      %p92 = scmp.ne.s32.totalorder %s78, %s79
      %p93 = scmp.eq.s32.totalorder %s31, 1
      %p94 = por %p92, %p93
      %p96 = scmp.ne.s32.totalorder %s79, %s95
      %p97 = scmp.eq.s32.totalorder %s31, 0
      %p98 = por %p96, %p97
      %s100 = sadd.s32 %s99, 1
      %p103 = scmp.eq.s32.totalorder %s25, 1
      %p104 = scmp.ne.s32.totalorder %s99, %s101
      %p105 = scmp.eq.s32.totalorder %s25, 0
      %p106 = por %p104, %p105
      %p107 = scmp.ne.s32.totalorder %s99, %s101
      %p108 = scmp.eq.s32.totalorder %s30, 1
      %p109 = por %p107, %p108
      %p110 = scmp.ne.s32.totalorder %s101, %s102
      %p111 = scmp.eq.s32.totalorder %s30, 0
      %p112 = por %p110, %p111
      %p113 = scmp.ne.s32.totalorder %s101, %s102
      %p114 = scmp.eq.s32.totalorder %s31, 1
      %p115 = por %p113, %p114
      %p117 = scmp.ne.s32.totalorder %s102, %s116
      %p118 = scmp.eq.s32.totalorder %s31, 0
      %p119 = por %p117, %p118
      %s121 = sadd.s32 %s120, 1
      %p124 = scmp.eq.s32.totalorder %s25, 1
      %p125 = scmp.ne.s32.totalorder %s120, %s122
      %p126 = scmp.eq.s32.totalorder %s25, 0
      %p127 = por %p125, %p126
      %p128 = scmp.ne.s32.totalorder %s120, %s122
      %p129 = scmp.eq.s32.totalorder %s30, 1
      %p130 = por %p128, %p129
      %p131 = scmp.ne.s32.totalorder %s122, %s123
      %p132 = scmp.eq.s32.totalorder %s30, 0
      %p133 = por %p131, %p132
      %p134 = scmp.ne.s32.totalorder %s122, %s123
      %p135 = scmp.eq.s32.totalorder %s31, 1
      %p136 = por %p134, %p135
      %p138 = scmp.ne.s32.totalorder %s123, %s137
      %p139 = scmp.eq.s32.totalorder %s31, 0
      %p140 = por %p138, %p139
      %s142 = sadd.s32 %s141, 1
      %p145 = scmp.eq.s32.totalorder %s25, 1
      %p146 = scmp.ne.s32.totalorder %s141, %s143
      %p147 = scmp.eq.s32.totalorder %s25, 0
      %p148 = por %p146, %p147
      %p149 = scmp.ne.s32.totalorder %s141, %s143
      %p150 = scmp.eq.s32.totalorder %s30, 1
      %p151 = por %p149, %p150
      %p152 = scmp.ne.s32.totalorder %s143, %s144
      %p153 = scmp.eq.s32.totalorder %s30, 0
      %p154 = por %p152, %p153
      %p155 = scmp.ne.s32.totalorder %s143, %s144
      %p156 = scmp.eq.s32.totalorder %s31, 1
      %p157 = por %p155, %p156
      %p159 = scmp.ne.s32.totalorder %s144, %s158
      %p160 = scmp.eq.s32.totalorder %s31, 0
      %p161 = por %p159, %p160
      %s163 = sadd.s32 %s162, 1
      %p166 = scmp.eq.s32.totalorder %s25, 1
      %p167 = scmp.ne.s32.totalorder %s162, %s164
      %p168 = scmp.eq.s32.totalorder %s25, 0
      %p169 = por %p167, %p168
      %p170 = scmp.ne.s32.totalorder %s162, %s164
      %p171 = scmp.eq.s32.totalorder %s30, 1
      %p172 = por %p170, %p171
      %p173 = scmp.ne.s32.totalorder %s164, %s165
      %p174 = scmp.eq.s32.totalorder %s30, 0
      %p175 = por %p173, %p174
      %p176 = scmp.ne.s32.totalorder %s164, %s165
      %p177 = scmp.eq.s32.totalorder %s31, 1
      %p178 = por %p176, %p177
      %p180 = scmp.ne.s32.totalorder %s165, %s179
      %p181 = scmp.eq.s32.totalorder %s31, 0
      %p182 = por %p180, %p181
      %s184 = sadd.s32 %s183, 1
      %p187 = scmp.eq.s32.totalorder %s25, 1
      %p188 = scmp.ne.s32.totalorder %s183, %s185
      %p189 = scmp.eq.s32.totalorder %s25, 0
      %p190 = por %p188, %p189
      %p191 = scmp.ne.s32.totalorder %s183, %s185
      %p192 = scmp.eq.s32.totalorder %s30, 1
      %p193 = por %p191, %p192
      %p194 = scmp.ne.s32.totalorder %s185, %s186
      %p195 = scmp.eq.s32.totalorder %s30, 0
      %p196 = por %p194, %p195
      %p197 = scmp.ne.s32.totalorder %s185, %s186
      %p198 = scmp.eq.s32.totalorder %s31, 1
      %p199 = por %p197, %p198
      %p201 = scmp.ne.s32.totalorder %s186, %s200
      %p202 = scmp.eq.s32.totalorder %s31, 0
      %p203 = por %p201, %p202
      %s205 = sadd.s32 %s204, 1
      %p208 = scmp.eq.s32.totalorder %s25, 1
      %p209 = scmp.ne.s32.totalorder %s204, %s206
      %p210 = scmp.eq.s32.totalorder %s25, 0
      %p211 = por %p209, %p210
      %p212 = scmp.ne.s32.totalorder %s204, %s206
      %p213 = scmp.eq.s32.totalorder %s30, 1
      %p214 = por %p212, %p213
      %p215 = scmp.ne.s32.totalorder %s206, %s207
      %p216 = scmp.eq.s32.totalorder %s30, 0
      %p217 = por %p215, %p216
      %p218 = scmp.ne.s32.totalorder %s206, %s207
      %p219 = scmp.eq.s32.totalorder %s31, 1
      %p220 = por %p218, %p219
      %p222 = scmp.ne.s32.totalorder %s207, %s221
      %p223 = scmp.eq.s32.totalorder %s31, 0
      %p224 = por %p222, %p223
      %s226 = sadd.s32 %s225, 1
      %p229 = scmp.eq.s32.totalorder %s25, 1
      %p230 = scmp.ne.s32.totalorder %s225, %s227
      %p231 = scmp.eq.s32.totalorder %s25, 0
      %p232 = por %p230, %p231
      %p233 = scmp.ne.s32.totalorder %s225, %s227
      %p234 = scmp.eq.s32.totalorder %s30, 1
      %p235 = por %p233, %p234
      %p236 = scmp.ne.s32.totalorder %s227, %s228
      %p237 = scmp.eq.s32.totalorder %s30, 0
      %p238 = por %p236, %p237
      %p239 = scmp.ne.s32.totalorder %s227, %s228
      %p240 = scmp.eq.s32.totalorder %s31, 1
      %p241 = por %p239, %p240
      %p243 = scmp.ne.s32.totalorder %s228, %s242
      %p244 = scmp.eq.s32.totalorder %s31, 0
      %p245 = por %p243, %p244
      %s247 = sadd.s32 %s246, 1
      %p250 = scmp.eq.s32.totalorder %s25, 1
      %p251 = scmp.ne.s32.totalorder %s246, %s248
      %p252 = scmp.eq.s32.totalorder %s25, 0
      %p253 = por %p251, %p252
      %p254 = scmp.ne.s32.totalorder %s246, %s248
      %p255 = scmp.eq.s32.totalorder %s30, 1
      %p256 = por %p254, %p255
      %p257 = scmp.ne.s32.totalorder %s248, %s249
      %p258 = scmp.eq.s32.totalorder %s30, 0
      %p259 = por %p257, %p258
      %p260 = scmp.ne.s32.totalorder %s248, %s249
      %p261 = scmp.eq.s32.totalorder %s31, 1
      %p262 = por %p260, %p261
      %p264 = scmp.ne.s32.totalorder %s249, %s263
      %p265 = scmp.eq.s32.totalorder %s31, 0
      %p266 = por %p264, %p265
      %s267 = ssub.s32 %s32, %s44
      %p268 = scmp.eq.s32.totalorder %s267, 0
      %s270 = sadd.s32 %s269, 1
      %s271 = scalar_select %p268, %s269, %s270
      %p274 = pneg %p268
      %p275 = scmp.eq.s32.totalorder %s25, 1
      %p276 = por %p274, %p275
      %p277 = scmp.ne.s32.totalorder %s269, %s272
      %p278 = scmp.eq.s32.totalorder %s25, 0
      %p279 = por %p277, %p278
      %p280 = scmp.ne.s32.totalorder %s269, %s272
      %p281 = scmp.eq.s32.totalorder %s30, 1
      %p282 = por %p280, %p281
      %p283 = scmp.ne.s32.totalorder %s272, %s273
      %p284 = scmp.eq.s32.totalorder %s30, 0
      %p285 = por %p283, %p284
      %p286 = scmp.ne.s32.totalorder %s272, %s273
      %p287 = scmp.eq.s32.totalorder %s31, 1
      %p288 = por %p286, %p287
      %p290 = scmp.ne.s32.totalorder %s273, %s289
      %p291 = scmp.eq.s32.totalorder %s31, 0
      %p292 = por %p290, %p291
      %p293 = scmp.le.s32.totalorder 1, %s25
      %p294 = scmp.lt.s32.totalorder %s25, 3
      %p295 = pnand %p293, %p294
      %p296 = pneg %p295
      // Predicated region
      $region9: #{tpu_custom_call.1} parent=5 // pred_check
        _
      $region10: #{tpu_custom_call.1} parent=5 // pred_check_branch
        %298 = sbr.rel (%p295) target = $region12
      $region11: #{tpu_custom_call.1} parent=5 // pred_region
        %s299 = ssub.s32 %s25, 1
        // Predicated region
        $region13: #{tpu_custom_call.1} parent=11 // pred_check
          %p300 = pneg %p112
        $region14: #{tpu_custom_call.1} parent=11 // pred_check_branch
          %302 = sbr.rel (%p300) target = $region16
        $region15: #{tpu_custom_call.1} parent=11 // pred_region
          %304 = vsyncadd [#allocation7], 0
          %s306 = sshll.u32 %s2, 4
          %s307 = int_to_ptr.hbm [resolvable:$true] %s306
          %s308 = sshll.u32 [#allocation8], 4
          %s309 = int_to_ptr.vmem [resolvable:$true] %s308
          %311 = dma.hbm_to_vmem [thread:$0]  %s307, 64, %s309, [#allocation7]
        $region16: #{tpu_custom_call.1} parent=11 // pred_fallthru
          _
        // Predicated region
        $region17: #{tpu_custom_call.1} parent=11 // pred_check
          %p312 = pneg %p133
        $region18: #{tpu_custom_call.1} parent=11 // pred_check_branch
          %314 = sbr.rel (%p312) target = $region20
        $region19: #{tpu_custom_call.1} parent=11 // pred_region
          %316 = vsyncadd [#allocation10], 0
          %s318 = sshll.u32 %s3, 4
          %s319 = int_to_ptr.hbm [resolvable:$true] %s318
          %s320 = sshll.u32 [#allocation9], 4
          %s321 = int_to_ptr.vmem [resolvable:$true] %s320
          %323 = dma.hbm_to_vmem [thread:$0]  %s319, 64, %s321, [#allocation10]
        $region20: #{tpu_custom_call.1} parent=11 // pred_fallthru
          _
        // Predicated region
        $region21: #{tpu_custom_call.1} parent=11 // pred_check
          %p324 = pneg %p154
        $region22: #{tpu_custom_call.1} parent=11 // pred_check_branch
          %326 = sbr.rel (%p324) target = $region24
        $region23: #{tpu_custom_call.1} parent=11 // pred_region
          %328 = vsyncadd [#allocation10], 0
          %s329 = sshll.u32 %s4, 4
          %s330 = int_to_ptr.hbm [resolvable:$true] %s329
          %s331 = sshll.u32 [#allocation11], 4
          %s332 = int_to_ptr.vmem [resolvable:$true] %s331
          %337 = dma.hbm_to_vmem [thread:$0]  %s330, 4096, %s332, [#allocation10], 256, 256, 16
        $region24: #{tpu_custom_call.1} parent=11 // pred_fallthru
          _
        // Predicated region
        $region25: #{tpu_custom_call.1} parent=11 // pred_check
          %p338 = pneg %p175
        $region26: #{tpu_custom_call.1} parent=11 // pred_check_branch
          %340 = sbr.rel (%p338) target = $region28
        $region27: #{tpu_custom_call.1} parent=11 // pred_region
          _
        $region28: #{tpu_custom_call.1} parent=11 // pred_fallthru
          _
        // Predicated region
        $region29: #{tpu_custom_call.1} parent=11 // pred_check
          %p341 = pneg %p196
        $region30: #{tpu_custom_call.1} parent=11 // pred_check_branch
          %343 = sbr.rel (%p341) target = $region32
        $region31: #{tpu_custom_call.1} parent=11 // pred_region
          _
        $region32: #{tpu_custom_call.1} parent=11 // pred_fallthru
          _
        // Predicated region
        $region33: #{tpu_custom_call.1} parent=11 // pred_check
          %p344 = pneg %p217
        $region34: #{tpu_custom_call.1} parent=11 // pred_check_branch
          %346 = sbr.rel (%p344) target = $region36
        $region35: #{tpu_custom_call.1} parent=11 // pred_region
          %348 = vsyncadd [#allocation13], 0
          %s349 = sshll.u32 %s7, 4
          %s350 = int_to_ptr.hbm [resolvable:$true] %s349
          %s351 = sshll.u32 [#allocation12], 4
          %s352 = int_to_ptr.vmem [resolvable:$true] %s351
          %357 = dma.hbm_to_vmem [thread:$0]  %s350, 1024, %s352, [#allocation13], 128, 128, 8
        $region36: #{tpu_custom_call.1} parent=11 // pred_fallthru
          _
        // Predicated region
        $region37: #{tpu_custom_call.1} parent=11 // pred_check
          %p358 = pneg %p238
        $region38: #{tpu_custom_call.1} parent=11 // pred_check_branch
          %360 = sbr.rel (%p358) target = $region40
        $region39: #{tpu_custom_call.1} parent=11 // pred_region
          _
        $region40: #{tpu_custom_call.1} parent=11 // pred_fallthru
          _
        // Predicated region
        $region41: #{tpu_custom_call.1} parent=11 // pred_check
          %p361 = pneg %p259
        $region42: #{tpu_custom_call.1} parent=11 // pred_check_branch
          %363 = sbr.rel (%p361) target = $region44
        $region43: #{tpu_custom_call.1} parent=11 // pred_region
          _
        $region44: #{tpu_custom_call.1} parent=11 // pred_fallthru
          _
      $region12: #{tpu_custom_call.1} parent=5 // pred_fallthru
        _
      %p364 = scmp.lt.s32.totalorder %s25, 2
      // Predicated region
      $region45: #{tpu_custom_call.1} parent=5 // pred_check
        %p365 = pneg %p364
      $region46: #{tpu_custom_call.1} parent=5 // pred_check_branch
        %367 = sbr.rel (%p365) target = $region48
      $region47: #{tpu_custom_call.1} parent=5 // pred_region
        // Predicated region
        $region49: #{tpu_custom_call.1} parent=47 // pred_check
          %p368 = pneg %p59
        $region50: #{tpu_custom_call.1} parent=47 // pred_check_branch
          %370 = sbr.rel (%p368) target = $region52
        $region51: #{tpu_custom_call.1} parent=47 // pred_region
          %s371 = sand.u32 %s49, 1
          %s372 = scalar_lea.sflag [#allocation4], %s371
          %s373 = sand.u32 %s49, 1
          %s374 = smul.addr %s373, 64
          %s375 = scalar_lea.vmem [#allocation3], %s374
          %s376 = smul.u32 2, %s32
          %s377 = smul.u32 8, %s33
          %379 = vsyncadd %s372, 0
          %s380 = smul.addr %s376, 16
          %s381 = sadd.s32 %s377, %s380
          %s382 = smul.addr %s381, 4
          %s383 = scalar_lea.hbm %s0, %s382
          %s384 = sshll.u32 %s383, 4
          %s385 = int_to_ptr.hbm [resolvable:$true] %s384
          %s386 = sshll.u32 %s375, 4
          %s387 = int_to_ptr.vmem [resolvable:$true] %s386
          %392 = dma.hbm_to_vmem [thread:$0]  %s385, 1024, %s387, %s372, 1024, 512, 32
        $region52: #{tpu_custom_call.1} parent=47 // pred_fallthru
          _
        // Predicated region
        $region53: #{tpu_custom_call.1} parent=47 // pred_check
          %p393 = pneg %p85
        $region54: #{tpu_custom_call.1} parent=47 // pred_check_branch
          %395 = sbr.rel (%p393) target = $region56
        $region55: #{tpu_custom_call.1} parent=47 // pred_region
          %s396 = sand.u32 %s25, 1
          %s397 = scalar_lea.sflag [#allocation7], %s396
          %s398 = sand.u32 %s75, 1
          %s399 = smul.addr %s398, 1024
          %s400 = scalar_lea.vmem [#allocation6], %s399
          %s401 = smul.u32 32, %s33
          %403 = vsyncadd %s397, 0
          %s404 = smul.addr %s401, 4
          %s405 = smul.addr %s404, 8
          %s406 = scalar_lea.hbm %s1, %s405
          %s407 = sshll.u32 %s406, 4
          %s408 = int_to_ptr.hbm [resolvable:$true] %s407
          %s409 = sshll.u32 %s400, 4
          %s410 = int_to_ptr.vmem [resolvable:$true] %s409
          %415 = dma.hbm_to_vmem [thread:$0]  %s408, 16384, %s410, %s397, 512, 512, 32
        $region56: #{tpu_custom_call.1} parent=47 // pred_fallthru
          _
      $region48: #{tpu_custom_call.1} parent=5 // pred_fallthru
        _
      %p416 = scmp.le.s32.totalorder 1, %s25
      %p417 = scmp.lt.s32.totalorder %s25, 3
      %p418 = pnand %p416, %p417
      %p419 = pneg %p418
      // Predicated region
      $region57: #{tpu_custom_call.1} parent=5 // pred_check
        _
      $region58: #{tpu_custom_call.1} parent=5 // pred_check_branch
        %421 = sbr.rel (%p418) target = $region60
      $region59: #{tpu_custom_call.1} parent=5 // pred_region
        %s422 = ssub.s32 %s25, 1
        %s423 = sand.u32 %s52, 1
        %s424 = scalar_lea.sflag [#allocation4], %s423
        %s425 = sand.u32 %s52, 1
        %s426 = smul.addr %s425, 64
        %s427 = scalar_lea.vmem [#allocation3], %s426
        // Predicated region
        $region61: #{tpu_custom_call.1} parent=59 // pred_check
          %p428 = pneg %p65
        $region62: #{tpu_custom_call.1} parent=59 // pred_check_branch
          %430 = sbr.rel (%p428) target = $region64
        $region63: #{tpu_custom_call.1} parent=59 // pred_region
          %432 = dma.done %s424, 1024
        $region64: #{tpu_custom_call.1} parent=59 // pred_fallthru
          _
        %s433 = sand.u32 %s30, 1
        %s434 = scalar_lea.sflag [#allocation7], %s433
        %s435 = sand.u32 %s78, 1
        %s436 = smul.addr %s435, 1024
        %s437 = scalar_lea.vmem [#allocation6], %s436
        // Predicated region
        $region65: #{tpu_custom_call.1} parent=59 // pred_check
          %p438 = pneg %p91
        $region66: #{tpu_custom_call.1} parent=59 // pred_check_branch
          %440 = sbr.rel (%p438) target = $region68
        $region67: #{tpu_custom_call.1} parent=59 // pred_region
          %442 = dma.done %s434, 16384
        $region68: #{tpu_custom_call.1} parent=59 // pred_fallthru
          _
        // Predicated region
        $region69: #{tpu_custom_call.1} parent=59 // pred_check
          %p443 = pneg %p112
        $region70: #{tpu_custom_call.1} parent=59 // pred_check_branch
          %445 = sbr.rel (%p443) target = $region72
        $region71: #{tpu_custom_call.1} parent=59 // pred_region
          %447 = dma.done [#allocation7], 64
        $region72: #{tpu_custom_call.1} parent=59 // pred_fallthru
          _
        // Predicated region
        $region73: #{tpu_custom_call.1} parent=59 // pred_check
          %p448 = pneg %p133
        $region74: #{tpu_custom_call.1} parent=59 // pred_check_branch
          %450 = sbr.rel (%p448) target = $region76
        $region75: #{tpu_custom_call.1} parent=59 // pred_region
          %452 = dma.done [#allocation10], 64
        $region76: #{tpu_custom_call.1} parent=59 // pred_fallthru
          _
        // Predicated region
        $region77: #{tpu_custom_call.1} parent=59 // pred_check
          %p453 = pneg %p154
        $region78: #{tpu_custom_call.1} parent=59 // pred_check_branch
          %455 = sbr.rel (%p453) target = $region80
        $region79: #{tpu_custom_call.1} parent=59 // pred_region
          %457 = dma.done [#allocation10], 4096
        $region80: #{tpu_custom_call.1} parent=59 // pred_fallthru
          _
        // Predicated region
        $region81: #{tpu_custom_call.1} parent=59 // pred_check
          %p458 = pneg %p217
        $region82: #{tpu_custom_call.1} parent=59 // pred_check_branch
          %460 = sbr.rel (%p458) target = $region84
        $region83: #{tpu_custom_call.1} parent=59 // pred_region
          %462 = dma.done [#allocation13], 1024
        $region84: #{tpu_custom_call.1} parent=59 // pred_fallthru
          _
        %s463 = sand.u32 %s52, 1
        %s464 = scalar_lea.sflag [#allocation4], %s463
        %s465 = sand.u32 %s52, 1
        %s466 = smul.addr %s465, 64
        %s467 = scalar_lea.vmem [#allocation3], %s466
        %p468 = pneg %p65
        %p469 = pneg %p62
        %s470 = sand.u32 %s30, 1
        %s471 = scalar_lea.sflag [#allocation7], %s470
        %s472 = sand.u32 %s78, 1
        %s473 = smul.addr %s472, 1024
        %s474 = scalar_lea.vmem [#allocation6], %s473
        %p475 = pneg %p91
        %p476 = pneg %p88
        %p477 = pneg %p112
        %p478 = pneg %p109
        %p479 = pneg %p133
        %p480 = pneg %p130
        %p481 = pneg %p154
        %p482 = pneg %p151
        %p483 = pneg %p175
        %p484 = pneg %p172
        %p485 = pneg %p196
        %p486 = pneg %p193
        %p487 = pneg %p217
        %p488 = pneg %p214
        %p489 = pneg %p238
        %p490 = pneg %p235
        %p491 = pneg %p259
        %p492 = pneg %p256
        %p493 = pneg %p285
        %p494 = pneg %p282
        %s495 = smul.u32 2, %s34
        %s496 = smul.u32 8, %s35
        %s497 = smul.u32 32, %s35
        %s498 = smul.u32 2, %s34
        %p499 = scmp.eq.s32.totalorder %s35, 0
        // Predicated region
        $region85: #{tpu_custom_call.1} parent=59 // pred_check
          %p500 = pneg %p499
        $region86: #{tpu_custom_call.1} parent=59 // pred_check_branch
          %502 = sbr.rel (%p500) target = $region88
        $region87: #{tpu_custom_call.1} parent=59 // pred_region
          %503 = vst [vmem:[#allocation2] sm:$0xff] 0.0
          %504 = vst [vmem:[#allocation2 + $0x8] sm:$0xff] 0.0
          %505 = vst [vmem:[#allocation2 + $0x10] sm:$0xff] 0.0
          %506 = vst [vmem:[#allocation2 + $0x18] sm:$0xff] 0.0
          %507 = vst [vmem:[#allocation2 + $0x20] sm:$0xff] 0.0
          %508 = vst [vmem:[#allocation2 + $0x28] sm:$0xff] 0.0
          %509 = vst [vmem:[#allocation2 + $0x30] sm:$0xff] 0.0
          %510 = vst [vmem:[#allocation2 + $0x38] sm:$0xff] 0.0
        $region88: #{tpu_custom_call.1} parent=59 // pred_fallthru
          _
        %v511 = vld [vmem:[#allocation2] sm:$0xff]
        %v512 = vld [vmem:[#allocation2 + $0x8] sm:$0xff]
        %v513 = vld [vmem:[#allocation2 + $0x10] sm:$0xff]
        %v514 = vld [vmem:[#allocation2 + $0x18] sm:$0xff]
        %v515 = vld [vmem:[#allocation2 + $0x20] sm:$0xff]
        %v516 = vld [vmem:[#allocation2 + $0x28] sm:$0xff]
        %v517 = vld [vmem:[#allocation2 + $0x30] sm:$0xff]
        %v518 = vld [vmem:[#allocation2 + $0x38] sm:$0xff]
        %v519 = vld [vmem:[%s427] sm:$0xff]
        %v520 = vld [vmem:[%s427 + $0x8] sm:$0xff]
        %v521 = vld [vmem:[%s427 + $0x10] sm:$0xff]
        %v522 = vld [vmem:[%s427 + $0x18] sm:$0xff]
        %v523 = vld [vmem:[%s427 + $0x20] sm:$0xff]
        %v524 = vld [vmem:[%s427 + $0x28] sm:$0xff]
        %v525 = vld [vmem:[%s427 + $0x30] sm:$0xff]
        %v526 = vld [vmem:[%s427 + $0x38] sm:$0xff]
        %v527 = vld [vmem:[%s437] sm:$0xff]
        %v528 = vld [vmem:[%s437 + $0x8] sm:$0xff]
        %v529 = vld [vmem:[%s437 + $0x10] sm:$0xff]
        %v530 = vld [vmem:[%s437 + $0x18] sm:$0xff]
        %v531 = vld [vmem:[%s437 + $0x20] sm:$0xff]
        %v532 = vld [vmem:[%s437 + $0x28] sm:$0xff]
        %v533 = vld [vmem:[%s437 + $0x30] sm:$0xff]
        %v534 = vld [vmem:[%s437 + $0x38] sm:$0xff]
        %v535 = vld [vmem:[%s437 + $0x40] sm:$0xff]
        %v536 = vld [vmem:[%s437 + $0x48] sm:$0xff]
        %v537 = vld [vmem:[%s437 + $0x50] sm:$0xff]
        %v538 = vld [vmem:[%s437 + $0x58] sm:$0xff]
        %v539 = vld [vmem:[%s437 + $0x60] sm:$0xff]
        %v540 = vld [vmem:[%s437 + $0x68] sm:$0xff]
        %v541 = vld [vmem:[%s437 + $0x70] sm:$0xff]
        %v542 = vld [vmem:[%s437 + $0x78] sm:$0xff]
        %v543 = vld [vmem:[%s437 + $0x80] sm:$0xff]
        %v544 = vld [vmem:[%s437 + $0x88] sm:$0xff]
        %v545 = vld [vmem:[%s437 + $0x90] sm:$0xff]
        %v546 = vld [vmem:[%s437 + $0x98] sm:$0xff]
        %v547 = vld [vmem:[%s437 + $0xa0] sm:$0xff]
        %v548 = vld [vmem:[%s437 + $0xa8] sm:$0xff]
        %v549 = vld [vmem:[%s437 + $0xb0] sm:$0xff]
        %v550 = vld [vmem:[%s437 + $0xb8] sm:$0xff]
        %v551 = vld [vmem:[%s437 + $0xc0] sm:$0xff]
        %v552 = vld [vmem:[%s437 + $0xc8] sm:$0xff]
        %v553 = vld [vmem:[%s437 + $0xd0] sm:$0xff]
        %v554 = vld [vmem:[%s437 + $0xd8] sm:$0xff]
        %v555 = vld [vmem:[%s437 + $0xe0] sm:$0xff]
        %v556 = vld [vmem:[%s437 + $0xe8] sm:$0xff]
        %v557 = vld [vmem:[%s437 + $0xf0] sm:$0xff]
        %v558 = vld [vmem:[%s437 + $0xf8] sm:$0xff]
        %v559 = vld [vmem:[%s437 + $0x100] sm:$0xff]
        %v560 = vld [vmem:[%s437 + $0x108] sm:$0xff]
        %v561 = vld [vmem:[%s437 + $0x110] sm:$0xff]
        %v562 = vld [vmem:[%s437 + $0x118] sm:$0xff]
        %v563 = vld [vmem:[%s437 + $0x120] sm:$0xff]
        %v564 = vld [vmem:[%s437 + $0x128] sm:$0xff]
        %v565 = vld [vmem:[%s437 + $0x130] sm:$0xff]
        %v566 = vld [vmem:[%s437 + $0x138] sm:$0xff]
        %v567 = vld [vmem:[%s437 + $0x140] sm:$0xff]
        %v568 = vld [vmem:[%s437 + $0x148] sm:$0xff]
        %v569 = vld [vmem:[%s437 + $0x150] sm:$0xff]
        %v570 = vld [vmem:[%s437 + $0x158] sm:$0xff]
        %v571 = vld [vmem:[%s437 + $0x160] sm:$0xff]
        %v572 = vld [vmem:[%s437 + $0x168] sm:$0xff]
        %v573 = vld [vmem:[%s437 + $0x170] sm:$0xff]
        %v574 = vld [vmem:[%s437 + $0x178] sm:$0xff]
        %v575 = vld [vmem:[%s437 + $0x180] sm:$0xff]
        %v576 = vld [vmem:[%s437 + $0x188] sm:$0xff]
        %v577 = vld [vmem:[%s437 + $0x190] sm:$0xff]
        %v578 = vld [vmem:[%s437 + $0x198] sm:$0xff]
        %v579 = vld [vmem:[%s437 + $0x1a0] sm:$0xff]
        %v580 = vld [vmem:[%s437 + $0x1a8] sm:$0xff]
        %v581 = vld [vmem:[%s437 + $0x1b0] sm:$0xff]
        %v582 = vld [vmem:[%s437 + $0x1b8] sm:$0xff]
        %v583 = vld [vmem:[%s437 + $0x1c0] sm:$0xff]
        %v584 = vld [vmem:[%s437 + $0x1c8] sm:$0xff]
        %v585 = vld [vmem:[%s437 + $0x1d0] sm:$0xff]
        %v586 = vld [vmem:[%s437 + $0x1d8] sm:$0xff]
        %v587 = vld [vmem:[%s437 + $0x1e0] sm:$0xff]
        %v588 = vld [vmem:[%s437 + $0x1e8] sm:$0xff]
        %v589 = vld [vmem:[%s437 + $0x1f0] sm:$0xff]
        %v590 = vld [vmem:[%s437 + $0x1f8] sm:$0xff]
        %v591 = vld [vmem:[%s437 + $0x200] sm:$0xff]
        %v592 = vld [vmem:[%s437 + $0x208] sm:$0xff]
        %v593 = vld [vmem:[%s437 + $0x210] sm:$0xff]
        %v594 = vld [vmem:[%s437 + $0x218] sm:$0xff]
        %v595 = vld [vmem:[%s437 + $0x220] sm:$0xff]
        %v596 = vld [vmem:[%s437 + $0x228] sm:$0xff]
        %v597 = vld [vmem:[%s437 + $0x230] sm:$0xff]
        %v598 = vld [vmem:[%s437 + $0x238] sm:$0xff]
        %v599 = vld [vmem:[%s437 + $0x240] sm:$0xff]
        %v600 = vld [vmem:[%s437 + $0x248] sm:$0xff]
        %v601 = vld [vmem:[%s437 + $0x250] sm:$0xff]
        %v602 = vld [vmem:[%s437 + $0x258] sm:$0xff]
        %v603 = vld [vmem:[%s437 + $0x260] sm:$0xff]
        %v604 = vld [vmem:[%s437 + $0x268] sm:$0xff]
        %v605 = vld [vmem:[%s437 + $0x270] sm:$0xff]
        %v606 = vld [vmem:[%s437 + $0x278] sm:$0xff]
        %v607 = vld [vmem:[%s437 + $0x280] sm:$0xff]
        %v608 = vld [vmem:[%s437 + $0x288] sm:$0xff]
        %v609 = vld [vmem:[%s437 + $0x290] sm:$0xff]
        %v610 = vld [vmem:[%s437 + $0x298] sm:$0xff]
        %v611 = vld [vmem:[%s437 + $0x2a0] sm:$0xff]
        %v612 = vld [vmem:[%s437 + $0x2a8] sm:$0xff]
        %v613 = vld [vmem:[%s437 + $0x2b0] sm:$0xff]
        %v614 = vld [vmem:[%s437 + $0x2b8] sm:$0xff]
        %v615 = vld [vmem:[%s437 + $0x2c0] sm:$0xff]
        %v616 = vld [vmem:[%s437 + $0x2c8] sm:$0xff]
        %v617 = vld [vmem:[%s437 + $0x2d0] sm:$0xff]
        %v618 = vld [vmem:[%s437 + $0x2d8] sm:$0xff]
        %v619 = vld [vmem:[%s437 + $0x2e0] sm:$0xff]
        %v620 = vld [vmem:[%s437 + $0x2e8] sm:$0xff]
        %v621 = vld [vmem:[%s437 + $0x2f0] sm:$0xff]
        %v622 = vld [vmem:[%s437 + $0x2f8] sm:$0xff]
        %v623 = vld [vmem:[%s437 + $0x300] sm:$0xff]
        %v624 = vld [vmem:[%s437 + $0x308] sm:$0xff]
        %v625 = vld [vmem:[%s437 + $0x310] sm:$0xff]
        %v626 = vld [vmem:[%s437 + $0x318] sm:$0xff]
        %v627 = vld [vmem:[%s437 + $0x320] sm:$0xff]
        %v628 = vld [vmem:[%s437 + $0x328] sm:$0xff]
        %v629 = vld [vmem:[%s437 + $0x330] sm:$0xff]
        %v630 = vld [vmem:[%s437 + $0x338] sm:$0xff]
        %v631 = vld [vmem:[%s437 + $0x340] sm:$0xff]
        %v632 = vld [vmem:[%s437 + $0x348] sm:$0xff]
        %v633 = vld [vmem:[%s437 + $0x350] sm:$0xff]
        %v634 = vld [vmem:[%s437 + $0x358] sm:$0xff]
        %v635 = vld [vmem:[%s437 + $0x360] sm:$0xff]
        %v636 = vld [vmem:[%s437 + $0x368] sm:$0xff]
        %v637 = vld [vmem:[%s437 + $0x370] sm:$0xff]
        %v638 = vld [vmem:[%s437 + $0x378] sm:$0xff]
        %v639 = vld [vmem:[%s437 + $0x380] sm:$0xff]
        %v640 = vld [vmem:[%s437 + $0x388] sm:$0xff]
        %v641 = vld [vmem:[%s437 + $0x390] sm:$0xff]
        %v642 = vld [vmem:[%s437 + $0x398] sm:$0xff]
        %v643 = vld [vmem:[%s437 + $0x3a0] sm:$0xff]
        %v644 = vld [vmem:[%s437 + $0x3a8] sm:$0xff]
        %v645 = vld [vmem:[%s437 + $0x3b0] sm:$0xff]
        %v646 = vld [vmem:[%s437 + $0x3b8] sm:$0xff]
        %v647 = vld [vmem:[%s437 + $0x3c0] sm:$0xff]
        %v648 = vld [vmem:[%s437 + $0x3c8] sm:$0xff]
        %v649 = vld [vmem:[%s437 + $0x3d0] sm:$0xff]
        %v650 = vld [vmem:[%s437 + $0x3d8] sm:$0xff]
        %v651 = vld [vmem:[%s437 + $0x3e0] sm:$0xff]
        %v652 = vld [vmem:[%s437 + $0x3e8] sm:$0xff]
        %v653 = vld [vmem:[%s437 + $0x3f0] sm:$0xff]
        %v654 = vld [vmem:[%s437 + $0x3f8] sm:$0xff]
        %v655 = vunpack.c.0.s8 %v527
        %v656 = vunpack.c.0.s8 %v528
        %v657 = vunpack.c.0.s8 %v529
        %v658 = vunpack.c.0.s8 %v530
        %v659 = vunpack.c.1.s8 %v527
        %v660 = vunpack.c.1.s8 %v528
        %v661 = vunpack.c.1.s8 %v529
        %v662 = vunpack.c.1.s8 %v530
        %v663 = vunpack.c.2.s8 %v527
        %v664 = vunpack.c.2.s8 %v528
        %v665 = vunpack.c.2.s8 %v529
        %v666 = vunpack.c.2.s8 %v530
        %v667 = vunpack.c.3.s8 %v527
        %v668 = vunpack.c.3.s8 %v528
        %v669 = vunpack.c.3.s8 %v529
        %v670 = vunpack.c.3.s8 %v530
        %v671 = vunpack.c.0.s8 %v531
        %v672 = vunpack.c.0.s8 %v532
        %v673 = vunpack.c.0.s8 %v533
        %v674 = vunpack.c.0.s8 %v534
        %v675 = vunpack.c.1.s8 %v531
        %v676 = vunpack.c.1.s8 %v532
        %v677 = vunpack.c.1.s8 %v533
        %v678 = vunpack.c.1.s8 %v534
        %v679 = vunpack.c.2.s8 %v531
        %v680 = vunpack.c.2.s8 %v532
        %v681 = vunpack.c.2.s8 %v533
        %v682 = vunpack.c.2.s8 %v534
        %v683 = vunpack.c.3.s8 %v531
        %v684 = vunpack.c.3.s8 %v532
        %v685 = vunpack.c.3.s8 %v533
        %v686 = vunpack.c.3.s8 %v534
        %v687 = vunpack.c.0.s8 %v535
        %v688 = vunpack.c.0.s8 %v536
        %v689 = vunpack.c.0.s8 %v537
        %v690 = vunpack.c.0.s8 %v538
        %v691 = vunpack.c.1.s8 %v535
        %v692 = vunpack.c.1.s8 %v536
        %v693 = vunpack.c.1.s8 %v537
        %v694 = vunpack.c.1.s8 %v538
        %v695 = vunpack.c.2.s8 %v535
        %v696 = vunpack.c.2.s8 %v536
        %v697 = vunpack.c.2.s8 %v537
        %v698 = vunpack.c.2.s8 %v538
        %v699 = vunpack.c.3.s8 %v535
        %v700 = vunpack.c.3.s8 %v536
        %v701 = vunpack.c.3.s8 %v537
        %v702 = vunpack.c.3.s8 %v538
        %v703 = vunpack.c.0.s8 %v539
        %v704 = vunpack.c.0.s8 %v540
        %v705 = vunpack.c.0.s8 %v541
        %v706 = vunpack.c.0.s8 %v542
        %v707 = vunpack.c.1.s8 %v539
        %v708 = vunpack.c.1.s8 %v540
        %v709 = vunpack.c.1.s8 %v541
        %v710 = vunpack.c.1.s8 %v542
        %v711 = vunpack.c.2.s8 %v539
        %v712 = vunpack.c.2.s8 %v540
        %v713 = vunpack.c.2.s8 %v541
        %v714 = vunpack.c.2.s8 %v542
        %v715 = vunpack.c.3.s8 %v539
        %v716 = vunpack.c.3.s8 %v540
        %v717 = vunpack.c.3.s8 %v541
        %v718 = vunpack.c.3.s8 %v542
        %v719 = vunpack.c.0.s8 %v543
        %v720 = vunpack.c.0.s8 %v544
        %v721 = vunpack.c.0.s8 %v545
        %v722 = vunpack.c.0.s8 %v546
        %v723 = vunpack.c.1.s8 %v543
        %v724 = vunpack.c.1.s8 %v544
        %v725 = vunpack.c.1.s8 %v545
        %v726 = vunpack.c.1.s8 %v546
        %v727 = vunpack.c.2.s8 %v543
        %v728 = vunpack.c.2.s8 %v544
        %v729 = vunpack.c.2.s8 %v545
        %v730 = vunpack.c.2.s8 %v546
        %v731 = vunpack.c.3.s8 %v543
        %v732 = vunpack.c.3.s8 %v544
        %v733 = vunpack.c.3.s8 %v545
        %v734 = vunpack.c.3.s8 %v546
        %v735 = vunpack.c.0.s8 %v547
        %v736 = vunpack.c.0.s8 %v548
        %v737 = vunpack.c.0.s8 %v549
        %v738 = vunpack.c.0.s8 %v550
        %v739 = vunpack.c.1.s8 %v547
        %v740 = vunpack.c.1.s8 %v548
        %v741 = vunpack.c.1.s8 %v549
        %v742 = vunpack.c.1.s8 %v550
        %v743 = vunpack.c.2.s8 %v547
        %v744 = vunpack.c.2.s8 %v548
        %v745 = vunpack.c.2.s8 %v549
        %v746 = vunpack.c.2.s8 %v550
        %v747 = vunpack.c.3.s8 %v547
        %v748 = vunpack.c.3.s8 %v548
        %v749 = vunpack.c.3.s8 %v549
        %v750 = vunpack.c.3.s8 %v550
        %v751 = vunpack.c.0.s8 %v551
        %v752 = vunpack.c.0.s8 %v552
        %v753 = vunpack.c.0.s8 %v553
        %v754 = vunpack.c.0.s8 %v554
        %v755 = vunpack.c.1.s8 %v551
        %v756 = vunpack.c.1.s8 %v552
        %v757 = vunpack.c.1.s8 %v553
        %v758 = vunpack.c.1.s8 %v554
        %v759 = vunpack.c.2.s8 %v551
        %v760 = vunpack.c.2.s8 %v552
        %v761 = vunpack.c.2.s8 %v553
        %v762 = vunpack.c.2.s8 %v554
        %v763 = vunpack.c.3.s8 %v551
        %v764 = vunpack.c.3.s8 %v552
        %v765 = vunpack.c.3.s8 %v553
        %v766 = vunpack.c.3.s8 %v554
        %v767 = vunpack.c.0.s8 %v555
        %v768 = vunpack.c.0.s8 %v556
        %v769 = vunpack.c.0.s8 %v557
        %v770 = vunpack.c.0.s8 %v558
        %v771 = vunpack.c.1.s8 %v555
        %v772 = vunpack.c.1.s8 %v556
        %v773 = vunpack.c.1.s8 %v557
        %v774 = vunpack.c.1.s8 %v558
        %v775 = vunpack.c.2.s8 %v555
        %v776 = vunpack.c.2.s8 %v556
        %v777 = vunpack.c.2.s8 %v557
        %v778 = vunpack.c.2.s8 %v558
        %v779 = vunpack.c.3.s8 %v555
        %v780 = vunpack.c.3.s8 %v556
        %v781 = vunpack.c.3.s8 %v557
        %v782 = vunpack.c.3.s8 %v558
        %v783 = vunpack.c.0.s8 %v559
        %v784 = vunpack.c.0.s8 %v560
        %v785 = vunpack.c.0.s8 %v561
        %v786 = vunpack.c.0.s8 %v562
        %v787 = vunpack.c.1.s8 %v559
        %v788 = vunpack.c.1.s8 %v560
        %v789 = vunpack.c.1.s8 %v561
        %v790 = vunpack.c.1.s8 %v562
        %v791 = vunpack.c.2.s8 %v559
        %v792 = vunpack.c.2.s8 %v560
        %v793 = vunpack.c.2.s8 %v561
        %v794 = vunpack.c.2.s8 %v562
        %v795 = vunpack.c.3.s8 %v559
        %v796 = vunpack.c.3.s8 %v560
        %v797 = vunpack.c.3.s8 %v561
        %v798 = vunpack.c.3.s8 %v562
        %v799 = vunpack.c.0.s8 %v563
        %v800 = vunpack.c.0.s8 %v564
        %v801 = vunpack.c.0.s8 %v565
        %v802 = vunpack.c.0.s8 %v566
        %v803 = vunpack.c.1.s8 %v563
        %v804 = vunpack.c.1.s8 %v564
        %v805 = vunpack.c.1.s8 %v565
        %v806 = vunpack.c.1.s8 %v566
        %v807 = vunpack.c.2.s8 %v563
        %v808 = vunpack.c.2.s8 %v564
        %v809 = vunpack.c.2.s8 %v565
        %v810 = vunpack.c.2.s8 %v566
        %v811 = vunpack.c.3.s8 %v563
        %v812 = vunpack.c.3.s8 %v564
        %v813 = vunpack.c.3.s8 %v565
        %v814 = vunpack.c.3.s8 %v566
        %v815 = vunpack.c.0.s8 %v567
        %v816 = vunpack.c.0.s8 %v568
        %v817 = vunpack.c.0.s8 %v569
        %v818 = vunpack.c.0.s8 %v570
        %v819 = vunpack.c.1.s8 %v567
        %v820 = vunpack.c.1.s8 %v568
        %v821 = vunpack.c.1.s8 %v569
        %v822 = vunpack.c.1.s8 %v570
        %v823 = vunpack.c.2.s8 %v567
        %v824 = vunpack.c.2.s8 %v568
        %v825 = vunpack.c.2.s8 %v569
        %v826 = vunpack.c.2.s8 %v570
        %v827 = vunpack.c.3.s8 %v567
        %v828 = vunpack.c.3.s8 %v568
        %v829 = vunpack.c.3.s8 %v569
        %v830 = vunpack.c.3.s8 %v570
        %v831 = vunpack.c.0.s8 %v571
        %v832 = vunpack.c.0.s8 %v572
        %v833 = vunpack.c.0.s8 %v573
        %v834 = vunpack.c.0.s8 %v574
        %v835 = vunpack.c.1.s8 %v571
        %v836 = vunpack.c.1.s8 %v572
        %v837 = vunpack.c.1.s8 %v573
        %v838 = vunpack.c.1.s8 %v574
        %v839 = vunpack.c.2.s8 %v571
        %v840 = vunpack.c.2.s8 %v572
        %v841 = vunpack.c.2.s8 %v573
        %v842 = vunpack.c.2.s8 %v574
        %v843 = vunpack.c.3.s8 %v571
        %v844 = vunpack.c.3.s8 %v572
        %v845 = vunpack.c.3.s8 %v573
        %v846 = vunpack.c.3.s8 %v574
        %v847 = vunpack.c.0.s8 %v575
        %v848 = vunpack.c.0.s8 %v576
        %v849 = vunpack.c.0.s8 %v577
        %v850 = vunpack.c.0.s8 %v578
        %v851 = vunpack.c.1.s8 %v575
        %v852 = vunpack.c.1.s8 %v576
        %v853 = vunpack.c.1.s8 %v577
        %v854 = vunpack.c.1.s8 %v578
        %v855 = vunpack.c.2.s8 %v575
        %v856 = vunpack.c.2.s8 %v576
        %v857 = vunpack.c.2.s8 %v577
        %v858 = vunpack.c.2.s8 %v578
        %v859 = vunpack.c.3.s8 %v575
        %v860 = vunpack.c.3.s8 %v576
        %v861 = vunpack.c.3.s8 %v577
        %v862 = vunpack.c.3.s8 %v578
        %v863 = vunpack.c.0.s8 %v579
        %v864 = vunpack.c.0.s8 %v580
        %v865 = vunpack.c.0.s8 %v581
        %v866 = vunpack.c.0.s8 %v582
        %v867 = vunpack.c.1.s8 %v579
        %v868 = vunpack.c.1.s8 %v580
        %v869 = vunpack.c.1.s8 %v581
        %v870 = vunpack.c.1.s8 %v582
        %v871 = vunpack.c.2.s8 %v579
        %v872 = vunpack.c.2.s8 %v580
        %v873 = vunpack.c.2.s8 %v581
        %v874 = vunpack.c.2.s8 %v582
        %v875 = vunpack.c.3.s8 %v579
        %v876 = vunpack.c.3.s8 %v580
        %v877 = vunpack.c.3.s8 %v581
        %v878 = vunpack.c.3.s8 %v582
        %v879 = vunpack.c.0.s8 %v583
        %v880 = vunpack.c.0.s8 %v584
        %v881 = vunpack.c.0.s8 %v585
        %v882 = vunpack.c.0.s8 %v586
        %v883 = vunpack.c.1.s8 %v583
        %v884 = vunpack.c.1.s8 %v584
        %v885 = vunpack.c.1.s8 %v585
        %v886 = vunpack.c.1.s8 %v586
        %v887 = vunpack.c.2.s8 %v583
        %v888 = vunpack.c.2.s8 %v584
        %v889 = vunpack.c.2.s8 %v585
        %v890 = vunpack.c.2.s8 %v586
        %v891 = vunpack.c.3.s8 %v583
        %v892 = vunpack.c.3.s8 %v584
        %v893 = vunpack.c.3.s8 %v585
        %v894 = vunpack.c.3.s8 %v586
        %v895 = vunpack.c.0.s8 %v587
        %v896 = vunpack.c.0.s8 %v588
        %v897 = vunpack.c.0.s8 %v589
        %v898 = vunpack.c.0.s8 %v590
        %v899 = vunpack.c.1.s8 %v587
        %v900 = vunpack.c.1.s8 %v588
        %v901 = vunpack.c.1.s8 %v589
        %v902 = vunpack.c.1.s8 %v590
        %v903 = vunpack.c.2.s8 %v587
        %v904 = vunpack.c.2.s8 %v588
        %v905 = vunpack.c.2.s8 %v589
        %v906 = vunpack.c.2.s8 %v590
        %v907 = vunpack.c.3.s8 %v587
        %v908 = vunpack.c.3.s8 %v588
        %v909 = vunpack.c.3.s8 %v589
        %v910 = vunpack.c.3.s8 %v590
        %v911 = vunpack.c.0.s8 %v591
        %v912 = vunpack.c.0.s8 %v592
        %v913 = vunpack.c.0.s8 %v593
        %v914 = vunpack.c.0.s8 %v594
        %v915 = vunpack.c.1.s8 %v591
        %v916 = vunpack.c.1.s8 %v592
        %v917 = vunpack.c.1.s8 %v593
        %v918 = vunpack.c.1.s8 %v594
        %v919 = vunpack.c.2.s8 %v591
        %v920 = vunpack.c.2.s8 %v592
        %v921 = vunpack.c.2.s8 %v593
        %v922 = vunpack.c.2.s8 %v594
        %v923 = vunpack.c.3.s8 %v591
        %v924 = vunpack.c.3.s8 %v592
        %v925 = vunpack.c.3.s8 %v593
        %v926 = vunpack.c.3.s8 %v594
        %v927 = vunpack.c.0.s8 %v595
        %v928 = vunpack.c.0.s8 %v596
        %v929 = vunpack.c.0.s8 %v597
        %v930 = vunpack.c.0.s8 %v598
        %v931 = vunpack.c.1.s8 %v595
        %v932 = vunpack.c.1.s8 %v596
        %v933 = vunpack.c.1.s8 %v597
        %v934 = vunpack.c.1.s8 %v598
        %v935 = vunpack.c.2.s8 %v595
        %v936 = vunpack.c.2.s8 %v596
        %v937 = vunpack.c.2.s8 %v597
        %v938 = vunpack.c.2.s8 %v598
        %v939 = vunpack.c.3.s8 %v595
        %v940 = vunpack.c.3.s8 %v596
        %v941 = vunpack.c.3.s8 %v597
        %v942 = vunpack.c.3.s8 %v598
        %v943 = vunpack.c.0.s8 %v599
        %v944 = vunpack.c.0.s8 %v600
        %v945 = vunpack.c.0.s8 %v601
        %v946 = vunpack.c.0.s8 %v602
        %v947 = vunpack.c.1.s8 %v599
        %v948 = vunpack.c.1.s8 %v600
        %v949 = vunpack.c.1.s8 %v601
        %v950 = vunpack.c.1.s8 %v602
        %v951 = vunpack.c.2.s8 %v599
        %v952 = vunpack.c.2.s8 %v600
        %v953 = vunpack.c.2.s8 %v601
        %v954 = vunpack.c.2.s8 %v602
        %v955 = vunpack.c.3.s8 %v599
        %v956 = vunpack.c.3.s8 %v600
        %v957 = vunpack.c.3.s8 %v601
        %v958 = vunpack.c.3.s8 %v602
        %v959 = vunpack.c.0.s8 %v603
        %v960 = vunpack.c.0.s8 %v604
        %v961 = vunpack.c.0.s8 %v605
        %v962 = vunpack.c.0.s8 %v606
        %v963 = vunpack.c.1.s8 %v603
        %v964 = vunpack.c.1.s8 %v604
        %v965 = vunpack.c.1.s8 %v605
        %v966 = vunpack.c.1.s8 %v606
        %v967 = vunpack.c.2.s8 %v603
        %v968 = vunpack.c.2.s8 %v604
        %v969 = vunpack.c.2.s8 %v605
        %v970 = vunpack.c.2.s8 %v606
        %v971 = vunpack.c.3.s8 %v603
        %v972 = vunpack.c.3.s8 %v604
        %v973 = vunpack.c.3.s8 %v605
        %v974 = vunpack.c.3.s8 %v606
        %v975 = vunpack.c.0.s8 %v607
        %v976 = vunpack.c.0.s8 %v608
        %v977 = vunpack.c.0.s8 %v609
        %v978 = vunpack.c.0.s8 %v610
        %v979 = vunpack.c.1.s8 %v607
        %v980 = vunpack.c.1.s8 %v608
        %v981 = vunpack.c.1.s8 %v609
        %v982 = vunpack.c.1.s8 %v610
        %v983 = vunpack.c.2.s8 %v607
        %v984 = vunpack.c.2.s8 %v608
        %v985 = vunpack.c.2.s8 %v609
        %v986 = vunpack.c.2.s8 %v610
        %v987 = vunpack.c.3.s8 %v607
        %v988 = vunpack.c.3.s8 %v608
        %v989 = vunpack.c.3.s8 %v609
        %v990 = vunpack.c.3.s8 %v610
        %v991 = vunpack.c.0.s8 %v611
        %v992 = vunpack.c.0.s8 %v612
        %v993 = vunpack.c.0.s8 %v613
        %v994 = vunpack.c.0.s8 %v614
        %v995 = vunpack.c.1.s8 %v611
        %v996 = vunpack.c.1.s8 %v612
        %v997 = vunpack.c.1.s8 %v613
        %v998 = vunpack.c.1.s8 %v614
        %v999 = vunpack.c.2.s8 %v611
        %v1000 = vunpack.c.2.s8 %v612
        %v1001 = vunpack.c.2.s8 %v613
        %v1002 = vunpack.c.2.s8 %v614
        %v1003 = vunpack.c.3.s8 %v611
        %v1004 = vunpack.c.3.s8 %v612
        %v1005 = vunpack.c.3.s8 %v613
        %v1006 = vunpack.c.3.s8 %v614
        %v1007 = vunpack.c.0.s8 %v615
        %v1008 = vunpack.c.0.s8 %v616
        %v1009 = vunpack.c.0.s8 %v617
        %v1010 = vunpack.c.0.s8 %v618
        %v1011 = vunpack.c.1.s8 %v615
        %v1012 = vunpack.c.1.s8 %v616
        %v1013 = vunpack.c.1.s8 %v617
        %v1014 = vunpack.c.1.s8 %v618
        %v1015 = vunpack.c.2.s8 %v615
        %v1016 = vunpack.c.2.s8 %v616
        %v1017 = vunpack.c.2.s8 %v617
        %v1018 = vunpack.c.2.s8 %v618
        %v1019 = vunpack.c.3.s8 %v615
        %v1020 = vunpack.c.3.s8 %v616
        %v1021 = vunpack.c.3.s8 %v617
        %v1022 = vunpack.c.3.s8 %v618
        %v1023 = vunpack.c.0.s8 %v619
        %v1024 = vunpack.c.0.s8 %v620
        %v1025 = vunpack.c.0.s8 %v621
        %v1026 = vunpack.c.0.s8 %v622
        %v1027 = vunpack.c.1.s8 %v619
        %v1028 = vunpack.c.1.s8 %v620
        %v1029 = vunpack.c.1.s8 %v621
        %v1030 = vunpack.c.1.s8 %v622
        %v1031 = vunpack.c.2.s8 %v619
        %v1032 = vunpack.c.2.s8 %v620
        %v1033 = vunpack.c.2.s8 %v621
        %v1034 = vunpack.c.2.s8 %v622
        %v1035 = vunpack.c.3.s8 %v619
        %v1036 = vunpack.c.3.s8 %v620
        %v1037 = vunpack.c.3.s8 %v621
        %v1038 = vunpack.c.3.s8 %v622
        %v1039 = vunpack.c.0.s8 %v623
        %v1040 = vunpack.c.0.s8 %v624
        %v1041 = vunpack.c.0.s8 %v625
        %v1042 = vunpack.c.0.s8 %v626
        %v1043 = vunpack.c.1.s8 %v623
        %v1044 = vunpack.c.1.s8 %v624
        %v1045 = vunpack.c.1.s8 %v625
        %v1046 = vunpack.c.1.s8 %v626
        %v1047 = vunpack.c.2.s8 %v623
        %v1048 = vunpack.c.2.s8 %v624
        %v1049 = vunpack.c.2.s8 %v625
        %v1050 = vunpack.c.2.s8 %v626
        %v1051 = vunpack.c.3.s8 %v623
        %v1052 = vunpack.c.3.s8 %v624
        %v1053 = vunpack.c.3.s8 %v625
        %v1054 = vunpack.c.3.s8 %v626
        %v1055 = vunpack.c.0.s8 %v627
        %v1056 = vunpack.c.0.s8 %v628
        %v1057 = vunpack.c.0.s8 %v629
        %v1058 = vunpack.c.0.s8 %v630
        %v1059 = vunpack.c.1.s8 %v627
        %v1060 = vunpack.c.1.s8 %v628
        %v1061 = vunpack.c.1.s8 %v629
        %v1062 = vunpack.c.1.s8 %v630
        %v1063 = vunpack.c.2.s8 %v627
        %v1064 = vunpack.c.2.s8 %v628
        %v1065 = vunpack.c.2.s8 %v629
        %v1066 = vunpack.c.2.s8 %v630
        %v1067 = vunpack.c.3.s8 %v627
        %v1068 = vunpack.c.3.s8 %v628
        %v1069 = vunpack.c.3.s8 %v629
        %v1070 = vunpack.c.3.s8 %v630
        %v1071 = vunpack.c.0.s8 %v631
        %v1072 = vunpack.c.0.s8 %v632
        %v1073 = vunpack.c.0.s8 %v633
        %v1074 = vunpack.c.0.s8 %v634
        %v1075 = vunpack.c.1.s8 %v631
        %v1076 = vunpack.c.1.s8 %v632
        %v1077 = vunpack.c.1.s8 %v633
        %v1078 = vunpack.c.1.s8 %v634
        %v1079 = vunpack.c.2.s8 %v631
        %v1080 = vunpack.c.2.s8 %v632
        %v1081 = vunpack.c.2.s8 %v633
        %v1082 = vunpack.c.2.s8 %v634
        %v1083 = vunpack.c.3.s8 %v631
        %v1084 = vunpack.c.3.s8 %v632
        %v1085 = vunpack.c.3.s8 %v633
        %v1086 = vunpack.c.3.s8 %v634
        %v1087 = vunpack.c.0.s8 %v635
        %v1088 = vunpack.c.0.s8 %v636
        %v1089 = vunpack.c.0.s8 %v637
        %v1090 = vunpack.c.0.s8 %v638
        %v1091 = vunpack.c.1.s8 %v635
        %v1092 = vunpack.c.1.s8 %v636
        %v1093 = vunpack.c.1.s8 %v637
        %v1094 = vunpack.c.1.s8 %v638
        %v1095 = vunpack.c.2.s8 %v635
        %v1096 = vunpack.c.2.s8 %v636
        %v1097 = vunpack.c.2.s8 %v637
        %v1098 = vunpack.c.2.s8 %v638
        %v1099 = vunpack.c.3.s8 %v635
        %v1100 = vunpack.c.3.s8 %v636
        %v1101 = vunpack.c.3.s8 %v637
        %v1102 = vunpack.c.3.s8 %v638
        %v1103 = vunpack.c.0.s8 %v639
        %v1104 = vunpack.c.0.s8 %v640
        %v1105 = vunpack.c.0.s8 %v641
        %v1106 = vunpack.c.0.s8 %v642
        %v1107 = vunpack.c.1.s8 %v639
        %v1108 = vunpack.c.1.s8 %v640
        %v1109 = vunpack.c.1.s8 %v641
        %v1110 = vunpack.c.1.s8 %v642
        %v1111 = vunpack.c.2.s8 %v639
        %v1112 = vunpack.c.2.s8 %v640
        %v1113 = vunpack.c.2.s8 %v641
        %v1114 = vunpack.c.2.s8 %v642
        %v1115 = vunpack.c.3.s8 %v639
        %v1116 = vunpack.c.3.s8 %v640
        %v1117 = vunpack.c.3.s8 %v641
        %v1118 = vunpack.c.3.s8 %v642
        %v1119 = vunpack.c.0.s8 %v643
        %v1120 = vunpack.c.0.s8 %v644
        %v1121 = vunpack.c.0.s8 %v645
        %v1122 = vunpack.c.0.s8 %v646
        %v1123 = vunpack.c.1.s8 %v643
        %v1124 = vunpack.c.1.s8 %v644
        %v1125 = vunpack.c.1.s8 %v645
        %v1126 = vunpack.c.1.s8 %v646
        %v1127 = vunpack.c.2.s8 %v643
        %v1128 = vunpack.c.2.s8 %v644
        %v1129 = vunpack.c.2.s8 %v645
        %v1130 = vunpack.c.2.s8 %v646
        %v1131 = vunpack.c.3.s8 %v643
        %v1132 = vunpack.c.3.s8 %v644
        %v1133 = vunpack.c.3.s8 %v645
        %v1134 = vunpack.c.3.s8 %v646
        %v1135 = vunpack.c.0.s8 %v647
        %v1136 = vunpack.c.0.s8 %v648
        %v1137 = vunpack.c.0.s8 %v649
        %v1138 = vunpack.c.0.s8 %v650
        %v1139 = vunpack.c.1.s8 %v647
        %v1140 = vunpack.c.1.s8 %v648
        %v1141 = vunpack.c.1.s8 %v649
        %v1142 = vunpack.c.1.s8 %v650
        %v1143 = vunpack.c.2.s8 %v647
        %v1144 = vunpack.c.2.s8 %v648
        %v1145 = vunpack.c.2.s8 %v649
        %v1146 = vunpack.c.2.s8 %v650
        %v1147 = vunpack.c.3.s8 %v647
        %v1148 = vunpack.c.3.s8 %v648
        %v1149 = vunpack.c.3.s8 %v649
        %v1150 = vunpack.c.3.s8 %v650
        %v1151 = vunpack.c.0.s8 %v651
        %v1152 = vunpack.c.0.s8 %v652
        %v1153 = vunpack.c.0.s8 %v653
        %v1154 = vunpack.c.0.s8 %v654
        %v1155 = vunpack.c.1.s8 %v651
        %v1156 = vunpack.c.1.s8 %v652
        %v1157 = vunpack.c.1.s8 %v653
        %v1158 = vunpack.c.1.s8 %v654
        %v1159 = vunpack.c.2.s8 %v651
        %v1160 = vunpack.c.2.s8 %v652
        %v1161 = vunpack.c.2.s8 %v653
        %v1162 = vunpack.c.2.s8 %v654
        %v1163 = vunpack.c.3.s8 %v651
        %v1164 = vunpack.c.3.s8 %v652
        %v1165 = vunpack.c.3.s8 %v653
        %v1166 = vunpack.c.3.s8 %v654
        %v1167 = vcvt.s32.f32 %v655
        %v1168 = vcvt.s32.f32 %v656
        %v1169 = vcvt.s32.f32 %v657
        %v1170 = vcvt.s32.f32 %v658
        %v1171 = vcvt.s32.f32 %v659
        %v1172 = vcvt.s32.f32 %v660
        %v1173 = vcvt.s32.f32 %v661
        %v1174 = vcvt.s32.f32 %v662
        %v1175 = vcvt.s32.f32 %v663
        %v1176 = vcvt.s32.f32 %v664
        %v1177 = vcvt.s32.f32 %v665
        %v1178 = vcvt.s32.f32 %v666
        %v1179 = vcvt.s32.f32 %v667
        %v1180 = vcvt.s32.f32 %v668
        %v1181 = vcvt.s32.f32 %v669
        %v1182 = vcvt.s32.f32 %v670
        %v1183 = vcvt.s32.f32 %v671
        %v1184 = vcvt.s32.f32 %v672
        %v1185 = vcvt.s32.f32 %v673
        %v1186 = vcvt.s32.f32 %v674
        %v1187 = vcvt.s32.f32 %v675
        %v1188 = vcvt.s32.f32 %v676
        %v1189 = vcvt.s32.f32 %v677
        %v1190 = vcvt.s32.f32 %v678
        %v1191 = vcvt.s32.f32 %v679
        %v1192 = vcvt.s32.f32 %v680
        %v1193 = vcvt.s32.f32 %v681
        %v1194 = vcvt.s32.f32 %v682
        %v1195 = vcvt.s32.f32 %v683
        %v1196 = vcvt.s32.f32 %v684
        %v1197 = vcvt.s32.f32 %v685
        %v1198 = vcvt.s32.f32 %v686
        %v1199 = vcvt.s32.f32 %v687
        %v1200 = vcvt.s32.f32 %v688
        %v1201 = vcvt.s32.f32 %v689
        %v1202 = vcvt.s32.f32 %v690
        %v1203 = vcvt.s32.f32 %v691
        %v1204 = vcvt.s32.f32 %v692
        %v1205 = vcvt.s32.f32 %v693
        %v1206 = vcvt.s32.f32 %v694
        %v1207 = vcvt.s32.f32 %v695
        %v1208 = vcvt.s32.f32 %v696
        %v1209 = vcvt.s32.f32 %v697
        %v1210 = vcvt.s32.f32 %v698
        %v1211 = vcvt.s32.f32 %v699
        %v1212 = vcvt.s32.f32 %v700
        %v1213 = vcvt.s32.f32 %v701
        %v1214 = vcvt.s32.f32 %v702
        %v1215 = vcvt.s32.f32 %v703
        %v1216 = vcvt.s32.f32 %v704
        %v1217 = vcvt.s32.f32 %v705
        %v1218 = vcvt.s32.f32 %v706
        %v1219 = vcvt.s32.f32 %v707
        %v1220 = vcvt.s32.f32 %v708
        %v1221 = vcvt.s32.f32 %v709
        %v1222 = vcvt.s32.f32 %v710
        %v1223 = vcvt.s32.f32 %v711
        %v1224 = vcvt.s32.f32 %v712
        %v1225 = vcvt.s32.f32 %v713
        %v1226 = vcvt.s32.f32 %v714
        %v1227 = vcvt.s32.f32 %v715
        %v1228 = vcvt.s32.f32 %v716
        %v1229 = vcvt.s32.f32 %v717
        %v1230 = vcvt.s32.f32 %v718
        %v1231 = vcvt.s32.f32 %v719
        %v1232 = vcvt.s32.f32 %v720
        %v1233 = vcvt.s32.f32 %v721
        %v1234 = vcvt.s32.f32 %v722
        %v1235 = vcvt.s32.f32 %v723
        %v1236 = vcvt.s32.f32 %v724
        %v1237 = vcvt.s32.f32 %v725
        %v1238 = vcvt.s32.f32 %v726
        %v1239 = vcvt.s32.f32 %v727
        %v1240 = vcvt.s32.f32 %v728
        %v1241 = vcvt.s32.f32 %v729
        %v1242 = vcvt.s32.f32 %v730
        %v1243 = vcvt.s32.f32 %v731
        %v1244 = vcvt.s32.f32 %v732
        %v1245 = vcvt.s32.f32 %v733
        %v1246 = vcvt.s32.f32 %v734
        %v1247 = vcvt.s32.f32 %v735
        %v1248 = vcvt.s32.f32 %v736
        %v1249 = vcvt.s32.f32 %v737
        %v1250 = vcvt.s32.f32 %v738
        %v1251 = vcvt.s32.f32 %v739
        %v1252 = vcvt.s32.f32 %v740
        %v1253 = vcvt.s32.f32 %v741
        %v1254 = vcvt.s32.f32 %v742
        %v1255 = vcvt.s32.f32 %v743
        %v1256 = vcvt.s32.f32 %v744
        %v1257 = vcvt.s32.f32 %v745
        %v1258 = vcvt.s32.f32 %v746
        %v1259 = vcvt.s32.f32 %v747
        %v1260 = vcvt.s32.f32 %v748
        %v1261 = vcvt.s32.f32 %v749
        %v1262 = vcvt.s32.f32 %v750
        %v1263 = vcvt.s32.f32 %v751
        %v1264 = vcvt.s32.f32 %v752
        %v1265 = vcvt.s32.f32 %v753
        %v1266 = vcvt.s32.f32 %v754
        %v1267 = vcvt.s32.f32 %v755
        %v1268 = vcvt.s32.f32 %v756
        %v1269 = vcvt.s32.f32 %v757
        %v1270 = vcvt.s32.f32 %v758
        %v1271 = vcvt.s32.f32 %v759
        %v1272 = vcvt.s32.f32 %v760
        %v1273 = vcvt.s32.f32 %v761
        %v1274 = vcvt.s32.f32 %v762
        %v1275 = vcvt.s32.f32 %v763
        %v1276 = vcvt.s32.f32 %v764
        %v1277 = vcvt.s32.f32 %v765
        %v1278 = vcvt.s32.f32 %v766
        %v1279 = vcvt.s32.f32 %v767
        %v1280 = vcvt.s32.f32 %v768
        %v1281 = vcvt.s32.f32 %v769
        %v1282 = vcvt.s32.f32 %v770
        %v1283 = vcvt.s32.f32 %v771
        %v1284 = vcvt.s32.f32 %v772
        %v1285 = vcvt.s32.f32 %v773
        %v1286 = vcvt.s32.f32 %v774
        %v1287 = vcvt.s32.f32 %v775
        %v1288 = vcvt.s32.f32 %v776
        %v1289 = vcvt.s32.f32 %v777
        %v1290 = vcvt.s32.f32 %v778
        %v1291 = vcvt.s32.f32 %v779
        %v1292 = vcvt.s32.f32 %v780
        %v1293 = vcvt.s32.f32 %v781
        %v1294 = vcvt.s32.f32 %v782
        %v1295 = vcvt.s32.f32 %v783
        %v1296 = vcvt.s32.f32 %v784
        %v1297 = vcvt.s32.f32 %v785
        %v1298 = vcvt.s32.f32 %v786
        %v1299 = vcvt.s32.f32 %v787
        %v1300 = vcvt.s32.f32 %v788
        %v1301 = vcvt.s32.f32 %v789
        %v1302 = vcvt.s32.f32 %v790
        %v1303 = vcvt.s32.f32 %v791
        %v1304 = vcvt.s32.f32 %v792
        %v1305 = vcvt.s32.f32 %v793
        %v1306 = vcvt.s32.f32 %v794
        %v1307 = vcvt.s32.f32 %v795
        %v1308 = vcvt.s32.f32 %v796
        %v1309 = vcvt.s32.f32 %v797
        %v1310 = vcvt.s32.f32 %v798
        %v1311 = vcvt.s32.f32 %v799
        %v1312 = vcvt.s32.f32 %v800
        %v1313 = vcvt.s32.f32 %v801
        %v1314 = vcvt.s32.f32 %v802
        %v1315 = vcvt.s32.f32 %v803
        %v1316 = vcvt.s32.f32 %v804
        %v1317 = vcvt.s32.f32 %v805
        %v1318 = vcvt.s32.f32 %v806
        %v1319 = vcvt.s32.f32 %v807
        %v1320 = vcvt.s32.f32 %v808
        %v1321 = vcvt.s32.f32 %v809
        %v1322 = vcvt.s32.f32 %v810
        %v1323 = vcvt.s32.f32 %v811
        %v1324 = vcvt.s32.f32 %v812
        %v1325 = vcvt.s32.f32 %v813
        %v1326 = vcvt.s32.f32 %v814
        %v1327 = vcvt.s32.f32 %v815
        %v1328 = vcvt.s32.f32 %v816
        %v1329 = vcvt.s32.f32 %v817
        %v1330 = vcvt.s32.f32 %v818
        %v1331 = vcvt.s32.f32 %v819
        %v1332 = vcvt.s32.f32 %v820
        %v1333 = vcvt.s32.f32 %v821
        %v1334 = vcvt.s32.f32 %v822
        %v1335 = vcvt.s32.f32 %v823
        %v1336 = vcvt.s32.f32 %v824
        %v1337 = vcvt.s32.f32 %v825
        %v1338 = vcvt.s32.f32 %v826
        %v1339 = vcvt.s32.f32 %v827
        %v1340 = vcvt.s32.f32 %v828
        %v1341 = vcvt.s32.f32 %v829
        %v1342 = vcvt.s32.f32 %v830
        %v1343 = vcvt.s32.f32 %v831
        %v1344 = vcvt.s32.f32 %v832
        %v1345 = vcvt.s32.f32 %v833
        %v1346 = vcvt.s32.f32 %v834
        %v1347 = vcvt.s32.f32 %v835
        %v1348 = vcvt.s32.f32 %v836
        %v1349 = vcvt.s32.f32 %v837
        %v1350 = vcvt.s32.f32 %v838
        %v1351 = vcvt.s32.f32 %v839
        %v1352 = vcvt.s32.f32 %v840
        %v1353 = vcvt.s32.f32 %v841
        %v1354 = vcvt.s32.f32 %v842
        %v1355 = vcvt.s32.f32 %v843
        %v1356 = vcvt.s32.f32 %v844
        %v1357 = vcvt.s32.f32 %v845
        %v1358 = vcvt.s32.f32 %v846
        %v1359 = vcvt.s32.f32 %v847
        %v1360 = vcvt.s32.f32 %v848
        %v1361 = vcvt.s32.f32 %v849
        %v1362 = vcvt.s32.f32 %v850
        %v1363 = vcvt.s32.f32 %v851
        %v1364 = vcvt.s32.f32 %v852
        %v1365 = vcvt.s32.f32 %v853
        %v1366 = vcvt.s32.f32 %v854
        %v1367 = vcvt.s32.f32 %v855
        %v1368 = vcvt.s32.f32 %v856
        %v1369 = vcvt.s32.f32 %v857
        %v1370 = vcvt.s32.f32 %v858
        %v1371 = vcvt.s32.f32 %v859
        %v1372 = vcvt.s32.f32 %v860
        %v1373 = vcvt.s32.f32 %v861
        %v1374 = vcvt.s32.f32 %v862
        %v1375 = vcvt.s32.f32 %v863
        %v1376 = vcvt.s32.f32 %v864
        %v1377 = vcvt.s32.f32 %v865
        %v1378 = vcvt.s32.f32 %v866
        %v1379 = vcvt.s32.f32 %v867
        %v1380 = vcvt.s32.f32 %v868
        %v1381 = vcvt.s32.f32 %v869
        %v1382 = vcvt.s32.f32 %v870
        %v1383 = vcvt.s32.f32 %v871
        %v1384 = vcvt.s32.f32 %v872
        %v1385 = vcvt.s32.f32 %v873
        %v1386 = vcvt.s32.f32 %v874
        %v1387 = vcvt.s32.f32 %v875
        %v1388 = vcvt.s32.f32 %v876
        %v1389 = vcvt.s32.f32 %v877
        %v1390 = vcvt.s32.f32 %v878
        %v1391 = vcvt.s32.f32 %v879
        %v1392 = vcvt.s32.f32 %v880
        %v1393 = vcvt.s32.f32 %v881
        %v1394 = vcvt.s32.f32 %v882
        %v1395 = vcvt.s32.f32 %v883
        %v1396 = vcvt.s32.f32 %v884
        %v1397 = vcvt.s32.f32 %v885
        %v1398 = vcvt.s32.f32 %v886
        %v1399 = vcvt.s32.f32 %v887
        %v1400 = vcvt.s32.f32 %v888
        %v1401 = vcvt.s32.f32 %v889
        %v1402 = vcvt.s32.f32 %v890
        %v1403 = vcvt.s32.f32 %v891
        %v1404 = vcvt.s32.f32 %v892
        %v1405 = vcvt.s32.f32 %v893
        %v1406 = vcvt.s32.f32 %v894
        %v1407 = vcvt.s32.f32 %v895
        %v1408 = vcvt.s32.f32 %v896
        %v1409 = vcvt.s32.f32 %v897
        %v1410 = vcvt.s32.f32 %v898
        %v1411 = vcvt.s32.f32 %v899
        %v1412 = vcvt.s32.f32 %v900
        %v1413 = vcvt.s32.f32 %v901
        %v1414 = vcvt.s32.f32 %v902
        %v1415 = vcvt.s32.f32 %v903
        %v1416 = vcvt.s32.f32 %v904
        %v1417 = vcvt.s32.f32 %v905
        %v1418 = vcvt.s32.f32 %v906
        %v1419 = vcvt.s32.f32 %v907
        %v1420 = vcvt.s32.f32 %v908
        %v1421 = vcvt.s32.f32 %v909
        %v1422 = vcvt.s32.f32 %v910
        %v1423 = vcvt.s32.f32 %v911
        %v1424 = vcvt.s32.f32 %v912
        %v1425 = vcvt.s32.f32 %v913
        %v1426 = vcvt.s32.f32 %v914
        %v1427 = vcvt.s32.f32 %v915
        %v1428 = vcvt.s32.f32 %v916
        %v1429 = vcvt.s32.f32 %v917
        %v1430 = vcvt.s32.f32 %v918
        %v1431 = vcvt.s32.f32 %v919
        %v1432 = vcvt.s32.f32 %v920
        %v1433 = vcvt.s32.f32 %v921
        %v1434 = vcvt.s32.f32 %v922
        %v1435 = vcvt.s32.f32 %v923
        %v1436 = vcvt.s32.f32 %v924
        %v1437 = vcvt.s32.f32 %v925
        %v1438 = vcvt.s32.f32 %v926
        %v1439 = vcvt.s32.f32 %v927
        %v1440 = vcvt.s32.f32 %v928
        %v1441 = vcvt.s32.f32 %v929
        %v1442 = vcvt.s32.f32 %v930
        %v1443 = vcvt.s32.f32 %v931
        %v1444 = vcvt.s32.f32 %v932
        %v1445 = vcvt.s32.f32 %v933
        %v1446 = vcvt.s32.f32 %v934
        %v1447 = vcvt.s32.f32 %v935
        %v1448 = vcvt.s32.f32 %v936
        %v1449 = vcvt.s32.f32 %v937
        %v1450 = vcvt.s32.f32 %v938
        %v1451 = vcvt.s32.f32 %v939
        %v1452 = vcvt.s32.f32 %v940
        %v1453 = vcvt.s32.f32 %v941
        %v1454 = vcvt.s32.f32 %v942
        %v1455 = vcvt.s32.f32 %v943
        %v1456 = vcvt.s32.f32 %v944
        %v1457 = vcvt.s32.f32 %v945
        %v1458 = vcvt.s32.f32 %v946
        %v1459 = vcvt.s32.f32 %v947
        %v1460 = vcvt.s32.f32 %v948
        %v1461 = vcvt.s32.f32 %v949
        %v1462 = vcvt.s32.f32 %v950
        %v1463 = vcvt.s32.f32 %v951
        %v1464 = vcvt.s32.f32 %v952
        %v1465 = vcvt.s32.f32 %v953
        %v1466 = vcvt.s32.f32 %v954
        %v1467 = vcvt.s32.f32 %v955
        %v1468 = vcvt.s32.f32 %v956
        %v1469 = vcvt.s32.f32 %v957
        %v1470 = vcvt.s32.f32 %v958
        %v1471 = vcvt.s32.f32 %v959
        %v1472 = vcvt.s32.f32 %v960
        %v1473 = vcvt.s32.f32 %v961
        %v1474 = vcvt.s32.f32 %v962
        %v1475 = vcvt.s32.f32 %v963
        %v1476 = vcvt.s32.f32 %v964
        %v1477 = vcvt.s32.f32 %v965
        %v1478 = vcvt.s32.f32 %v966
        %v1479 = vcvt.s32.f32 %v967
        %v1480 = vcvt.s32.f32 %v968
        %v1481 = vcvt.s32.f32 %v969
        %v1482 = vcvt.s32.f32 %v970
        %v1483 = vcvt.s32.f32 %v971
        %v1484 = vcvt.s32.f32 %v972
        %v1485 = vcvt.s32.f32 %v973
        %v1486 = vcvt.s32.f32 %v974
        %v1487 = vcvt.s32.f32 %v975
        %v1488 = vcvt.s32.f32 %v976
        %v1489 = vcvt.s32.f32 %v977
        %v1490 = vcvt.s32.f32 %v978
        %v1491 = vcvt.s32.f32 %v979
        %v1492 = vcvt.s32.f32 %v980
        %v1493 = vcvt.s32.f32 %v981
        %v1494 = vcvt.s32.f32 %v982
        %v1495 = vcvt.s32.f32 %v983
        %v1496 = vcvt.s32.f32 %v984
        %v1497 = vcvt.s32.f32 %v985
        %v1498 = vcvt.s32.f32 %v986
        %v1499 = vcvt.s32.f32 %v987
        %v1500 = vcvt.s32.f32 %v988
        %v1501 = vcvt.s32.f32 %v989
        %v1502 = vcvt.s32.f32 %v990
        %v1503 = vcvt.s32.f32 %v991
        %v1504 = vcvt.s32.f32 %v992
        %v1505 = vcvt.s32.f32 %v993
        %v1506 = vcvt.s32.f32 %v994
        %v1507 = vcvt.s32.f32 %v995
        %v1508 = vcvt.s32.f32 %v996
        %v1509 = vcvt.s32.f32 %v997
        %v1510 = vcvt.s32.f32 %v998
        %v1511 = vcvt.s32.f32 %v999
        %v1512 = vcvt.s32.f32 %v1000
        %v1513 = vcvt.s32.f32 %v1001
        %v1514 = vcvt.s32.f32 %v1002
        %v1515 = vcvt.s32.f32 %v1003
        %v1516 = vcvt.s32.f32 %v1004
        %v1517 = vcvt.s32.f32 %v1005
        %v1518 = vcvt.s32.f32 %v1006
        %v1519 = vcvt.s32.f32 %v1007
        %v1520 = vcvt.s32.f32 %v1008
        %v1521 = vcvt.s32.f32 %v1009
        %v1522 = vcvt.s32.f32 %v1010
        %v1523 = vcvt.s32.f32 %v1011
        %v1524 = vcvt.s32.f32 %v1012
        %v1525 = vcvt.s32.f32 %v1013
        %v1526 = vcvt.s32.f32 %v1014
        %v1527 = vcvt.s32.f32 %v1015
        %v1528 = vcvt.s32.f32 %v1016
        %v1529 = vcvt.s32.f32 %v1017
        %v1530 = vcvt.s32.f32 %v1018
        %v1531 = vcvt.s32.f32 %v1019
        %v1532 = vcvt.s32.f32 %v1020
        %v1533 = vcvt.s32.f32 %v1021
        %v1534 = vcvt.s32.f32 %v1022
        %v1535 = vcvt.s32.f32 %v1023
        %v1536 = vcvt.s32.f32 %v1024
        %v1537 = vcvt.s32.f32 %v1025
        %v1538 = vcvt.s32.f32 %v1026
        %v1539 = vcvt.s32.f32 %v1027
        %v1540 = vcvt.s32.f32 %v1028
        %v1541 = vcvt.s32.f32 %v1029
        %v1542 = vcvt.s32.f32 %v1030
        %v1543 = vcvt.s32.f32 %v1031
        %v1544 = vcvt.s32.f32 %v1032
        %v1545 = vcvt.s32.f32 %v1033
        %v1546 = vcvt.s32.f32 %v1034
        %v1547 = vcvt.s32.f32 %v1035
        %v1548 = vcvt.s32.f32 %v1036
        %v1549 = vcvt.s32.f32 %v1037
        %v1550 = vcvt.s32.f32 %v1038
        %v1551 = vcvt.s32.f32 %v1039
        %v1552 = vcvt.s32.f32 %v1040
        %v1553 = vcvt.s32.f32 %v1041
        %v1554 = vcvt.s32.f32 %v1042
        %v1555 = vcvt.s32.f32 %v1043
        %v1556 = vcvt.s32.f32 %v1044
        %v1557 = vcvt.s32.f32 %v1045
        %v1558 = vcvt.s32.f32 %v1046
        %v1559 = vcvt.s32.f32 %v1047
        %v1560 = vcvt.s32.f32 %v1048
        %v1561 = vcvt.s32.f32 %v1049
        %v1562 = vcvt.s32.f32 %v1050
        %v1563 = vcvt.s32.f32 %v1051
        %v1564 = vcvt.s32.f32 %v1052
        %v1565 = vcvt.s32.f32 %v1053
        %v1566 = vcvt.s32.f32 %v1054
        %v1567 = vcvt.s32.f32 %v1055
        %v1568 = vcvt.s32.f32 %v1056
        %v1569 = vcvt.s32.f32 %v1057
        %v1570 = vcvt.s32.f32 %v1058
        %v1571 = vcvt.s32.f32 %v1059
        %v1572 = vcvt.s32.f32 %v1060
        %v1573 = vcvt.s32.f32 %v1061
        %v1574 = vcvt.s32.f32 %v1062
        %v1575 = vcvt.s32.f32 %v1063
        %v1576 = vcvt.s32.f32 %v1064
        %v1577 = vcvt.s32.f32 %v1065
        %v1578 = vcvt.s32.f32 %v1066
        %v1579 = vcvt.s32.f32 %v1067
        %v1580 = vcvt.s32.f32 %v1068
        %v1581 = vcvt.s32.f32 %v1069
        %v1582 = vcvt.s32.f32 %v1070
        %v1583 = vcvt.s32.f32 %v1071
        %v1584 = vcvt.s32.f32 %v1072
        %v1585 = vcvt.s32.f32 %v1073
        %v1586 = vcvt.s32.f32 %v1074
        %v1587 = vcvt.s32.f32 %v1075
        %v1588 = vcvt.s32.f32 %v1076
        %v1589 = vcvt.s32.f32 %v1077
        %v1590 = vcvt.s32.f32 %v1078
        %v1591 = vcvt.s32.f32 %v1079
        %v1592 = vcvt.s32.f32 %v1080
        %v1593 = vcvt.s32.f32 %v1081
        %v1594 = vcvt.s32.f32 %v1082
        %v1595 = vcvt.s32.f32 %v1083
        %v1596 = vcvt.s32.f32 %v1084
        %v1597 = vcvt.s32.f32 %v1085
        %v1598 = vcvt.s32.f32 %v1086
        %v1599 = vcvt.s32.f32 %v1087
        %v1600 = vcvt.s32.f32 %v1088
        %v1601 = vcvt.s32.f32 %v1089
        %v1602 = vcvt.s32.f32 %v1090
        %v1603 = vcvt.s32.f32 %v1091
        %v1604 = vcvt.s32.f32 %v1092
        %v1605 = vcvt.s32.f32 %v1093
        %v1606 = vcvt.s32.f32 %v1094
        %v1607 = vcvt.s32.f32 %v1095
        %v1608 = vcvt.s32.f32 %v1096
        %v1609 = vcvt.s32.f32 %v1097
        %v1610 = vcvt.s32.f32 %v1098
        %v1611 = vcvt.s32.f32 %v1099
        %v1612 = vcvt.s32.f32 %v1100
        %v1613 = vcvt.s32.f32 %v1101
        %v1614 = vcvt.s32.f32 %v1102
        %v1615 = vcvt.s32.f32 %v1103
        %v1616 = vcvt.s32.f32 %v1104
        %v1617 = vcvt.s32.f32 %v1105
        %v1618 = vcvt.s32.f32 %v1106
        %v1619 = vcvt.s32.f32 %v1107
        %v1620 = vcvt.s32.f32 %v1108
        %v1621 = vcvt.s32.f32 %v1109
        %v1622 = vcvt.s32.f32 %v1110
        %v1623 = vcvt.s32.f32 %v1111
        %v1624 = vcvt.s32.f32 %v1112
        %v1625 = vcvt.s32.f32 %v1113
        %v1626 = vcvt.s32.f32 %v1114
        %v1627 = vcvt.s32.f32 %v1115
        %v1628 = vcvt.s32.f32 %v1116
        %v1629 = vcvt.s32.f32 %v1117
        %v1630 = vcvt.s32.f32 %v1118
        %v1631 = vcvt.s32.f32 %v1119
        %v1632 = vcvt.s32.f32 %v1120
        %v1633 = vcvt.s32.f32 %v1121
        %v1634 = vcvt.s32.f32 %v1122
        %v1635 = vcvt.s32.f32 %v1123
        %v1636 = vcvt.s32.f32 %v1124
        %v1637 = vcvt.s32.f32 %v1125
        %v1638 = vcvt.s32.f32 %v1126
        %v1639 = vcvt.s32.f32 %v1127
        %v1640 = vcvt.s32.f32 %v1128
        %v1641 = vcvt.s32.f32 %v1129
        %v1642 = vcvt.s32.f32 %v1130
        %v1643 = vcvt.s32.f32 %v1131
        %v1644 = vcvt.s32.f32 %v1132
        %v1645 = vcvt.s32.f32 %v1133
        %v1646 = vcvt.s32.f32 %v1134
        %v1647 = vcvt.s32.f32 %v1135
        %v1648 = vcvt.s32.f32 %v1136
        %v1649 = vcvt.s32.f32 %v1137
        %v1650 = vcvt.s32.f32 %v1138
        %v1651 = vcvt.s32.f32 %v1139
        %v1652 = vcvt.s32.f32 %v1140
        %v1653 = vcvt.s32.f32 %v1141
        %v1654 = vcvt.s32.f32 %v1142
        %v1655 = vcvt.s32.f32 %v1143
        %v1656 = vcvt.s32.f32 %v1144
        %v1657 = vcvt.s32.f32 %v1145
        %v1658 = vcvt.s32.f32 %v1146
        %v1659 = vcvt.s32.f32 %v1147
        %v1660 = vcvt.s32.f32 %v1148
        %v1661 = vcvt.s32.f32 %v1149
        %v1662 = vcvt.s32.f32 %v1150
        %v1663 = vcvt.s32.f32 %v1151
        %v1664 = vcvt.s32.f32 %v1152
        %v1665 = vcvt.s32.f32 %v1153
        %v1666 = vcvt.s32.f32 %v1154
        %v1667 = vcvt.s32.f32 %v1155
        %v1668 = vcvt.s32.f32 %v1156
        %v1669 = vcvt.s32.f32 %v1157
        %v1670 = vcvt.s32.f32 %v1158
        %v1671 = vcvt.s32.f32 %v1159
        %v1672 = vcvt.s32.f32 %v1160
        %v1673 = vcvt.s32.f32 %v1161
        %v1674 = vcvt.s32.f32 %v1162
        %v1675 = vcvt.s32.f32 %v1163
        %v1676 = vcvt.s32.f32 %v1164
        %v1677 = vcvt.s32.f32 %v1165
        %v1678 = vcvt.s32.f32 %v1166
        %v1679 = vpack.c.bf16 %v1171, %v1167
        %v1680 = vpack.c.bf16 %v1172, %v1168
        %v1681 = vpack.c.bf16 %v1173, %v1169
        %v1682 = vpack.c.bf16 %v1174, %v1170
        %v1683 = vpack.c.bf16 %v1179, %v1175
        %v1684 = vpack.c.bf16 %v1180, %v1176
        %v1685 = vpack.c.bf16 %v1181, %v1177
        %v1686 = vpack.c.bf16 %v1182, %v1178
        %v1687 = vpack.c.bf16 %v1187, %v1183
        %v1688 = vpack.c.bf16 %v1188, %v1184
        %v1689 = vpack.c.bf16 %v1189, %v1185
        %v1690 = vpack.c.bf16 %v1190, %v1186
        %v1691 = vpack.c.bf16 %v1195, %v1191
        %v1692 = vpack.c.bf16 %v1196, %v1192
        %v1693 = vpack.c.bf16 %v1197, %v1193
        %v1694 = vpack.c.bf16 %v1198, %v1194
        %v1695 = vpack.c.bf16 %v1203, %v1199
        %v1696 = vpack.c.bf16 %v1204, %v1200
        %v1697 = vpack.c.bf16 %v1205, %v1201
        %v1698 = vpack.c.bf16 %v1206, %v1202
        %v1699 = vpack.c.bf16 %v1211, %v1207
        %v1700 = vpack.c.bf16 %v1212, %v1208
        %v1701 = vpack.c.bf16 %v1213, %v1209
        %v1702 = vpack.c.bf16 %v1214, %v1210
        %v1703 = vpack.c.bf16 %v1219, %v1215
        %v1704 = vpack.c.bf16 %v1220, %v1216
        %v1705 = vpack.c.bf16 %v1221, %v1217
        %v1706 = vpack.c.bf16 %v1222, %v1218
        %v1707 = vpack.c.bf16 %v1227, %v1223
        %v1708 = vpack.c.bf16 %v1228, %v1224
        %v1709 = vpack.c.bf16 %v1229, %v1225
        %v1710 = vpack.c.bf16 %v1230, %v1226
        %v1711 = vpack.c.bf16 %v1235, %v1231
        %v1712 = vpack.c.bf16 %v1236, %v1232
        %v1713 = vpack.c.bf16 %v1237, %v1233
        %v1714 = vpack.c.bf16 %v1238, %v1234
        %v1715 = vpack.c.bf16 %v1243, %v1239
        %v1716 = vpack.c.bf16 %v1244, %v1240
        %v1717 = vpack.c.bf16 %v1245, %v1241
        %v1718 = vpack.c.bf16 %v1246, %v1242
        %v1719 = vpack.c.bf16 %v1251, %v1247
        %v1720 = vpack.c.bf16 %v1252, %v1248
        %v1721 = vpack.c.bf16 %v1253, %v1249
        %v1722 = vpack.c.bf16 %v1254, %v1250
        %v1723 = vpack.c.bf16 %v1259, %v1255
        %v1724 = vpack.c.bf16 %v1260, %v1256
        %v1725 = vpack.c.bf16 %v1261, %v1257
        %v1726 = vpack.c.bf16 %v1262, %v1258
        %v1727 = vpack.c.bf16 %v1267, %v1263
        %v1728 = vpack.c.bf16 %v1268, %v1264
        %v1729 = vpack.c.bf16 %v1269, %v1265
        %v1730 = vpack.c.bf16 %v1270, %v1266
        %v1731 = vpack.c.bf16 %v1275, %v1271
        %v1732 = vpack.c.bf16 %v1276, %v1272
        %v1733 = vpack.c.bf16 %v1277, %v1273
        %v1734 = vpack.c.bf16 %v1278, %v1274
        %v1735 = vpack.c.bf16 %v1283, %v1279
        %v1736 = vpack.c.bf16 %v1284, %v1280
        %v1737 = vpack.c.bf16 %v1285, %v1281
        %v1738 = vpack.c.bf16 %v1286, %v1282
        %v1739 = vpack.c.bf16 %v1291, %v1287
        %v1740 = vpack.c.bf16 %v1292, %v1288
        %v1741 = vpack.c.bf16 %v1293, %v1289
        %v1742 = vpack.c.bf16 %v1294, %v1290
        %v1743 = vpack.c.bf16 %v1299, %v1295
        %v1744 = vpack.c.bf16 %v1300, %v1296
        %v1745 = vpack.c.bf16 %v1301, %v1297
        %v1746 = vpack.c.bf16 %v1302, %v1298
        %v1747 = vpack.c.bf16 %v1307, %v1303
        %v1748 = vpack.c.bf16 %v1308, %v1304
        %v1749 = vpack.c.bf16 %v1309, %v1305
        %v1750 = vpack.c.bf16 %v1310, %v1306
        %v1751 = vpack.c.bf16 %v1315, %v1311
        %v1752 = vpack.c.bf16 %v1316, %v1312
        %v1753 = vpack.c.bf16 %v1317, %v1313
        %v1754 = vpack.c.bf16 %v1318, %v1314
        %v1755 = vpack.c.bf16 %v1323, %v1319
        %v1756 = vpack.c.bf16 %v1324, %v1320
        %v1757 = vpack.c.bf16 %v1325, %v1321
        %v1758 = vpack.c.bf16 %v1326, %v1322
        %v1759 = vpack.c.bf16 %v1331, %v1327
        %v1760 = vpack.c.bf16 %v1332, %v1328
        %v1761 = vpack.c.bf16 %v1333, %v1329
        %v1762 = vpack.c.bf16 %v1334, %v1330
        %v1763 = vpack.c.bf16 %v1339, %v1335
        %v1764 = vpack.c.bf16 %v1340, %v1336
        %v1765 = vpack.c.bf16 %v1341, %v1337
        %v1766 = vpack.c.bf16 %v1342, %v1338
        %v1767 = vpack.c.bf16 %v1347, %v1343
        %v1768 = vpack.c.bf16 %v1348, %v1344
        %v1769 = vpack.c.bf16 %v1349, %v1345
        %v1770 = vpack.c.bf16 %v1350, %v1346
        %v1771 = vpack.c.bf16 %v1355, %v1351
        %v1772 = vpack.c.bf16 %v1356, %v1352
        %v1773 = vpack.c.bf16 %v1357, %v1353
        %v1774 = vpack.c.bf16 %v1358, %v1354
        %v1775 = vpack.c.bf16 %v1363, %v1359
        %v1776 = vpack.c.bf16 %v1364, %v1360
        %v1777 = vpack.c.bf16 %v1365, %v1361
        %v1778 = vpack.c.bf16 %v1366, %v1362
        %v1779 = vpack.c.bf16 %v1371, %v1367
        %v1780 = vpack.c.bf16 %v1372, %v1368
        %v1781 = vpack.c.bf16 %v1373, %v1369
        %v1782 = vpack.c.bf16 %v1374, %v1370
        %v1783 = vpack.c.bf16 %v1379, %v1375
        %v1784 = vpack.c.bf16 %v1380, %v1376
        %v1785 = vpack.c.bf16 %v1381, %v1377
        %v1786 = vpack.c.bf16 %v1382, %v1378
        %v1787 = vpack.c.bf16 %v1387, %v1383
        %v1788 = vpack.c.bf16 %v1388, %v1384
        %v1789 = vpack.c.bf16 %v1389, %v1385
        %v1790 = vpack.c.bf16 %v1390, %v1386
        %v1791 = vpack.c.bf16 %v1395, %v1391
        %v1792 = vpack.c.bf16 %v1396, %v1392
        %v1793 = vpack.c.bf16 %v1397, %v1393
        %v1794 = vpack.c.bf16 %v1398, %v1394
        %v1795 = vpack.c.bf16 %v1403, %v1399
        %v1796 = vpack.c.bf16 %v1404, %v1400
        %v1797 = vpack.c.bf16 %v1405, %v1401
        %v1798 = vpack.c.bf16 %v1406, %v1402
        %v1799 = vpack.c.bf16 %v1411, %v1407
        %v1800 = vpack.c.bf16 %v1412, %v1408
        %v1801 = vpack.c.bf16 %v1413, %v1409
        %v1802 = vpack.c.bf16 %v1414, %v1410
        %v1803 = vpack.c.bf16 %v1419, %v1415
        %v1804 = vpack.c.bf16 %v1420, %v1416
        %v1805 = vpack.c.bf16 %v1421, %v1417
        %v1806 = vpack.c.bf16 %v1422, %v1418
        %v1807 = vpack.c.bf16 %v1427, %v1423
        %v1808 = vpack.c.bf16 %v1428, %v1424
        %v1809 = vpack.c.bf16 %v1429, %v1425
        %v1810 = vpack.c.bf16 %v1430, %v1426
        %v1811 = vpack.c.bf16 %v1435, %v1431
        %v1812 = vpack.c.bf16 %v1436, %v1432
        %v1813 = vpack.c.bf16 %v1437, %v1433
        %v1814 = vpack.c.bf16 %v1438, %v1434
        %v1815 = vpack.c.bf16 %v1443, %v1439
        %v1816 = vpack.c.bf16 %v1444, %v1440
        %v1817 = vpack.c.bf16 %v1445, %v1441
        %v1818 = vpack.c.bf16 %v1446, %v1442
        %v1819 = vpack.c.bf16 %v1451, %v1447
        %v1820 = vpack.c.bf16 %v1452, %v1448
        %v1821 = vpack.c.bf16 %v1453, %v1449
        %v1822 = vpack.c.bf16 %v1454, %v1450
        %v1823 = vpack.c.bf16 %v1459, %v1455
        %v1824 = vpack.c.bf16 %v1460, %v1456
        %v1825 = vpack.c.bf16 %v1461, %v1457
        %v1826 = vpack.c.bf16 %v1462, %v1458
        %v1827 = vpack.c.bf16 %v1467, %v1463
        %v1828 = vpack.c.bf16 %v1468, %v1464
        %v1829 = vpack.c.bf16 %v1469, %v1465
        %v1830 = vpack.c.bf16 %v1470, %v1466
        %v1831 = vpack.c.bf16 %v1475, %v1471
        %v1832 = vpack.c.bf16 %v1476, %v1472
        %v1833 = vpack.c.bf16 %v1477, %v1473
        %v1834 = vpack.c.bf16 %v1478, %v1474
        %v1835 = vpack.c.bf16 %v1483, %v1479
        %v1836 = vpack.c.bf16 %v1484, %v1480
        %v1837 = vpack.c.bf16 %v1485, %v1481
        %v1838 = vpack.c.bf16 %v1486, %v1482
        %v1839 = vpack.c.bf16 %v1491, %v1487
        %v1840 = vpack.c.bf16 %v1492, %v1488
        %v1841 = vpack.c.bf16 %v1493, %v1489
        %v1842 = vpack.c.bf16 %v1494, %v1490
        %v1843 = vpack.c.bf16 %v1499, %v1495
        %v1844 = vpack.c.bf16 %v1500, %v1496
        %v1845 = vpack.c.bf16 %v1501, %v1497
        %v1846 = vpack.c.bf16 %v1502, %v1498
        %v1847 = vpack.c.bf16 %v1507, %v1503
        %v1848 = vpack.c.bf16 %v1508, %v1504
        %v1849 = vpack.c.bf16 %v1509, %v1505
        %v1850 = vpack.c.bf16 %v1510, %v1506
        %v1851 = vpack.c.bf16 %v1515, %v1511
        %v1852 = vpack.c.bf16 %v1516, %v1512
        %v1853 = vpack.c.bf16 %v1517, %v1513
        %v1854 = vpack.c.bf16 %v1518, %v1514
        %v1855 = vpack.c.bf16 %v1523, %v1519
        %v1856 = vpack.c.bf16 %v1524, %v1520
        %v1857 = vpack.c.bf16 %v1525, %v1521
        %v1858 = vpack.c.bf16 %v1526, %v1522
        %v1859 = vpack.c.bf16 %v1531, %v1527
        %v1860 = vpack.c.bf16 %v1532, %v1528
        %v1861 = vpack.c.bf16 %v1533, %v1529
        %v1862 = vpack.c.bf16 %v1534, %v1530
        %v1863 = vpack.c.bf16 %v1539, %v1535
        %v1864 = vpack.c.bf16 %v1540, %v1536
        %v1865 = vpack.c.bf16 %v1541, %v1537
        %v1866 = vpack.c.bf16 %v1542, %v1538
        %v1867 = vpack.c.bf16 %v1547, %v1543
        %v1868 = vpack.c.bf16 %v1548, %v1544
        %v1869 = vpack.c.bf16 %v1549, %v1545
        %v1870 = vpack.c.bf16 %v1550, %v1546
        %v1871 = vpack.c.bf16 %v1555, %v1551
        %v1872 = vpack.c.bf16 %v1556, %v1552
        %v1873 = vpack.c.bf16 %v1557, %v1553
        %v1874 = vpack.c.bf16 %v1558, %v1554
        %v1875 = vpack.c.bf16 %v1563, %v1559
        %v1876 = vpack.c.bf16 %v1564, %v1560
        %v1877 = vpack.c.bf16 %v1565, %v1561
        %v1878 = vpack.c.bf16 %v1566, %v1562
        %v1879 = vpack.c.bf16 %v1571, %v1567
        %v1880 = vpack.c.bf16 %v1572, %v1568
        %v1881 = vpack.c.bf16 %v1573, %v1569
        %v1882 = vpack.c.bf16 %v1574, %v1570
        %v1883 = vpack.c.bf16 %v1579, %v1575
        %v1884 = vpack.c.bf16 %v1580, %v1576
        %v1885 = vpack.c.bf16 %v1581, %v1577
        %v1886 = vpack.c.bf16 %v1582, %v1578
        %v1887 = vpack.c.bf16 %v1587, %v1583
        %v1888 = vpack.c.bf16 %v1588, %v1584
        %v1889 = vpack.c.bf16 %v1589, %v1585
        %v1890 = vpack.c.bf16 %v1590, %v1586
        %v1891 = vpack.c.bf16 %v1595, %v1591
        %v1892 = vpack.c.bf16 %v1596, %v1592
        %v1893 = vpack.c.bf16 %v1597, %v1593
        %v1894 = vpack.c.bf16 %v1598, %v1594
        %v1895 = vpack.c.bf16 %v1603, %v1599
        %v1896 = vpack.c.bf16 %v1604, %v1600
        %v1897 = vpack.c.bf16 %v1605, %v1601
        %v1898 = vpack.c.bf16 %v1606, %v1602
        %v1899 = vpack.c.bf16 %v1611, %v1607
        %v1900 = vpack.c.bf16 %v1612, %v1608
        %v1901 = vpack.c.bf16 %v1613, %v1609
        %v1902 = vpack.c.bf16 %v1614, %v1610
        %v1903 = vpack.c.bf16 %v1619, %v1615
        %v1904 = vpack.c.bf16 %v1620, %v1616
        %v1905 = vpack.c.bf16 %v1621, %v1617
        %v1906 = vpack.c.bf16 %v1622, %v1618
        %v1907 = vpack.c.bf16 %v1627, %v1623
        %v1908 = vpack.c.bf16 %v1628, %v1624
        %v1909 = vpack.c.bf16 %v1629, %v1625
        %v1910 = vpack.c.bf16 %v1630, %v1626
        %v1911 = vpack.c.bf16 %v1635, %v1631
        %v1912 = vpack.c.bf16 %v1636, %v1632
        %v1913 = vpack.c.bf16 %v1637, %v1633
        %v1914 = vpack.c.bf16 %v1638, %v1634
        %v1915 = vpack.c.bf16 %v1643, %v1639
        %v1916 = vpack.c.bf16 %v1644, %v1640
        %v1917 = vpack.c.bf16 %v1645, %v1641
        %v1918 = vpack.c.bf16 %v1646, %v1642
        %v1919 = vpack.c.bf16 %v1651, %v1647
        %v1920 = vpack.c.bf16 %v1652, %v1648
        %v1921 = vpack.c.bf16 %v1653, %v1649
        %v1922 = vpack.c.bf16 %v1654, %v1650
        %v1923 = vpack.c.bf16 %v1659, %v1655
        %v1924 = vpack.c.bf16 %v1660, %v1656
        %v1925 = vpack.c.bf16 %v1661, %v1657
        %v1926 = vpack.c.bf16 %v1662, %v1658
        %v1927 = vpack.c.bf16 %v1667, %v1663
        %v1928 = vpack.c.bf16 %v1668, %v1664
        %v1929 = vpack.c.bf16 %v1669, %v1665
        %v1930 = vpack.c.bf16 %v1670, %v1666
        %v1931 = vpack.c.bf16 %v1675, %v1671
        %v1932 = vpack.c.bf16 %v1676, %v1672
        %v1933 = vpack.c.bf16 %v1677, %v1673
        %v1934 = vpack.c.bf16 %v1678, %v1674
        %v1943 = vunpack.c.l.b16 %v519
        %v1944 = vunpack.c.h.b16 %v519
        %v1945 = vunpack.c.l.b16 %v520
        %v1946 = vunpack.c.h.b16 %v520
        %v1947 = vunpack.c.l.b16 %v521
        %v1948 = vunpack.c.h.b16 %v521
        %v1949 = vunpack.c.l.b16 %v522
        %v1950 = vunpack.c.h.b16 %v522
        %v1951 = vunpack.c.l.b16 %v523
        %v1952 = vunpack.c.h.b16 %v523
        %v1953 = vunpack.c.l.b16 %v524
        %v1954 = vunpack.c.h.b16 %v524
        %v1955 = vunpack.c.l.b16 %v525
        %v1956 = vunpack.c.h.b16 %v525
        %v1957 = vunpack.c.l.b16 %v526
        %v1958 = vunpack.c.h.b16 %v526
        %v1959 = vpack.c.b16 %v1951, %v1943
        %v1960 = vpack.c.b16 %v1952, %v1944
        %v1961 = vpack.c.b16 %v1953, %v1945
        %v1962 = vpack.c.b16 %v1954, %v1946
        %v1963 = vpack.c.b16 %v1955, %v1947
        %v1964 = vpack.c.b16 %v1956, %v1948
        %v1965 = vpack.c.b16 %v1957, %v1949
        %v1966 = vpack.c.b16 %v1958, %v1950
        %1975 = vmatpush.bf16.msra.mxu0 %v1707
        %1976 = vmatpush.bf16.msra.mxu0 %v1703
        %1977 = vmatpush.bf16.msra.mxu0 %v1699
        %1978 = vmatpush.bf16.msra.mxu0 %v1695
        %1979 = vmatpush.bf16.msra.mxu0 %v1691
        %1980 = vmatpush.bf16.msra.mxu0 %v1687
        %1981 = vmatpush.bf16.msra.mxu0 %v1683
        %1982 = vmatpush.bf16.msra.mxu0 %v1679
        %1983 = vmatmul.bf16.gmra.mxu0 %v1959
        %v1984 = vpop.f32.mrf.mxu0
        %v1985 = vadd.f32 0.0, %v1984
        %v1986 = vpop.f32.mrf.mxu0
        %v1987 = vadd.f32 0.0, %v1986
        %1988 = vdwg.mxu0
        %1989 = vmatpush.bf16.msra.mxu0 %v1739
        %1990 = vmatpush.bf16.msra.mxu0 %v1735
        %1991 = vmatpush.bf16.msra.mxu0 %v1731
        %1992 = vmatpush.bf16.msra.mxu0 %v1727
        %1993 = vmatpush.bf16.msra.mxu0 %v1723
        %1994 = vmatpush.bf16.msra.mxu0 %v1719
        %1995 = vmatpush.bf16.msra.mxu0 %v1715
        %1996 = vmatpush.bf16.msra.mxu0 %v1711
        %1997 = vmatmul.bf16.gmra.mxu0 %v1960
        %v1998 = vpop.f32.mrf.mxu0
        %v1999 = vadd.f32 %v1985, %v1998
        %v2000 = vpop.f32.mrf.mxu0
        %v2001 = vadd.f32 %v1987, %v2000
        %2002 = vdwg.mxu0
        %2003 = vmatpush.bf16.msra.mxu0 %v1771
        %2004 = vmatpush.bf16.msra.mxu0 %v1767
        %2005 = vmatpush.bf16.msra.mxu0 %v1763
        %2006 = vmatpush.bf16.msra.mxu0 %v1759
        %2007 = vmatpush.bf16.msra.mxu0 %v1755
        %2008 = vmatpush.bf16.msra.mxu0 %v1751
        %2009 = vmatpush.bf16.msra.mxu0 %v1747
        %2010 = vmatpush.bf16.msra.mxu0 %v1743
        %2011 = vmatmul.bf16.gmra.mxu0 %v1961
        %v2012 = vpop.f32.mrf.mxu0
        %v2013 = vadd.f32 %v1999, %v2012
        %v2014 = vpop.f32.mrf.mxu0
        %v2015 = vadd.f32 %v2001, %v2014
        %2016 = vdwg.mxu0
        %2017 = vmatpush.bf16.msra.mxu0 %v1803
        %2018 = vmatpush.bf16.msra.mxu0 %v1799
        %2019 = vmatpush.bf16.msra.mxu0 %v1795
        %2020 = vmatpush.bf16.msra.mxu0 %v1791
        %2021 = vmatpush.bf16.msra.mxu0 %v1787
        %2022 = vmatpush.bf16.msra.mxu0 %v1783
        %2023 = vmatpush.bf16.msra.mxu0 %v1779
        %2024 = vmatpush.bf16.msra.mxu0 %v1775
        %2025 = vmatmul.bf16.gmra.mxu0 %v1962
        %v2026 = vpop.f32.mrf.mxu0
        %v2027 = vadd.f32 %v2013, %v2026
        %v2028 = vpop.f32.mrf.mxu0
        %v2029 = vadd.f32 %v2015, %v2028
        %2030 = vdwg.mxu0
        %2031 = vmatpush.bf16.msra.mxu0 %v1835
        %2032 = vmatpush.bf16.msra.mxu0 %v1831
        %2033 = vmatpush.bf16.msra.mxu0 %v1827
        %2034 = vmatpush.bf16.msra.mxu0 %v1823
        %2035 = vmatpush.bf16.msra.mxu0 %v1819
        %2036 = vmatpush.bf16.msra.mxu0 %v1815
        %2037 = vmatpush.bf16.msra.mxu0 %v1811
        %2038 = vmatpush.bf16.msra.mxu0 %v1807
        %2039 = vmatmul.bf16.gmra.mxu0 %v1963
        %v2040 = vpop.f32.mrf.mxu0
        %v2041 = vadd.f32 %v2027, %v2040
        %v2042 = vpop.f32.mrf.mxu0
        %v2043 = vadd.f32 %v2029, %v2042
        %2044 = vdwg.mxu0
        %2045 = vmatpush.bf16.msra.mxu0 %v1867
        %2046 = vmatpush.bf16.msra.mxu0 %v1863
        %2047 = vmatpush.bf16.msra.mxu0 %v1859
        %2048 = vmatpush.bf16.msra.mxu0 %v1855
        %2049 = vmatpush.bf16.msra.mxu0 %v1851
        %2050 = vmatpush.bf16.msra.mxu0 %v1847
        %2051 = vmatpush.bf16.msra.mxu0 %v1843
        %2052 = vmatpush.bf16.msra.mxu0 %v1839
        %2053 = vmatmul.bf16.gmra.mxu0 %v1964
        %v2054 = vpop.f32.mrf.mxu0
        %v2055 = vadd.f32 %v2041, %v2054
        %v2056 = vpop.f32.mrf.mxu0
        %v2057 = vadd.f32 %v2043, %v2056
        %2058 = vdwg.mxu0
        %2059 = vmatpush.bf16.msra.mxu0 %v1899
        %2060 = vmatpush.bf16.msra.mxu0 %v1895
        %2061 = vmatpush.bf16.msra.mxu0 %v1891
        %2062 = vmatpush.bf16.msra.mxu0 %v1887
        %2063 = vmatpush.bf16.msra.mxu0 %v1883
        %2064 = vmatpush.bf16.msra.mxu0 %v1879
        %2065 = vmatpush.bf16.msra.mxu0 %v1875
        %2066 = vmatpush.bf16.msra.mxu0 %v1871
        %2067 = vmatmul.bf16.gmra.mxu0 %v1965
        %v2068 = vpop.f32.mrf.mxu0
        %v2069 = vadd.f32 %v2055, %v2068
        %v2070 = vpop.f32.mrf.mxu0
        %v2071 = vadd.f32 %v2057, %v2070
        %2072 = vdwg.mxu0
        %2073 = vmatpush.bf16.msra.mxu0 %v1931
        %2074 = vmatpush.bf16.msra.mxu0 %v1927
        %2075 = vmatpush.bf16.msra.mxu0 %v1923
        %2076 = vmatpush.bf16.msra.mxu0 %v1919
        %2077 = vmatpush.bf16.msra.mxu0 %v1915
        %2078 = vmatpush.bf16.msra.mxu0 %v1911
        %2079 = vmatpush.bf16.msra.mxu0 %v1907
        %2080 = vmatpush.bf16.msra.mxu0 %v1903
        %2081 = vmatmul.bf16.gmra.mxu0 %v1966
        %v2082 = vpop.f32.mrf.mxu0
        %v2083 = vadd.f32 %v2069, %v2082
        %v2084 = vpop.f32.mrf.mxu0
        %v2085 = vadd.f32 %v2071, %v2084
        %2086 = vdwg.mxu0
        %2087 = vmatpush.bf16.msra.mxu0 %v1708
        %2088 = vmatpush.bf16.msra.mxu0 %v1704
        %2089 = vmatpush.bf16.msra.mxu0 %v1700
        %2090 = vmatpush.bf16.msra.mxu0 %v1696
        %2091 = vmatpush.bf16.msra.mxu0 %v1692
        %2092 = vmatpush.bf16.msra.mxu0 %v1688
        %2093 = vmatpush.bf16.msra.mxu0 %v1684
        %2094 = vmatpush.bf16.msra.mxu0 %v1680
        %2095 = vmatmul.bf16.gmra.mxu0 %v1959
        %v2096 = vpop.f32.mrf.mxu0
        %v2097 = vadd.f32 0.0, %v2096
        %v2098 = vpop.f32.mrf.mxu0
        %v2099 = vadd.f32 0.0, %v2098
        %2100 = vdwg.mxu0
        %2101 = vmatpush.bf16.msra.mxu0 %v1740
        %2102 = vmatpush.bf16.msra.mxu0 %v1736
        %2103 = vmatpush.bf16.msra.mxu0 %v1732
        %2104 = vmatpush.bf16.msra.mxu0 %v1728
        %2105 = vmatpush.bf16.msra.mxu0 %v1724
        %2106 = vmatpush.bf16.msra.mxu0 %v1720
        %2107 = vmatpush.bf16.msra.mxu0 %v1716
        %2108 = vmatpush.bf16.msra.mxu0 %v1712
        %2109 = vmatmul.bf16.gmra.mxu0 %v1960
        %v2110 = vpop.f32.mrf.mxu0
        %v2111 = vadd.f32 %v2097, %v2110
        %v2112 = vpop.f32.mrf.mxu0
        %v2113 = vadd.f32 %v2099, %v2112
        %2114 = vdwg.mxu0
        %2115 = vmatpush.bf16.msra.mxu0 %v1772
        %2116 = vmatpush.bf16.msra.mxu0 %v1768
        %2117 = vmatpush.bf16.msra.mxu0 %v1764
        %2118 = vmatpush.bf16.msra.mxu0 %v1760
        %2119 = vmatpush.bf16.msra.mxu0 %v1756
        %2120 = vmatpush.bf16.msra.mxu0 %v1752
        %2121 = vmatpush.bf16.msra.mxu0 %v1748
        %2122 = vmatpush.bf16.msra.mxu0 %v1744
        %2123 = vmatmul.bf16.gmra.mxu0 %v1961
        %v2124 = vpop.f32.mrf.mxu0
        %v2125 = vadd.f32 %v2111, %v2124
        %v2126 = vpop.f32.mrf.mxu0
        %v2127 = vadd.f32 %v2113, %v2126
        %2128 = vdwg.mxu0
        %2129 = vmatpush.bf16.msra.mxu0 %v1804
        %2130 = vmatpush.bf16.msra.mxu0 %v1800
        %2131 = vmatpush.bf16.msra.mxu0 %v1796
        %2132 = vmatpush.bf16.msra.mxu0 %v1792
        %2133 = vmatpush.bf16.msra.mxu0 %v1788
        %2134 = vmatpush.bf16.msra.mxu0 %v1784
        %2135 = vmatpush.bf16.msra.mxu0 %v1780
        %2136 = vmatpush.bf16.msra.mxu0 %v1776
        %2137 = vmatmul.bf16.gmra.mxu0 %v1962
        %v2138 = vpop.f32.mrf.mxu0
        %v2139 = vadd.f32 %v2125, %v2138
        %v2140 = vpop.f32.mrf.mxu0
        %v2141 = vadd.f32 %v2127, %v2140
        %2142 = vdwg.mxu0
        %2143 = vmatpush.bf16.msra.mxu0 %v1836
        %2144 = vmatpush.bf16.msra.mxu0 %v1832
        %2145 = vmatpush.bf16.msra.mxu0 %v1828
        %2146 = vmatpush.bf16.msra.mxu0 %v1824
        %2147 = vmatpush.bf16.msra.mxu0 %v1820
        %2148 = vmatpush.bf16.msra.mxu0 %v1816
        %2149 = vmatpush.bf16.msra.mxu0 %v1812
        %2150 = vmatpush.bf16.msra.mxu0 %v1808
        %2151 = vmatmul.bf16.gmra.mxu0 %v1963
        %v2152 = vpop.f32.mrf.mxu0
        %v2153 = vadd.f32 %v2139, %v2152
        %v2154 = vpop.f32.mrf.mxu0
        %v2155 = vadd.f32 %v2141, %v2154
        %2156 = vdwg.mxu0
        %2157 = vmatpush.bf16.msra.mxu0 %v1868
        %2158 = vmatpush.bf16.msra.mxu0 %v1864
        %2159 = vmatpush.bf16.msra.mxu0 %v1860
        %2160 = vmatpush.bf16.msra.mxu0 %v1856
        %2161 = vmatpush.bf16.msra.mxu0 %v1852
        %2162 = vmatpush.bf16.msra.mxu0 %v1848
        %2163 = vmatpush.bf16.msra.mxu0 %v1844
        %2164 = vmatpush.bf16.msra.mxu0 %v1840
        %2165 = vmatmul.bf16.gmra.mxu0 %v1964
        %v2166 = vpop.f32.mrf.mxu0
        %v2167 = vadd.f32 %v2153, %v2166
        %v2168 = vpop.f32.mrf.mxu0
        %v2169 = vadd.f32 %v2155, %v2168
        %2170 = vdwg.mxu0
        %2171 = vmatpush.bf16.msra.mxu0 %v1900
        %2172 = vmatpush.bf16.msra.mxu0 %v1896
        %2173 = vmatpush.bf16.msra.mxu0 %v1892
        %2174 = vmatpush.bf16.msra.mxu0 %v1888
        %2175 = vmatpush.bf16.msra.mxu0 %v1884
        %2176 = vmatpush.bf16.msra.mxu0 %v1880
        %2177 = vmatpush.bf16.msra.mxu0 %v1876
        %2178 = vmatpush.bf16.msra.mxu0 %v1872
        %2179 = vmatmul.bf16.gmra.mxu0 %v1965
        %v2180 = vpop.f32.mrf.mxu0
        %v2181 = vadd.f32 %v2167, %v2180
        %v2182 = vpop.f32.mrf.mxu0
        %v2183 = vadd.f32 %v2169, %v2182
        %2184 = vdwg.mxu0
        %2185 = vmatpush.bf16.msra.mxu0 %v1932
        %2186 = vmatpush.bf16.msra.mxu0 %v1928
        %2187 = vmatpush.bf16.msra.mxu0 %v1924
        %2188 = vmatpush.bf16.msra.mxu0 %v1920
        %2189 = vmatpush.bf16.msra.mxu0 %v1916
        %2190 = vmatpush.bf16.msra.mxu0 %v1912
        %2191 = vmatpush.bf16.msra.mxu0 %v1908
        %2192 = vmatpush.bf16.msra.mxu0 %v1904
        %2193 = vmatmul.bf16.gmra.mxu0 %v1966
        %v2194 = vpop.f32.mrf.mxu0
        %v2195 = vadd.f32 %v2181, %v2194
        %v2196 = vpop.f32.mrf.mxu0
        %v2197 = vadd.f32 %v2183, %v2196
        %2198 = vdwg.mxu0
        %2199 = vmatpush.bf16.msra.mxu0 %v1709
        %2200 = vmatpush.bf16.msra.mxu0 %v1705
        %2201 = vmatpush.bf16.msra.mxu0 %v1701
        %2202 = vmatpush.bf16.msra.mxu0 %v1697
        %2203 = vmatpush.bf16.msra.mxu0 %v1693
        %2204 = vmatpush.bf16.msra.mxu0 %v1689
        %2205 = vmatpush.bf16.msra.mxu0 %v1685
        %2206 = vmatpush.bf16.msra.mxu0 %v1681
        %2207 = vmatmul.bf16.gmra.mxu0 %v1959
        %v2208 = vpop.f32.mrf.mxu0
        %v2209 = vadd.f32 0.0, %v2208
        %v2210 = vpop.f32.mrf.mxu0
        %v2211 = vadd.f32 0.0, %v2210
        %2212 = vdwg.mxu0
        %2213 = vmatpush.bf16.msra.mxu0 %v1741
        %2214 = vmatpush.bf16.msra.mxu0 %v1737
        %2215 = vmatpush.bf16.msra.mxu0 %v1733
        %2216 = vmatpush.bf16.msra.mxu0 %v1729
        %2217 = vmatpush.bf16.msra.mxu0 %v1725
        %2218 = vmatpush.bf16.msra.mxu0 %v1721
        %2219 = vmatpush.bf16.msra.mxu0 %v1717
        %2220 = vmatpush.bf16.msra.mxu0 %v1713
        %2221 = vmatmul.bf16.gmra.mxu0 %v1960
        %v2222 = vpop.f32.mrf.mxu0
        %v2223 = vadd.f32 %v2209, %v2222
        %v2224 = vpop.f32.mrf.mxu0
        %v2225 = vadd.f32 %v2211, %v2224
        %2226 = vdwg.mxu0
        %2227 = vmatpush.bf16.msra.mxu0 %v1773
        %2228 = vmatpush.bf16.msra.mxu0 %v1769
        %2229 = vmatpush.bf16.msra.mxu0 %v1765
        %2230 = vmatpush.bf16.msra.mxu0 %v1761
        %2231 = vmatpush.bf16.msra.mxu0 %v1757
        %2232 = vmatpush.bf16.msra.mxu0 %v1753
        %2233 = vmatpush.bf16.msra.mxu0 %v1749
        %2234 = vmatpush.bf16.msra.mxu0 %v1745
        %2235 = vmatmul.bf16.gmra.mxu0 %v1961
        %v2236 = vpop.f32.mrf.mxu0
        %v2237 = vadd.f32 %v2223, %v2236
        %v2238 = vpop.f32.mrf.mxu0
        %v2239 = vadd.f32 %v2225, %v2238
        %2240 = vdwg.mxu0
        %2241 = vmatpush.bf16.msra.mxu0 %v1805
        %2242 = vmatpush.bf16.msra.mxu0 %v1801
        %2243 = vmatpush.bf16.msra.mxu0 %v1797
        %2244 = vmatpush.bf16.msra.mxu0 %v1793
        %2245 = vmatpush.bf16.msra.mxu0 %v1789
        %2246 = vmatpush.bf16.msra.mxu0 %v1785
        %2247 = vmatpush.bf16.msra.mxu0 %v1781
        %2248 = vmatpush.bf16.msra.mxu0 %v1777
        %2249 = vmatmul.bf16.gmra.mxu0 %v1962
        %v2250 = vpop.f32.mrf.mxu0
        %v2251 = vadd.f32 %v2237, %v2250
        %v2252 = vpop.f32.mrf.mxu0
        %v2253 = vadd.f32 %v2239, %v2252
        %2254 = vdwg.mxu0
        %2255 = vmatpush.bf16.msra.mxu0 %v1837
        %2256 = vmatpush.bf16.msra.mxu0 %v1833
        %2257 = vmatpush.bf16.msra.mxu0 %v1829
        %2258 = vmatpush.bf16.msra.mxu0 %v1825
        %2259 = vmatpush.bf16.msra.mxu0 %v1821
        %2260 = vmatpush.bf16.msra.mxu0 %v1817
        %2261 = vmatpush.bf16.msra.mxu0 %v1813
        %2262 = vmatpush.bf16.msra.mxu0 %v1809
        %2263 = vmatmul.bf16.gmra.mxu0 %v1963
        %v2264 = vpop.f32.mrf.mxu0
        %v2265 = vadd.f32 %v2251, %v2264
        %v2266 = vpop.f32.mrf.mxu0
        %v2267 = vadd.f32 %v2253, %v2266
        %2268 = vdwg.mxu0
        %2269 = vmatpush.bf16.msra.mxu0 %v1869
        %2270 = vmatpush.bf16.msra.mxu0 %v1865
        %2271 = vmatpush.bf16.msra.mxu0 %v1861
        %2272 = vmatpush.bf16.msra.mxu0 %v1857
        %2273 = vmatpush.bf16.msra.mxu0 %v1853
        %2274 = vmatpush.bf16.msra.mxu0 %v1849
        %2275 = vmatpush.bf16.msra.mxu0 %v1845
        %2276 = vmatpush.bf16.msra.mxu0 %v1841
        %2277 = vmatmul.bf16.gmra.mxu0 %v1964
        %v2278 = vpop.f32.mrf.mxu0
        %v2279 = vadd.f32 %v2265, %v2278
        %v2280 = vpop.f32.mrf.mxu0
        %v2281 = vadd.f32 %v2267, %v2280
        %2282 = vdwg.mxu0
        %2283 = vmatpush.bf16.msra.mxu0 %v1901
        %2284 = vmatpush.bf16.msra.mxu0 %v1897
        %2285 = vmatpush.bf16.msra.mxu0 %v1893
        %2286 = vmatpush.bf16.msra.mxu0 %v1889
        %2287 = vmatpush.bf16.msra.mxu0 %v1885
        %2288 = vmatpush.bf16.msra.mxu0 %v1881
        %2289 = vmatpush.bf16.msra.mxu0 %v1877
        %2290 = vmatpush.bf16.msra.mxu0 %v1873
        %2291 = vmatmul.bf16.gmra.mxu0 %v1965
        %v2292 = vpop.f32.mrf.mxu0
        %v2293 = vadd.f32 %v2279, %v2292
        %v2294 = vpop.f32.mrf.mxu0
        %v2295 = vadd.f32 %v2281, %v2294
        %2296 = vdwg.mxu0
        %2297 = vmatpush.bf16.msra.mxu0 %v1933
        %2298 = vmatpush.bf16.msra.mxu0 %v1929
        %2299 = vmatpush.bf16.msra.mxu0 %v1925
        %2300 = vmatpush.bf16.msra.mxu0 %v1921
        %2301 = vmatpush.bf16.msra.mxu0 %v1917
        %2302 = vmatpush.bf16.msra.mxu0 %v1913
        %2303 = vmatpush.bf16.msra.mxu0 %v1909
        %2304 = vmatpush.bf16.msra.mxu0 %v1905
        %2305 = vmatmul.bf16.gmra.mxu0 %v1966
        %v2306 = vpop.f32.mrf.mxu0
        %v2307 = vadd.f32 %v2293, %v2306
        %v2308 = vpop.f32.mrf.mxu0
        %v2309 = vadd.f32 %v2295, %v2308
        %2310 = vdwg.mxu0
        %2311 = vmatpush.bf16.msra.mxu0 %v1710
        %2312 = vmatpush.bf16.msra.mxu0 %v1706
        %2313 = vmatpush.bf16.msra.mxu0 %v1702
        %2314 = vmatpush.bf16.msra.mxu0 %v1698
        %2315 = vmatpush.bf16.msra.mxu0 %v1694
        %2316 = vmatpush.bf16.msra.mxu0 %v1690
        %2317 = vmatpush.bf16.msra.mxu0 %v1686
        %2318 = vmatpush.bf16.msra.mxu0 %v1682
        %2319 = vmatmul.bf16.gmra.mxu0 %v1959
        %v2320 = vpop.f32.mrf.mxu0
        %v2321 = vadd.f32 0.0, %v2320
        %v2322 = vpop.f32.mrf.mxu0
        %v2323 = vadd.f32 0.0, %v2322
        %2324 = vdwg.mxu0
        %2325 = vmatpush.bf16.msra.mxu0 %v1742
        %2326 = vmatpush.bf16.msra.mxu0 %v1738
        %2327 = vmatpush.bf16.msra.mxu0 %v1734
        %2328 = vmatpush.bf16.msra.mxu0 %v1730
        %2329 = vmatpush.bf16.msra.mxu0 %v1726
        %2330 = vmatpush.bf16.msra.mxu0 %v1722
        %2331 = vmatpush.bf16.msra.mxu0 %v1718
        %2332 = vmatpush.bf16.msra.mxu0 %v1714
        %2333 = vmatmul.bf16.gmra.mxu0 %v1960
        %v2334 = vpop.f32.mrf.mxu0
        %v2335 = vadd.f32 %v2321, %v2334
        %v2336 = vpop.f32.mrf.mxu0
        %v2337 = vadd.f32 %v2323, %v2336
        %2338 = vdwg.mxu0
        %2339 = vmatpush.bf16.msra.mxu0 %v1774
        %2340 = vmatpush.bf16.msra.mxu0 %v1770
        %2341 = vmatpush.bf16.msra.mxu0 %v1766
        %2342 = vmatpush.bf16.msra.mxu0 %v1762
        %2343 = vmatpush.bf16.msra.mxu0 %v1758
        %2344 = vmatpush.bf16.msra.mxu0 %v1754
        %2345 = vmatpush.bf16.msra.mxu0 %v1750
        %2346 = vmatpush.bf16.msra.mxu0 %v1746
        %2347 = vmatmul.bf16.gmra.mxu0 %v1961
        %v2348 = vpop.f32.mrf.mxu0
        %v2349 = vadd.f32 %v2335, %v2348
        %v2350 = vpop.f32.mrf.mxu0
        %v2351 = vadd.f32 %v2337, %v2350
        %2352 = vdwg.mxu0
        %2353 = vmatpush.bf16.msra.mxu0 %v1806
        %2354 = vmatpush.bf16.msra.mxu0 %v1802
        %2355 = vmatpush.bf16.msra.mxu0 %v1798
        %2356 = vmatpush.bf16.msra.mxu0 %v1794
        %2357 = vmatpush.bf16.msra.mxu0 %v1790
        %2358 = vmatpush.bf16.msra.mxu0 %v1786
        %2359 = vmatpush.bf16.msra.mxu0 %v1782
        %2360 = vmatpush.bf16.msra.mxu0 %v1778
        %2361 = vmatmul.bf16.gmra.mxu0 %v1962
        %v2362 = vpop.f32.mrf.mxu0
        %v2363 = vadd.f32 %v2349, %v2362
        %v2364 = vpop.f32.mrf.mxu0
        %v2365 = vadd.f32 %v2351, %v2364
        %2366 = vdwg.mxu0
        %2367 = vmatpush.bf16.msra.mxu0 %v1838
        %2368 = vmatpush.bf16.msra.mxu0 %v1834
        %2369 = vmatpush.bf16.msra.mxu0 %v1830
        %2370 = vmatpush.bf16.msra.mxu0 %v1826
        %2371 = vmatpush.bf16.msra.mxu0 %v1822
        %2372 = vmatpush.bf16.msra.mxu0 %v1818
        %2373 = vmatpush.bf16.msra.mxu0 %v1814
        %2374 = vmatpush.bf16.msra.mxu0 %v1810
        %2375 = vmatmul.bf16.gmra.mxu0 %v1963
        %v2376 = vpop.f32.mrf.mxu0
        %v2377 = vadd.f32 %v2363, %v2376
        %v2378 = vpop.f32.mrf.mxu0
        %v2379 = vadd.f32 %v2365, %v2378
        %2380 = vdwg.mxu0
        %2381 = vmatpush.bf16.msra.mxu0 %v1870
        %2382 = vmatpush.bf16.msra.mxu0 %v1866
        %2383 = vmatpush.bf16.msra.mxu0 %v1862
        %2384 = vmatpush.bf16.msra.mxu0 %v1858
        %2385 = vmatpush.bf16.msra.mxu0 %v1854
        %2386 = vmatpush.bf16.msra.mxu0 %v1850
        %2387 = vmatpush.bf16.msra.mxu0 %v1846
        %2388 = vmatpush.bf16.msra.mxu0 %v1842
        %2389 = vmatmul.bf16.gmra.mxu0 %v1964
        %v2390 = vpop.f32.mrf.mxu0
        %v2391 = vadd.f32 %v2377, %v2390
        %v2392 = vpop.f32.mrf.mxu0
        %v2393 = vadd.f32 %v2379, %v2392
        %2394 = vdwg.mxu0
        %2395 = vmatpush.bf16.msra.mxu0 %v1902
        %2396 = vmatpush.bf16.msra.mxu0 %v1898
        %2397 = vmatpush.bf16.msra.mxu0 %v1894
        %2398 = vmatpush.bf16.msra.mxu0 %v1890
        %2399 = vmatpush.bf16.msra.mxu0 %v1886
        %2400 = vmatpush.bf16.msra.mxu0 %v1882
        %2401 = vmatpush.bf16.msra.mxu0 %v1878
        %2402 = vmatpush.bf16.msra.mxu0 %v1874
        %2403 = vmatmul.bf16.gmra.mxu0 %v1965
        %v2404 = vpop.f32.mrf.mxu0
        %v2405 = vadd.f32 %v2391, %v2404
        %v2406 = vpop.f32.mrf.mxu0
        %v2407 = vadd.f32 %v2393, %v2406
        %2408 = vdwg.mxu0
        %2409 = vmatpush.bf16.msra.mxu0 %v1934
        %2410 = vmatpush.bf16.msra.mxu0 %v1930
        %2411 = vmatpush.bf16.msra.mxu0 %v1926
        %2412 = vmatpush.bf16.msra.mxu0 %v1922
        %2413 = vmatpush.bf16.msra.mxu0 %v1918
        %2414 = vmatpush.bf16.msra.mxu0 %v1914
        %2415 = vmatpush.bf16.msra.mxu0 %v1910
        %2416 = vmatpush.bf16.msra.mxu0 %v1906
        %2417 = vmatmul.bf16.gmra.mxu0 %v1966
        %v2418 = vpop.f32.mrf.mxu0
        %v2419 = vadd.f32 %v2405, %v2418
        %v2420 = vpop.f32.mrf.mxu0
        %v2421 = vadd.f32 %v2407, %v2420
        %2422 = vdwg.mxu0
        %v2423 = vadd.f32 %v511, %v2083
        %v2424 = vadd.f32 %v512, %v2195
        %v2425 = vadd.f32 %v513, %v2307
        %v2426 = vadd.f32 %v514, %v2419
        %v2427 = vadd.f32 %v515, %v2085
        %v2428 = vadd.f32 %v516, %v2197
        %v2429 = vadd.f32 %v517, %v2309
        %v2430 = vadd.f32 %v518, %v2421
        %2431 = vst [vmem:[#allocation2] sm:$0xff] %v2423
        %2432 = vst [vmem:[#allocation2 + $0x8] sm:$0xff] %v2424
        %2433 = vst [vmem:[#allocation2 + $0x10] sm:$0xff] %v2425
        %2434 = vst [vmem:[#allocation2 + $0x18] sm:$0xff] %v2426
        %2435 = vst [vmem:[#allocation2 + $0x20] sm:$0xff] %v2427
        %2436 = vst [vmem:[#allocation2 + $0x28] sm:$0xff] %v2428
        %2437 = vst [vmem:[#allocation2 + $0x30] sm:$0xff] %v2429
        %2438 = vst [vmem:[#allocation2 + $0x38] sm:$0xff] %v2430
        %p2439 = scmp.eq.s32.totalorder %s35, 1
        // Predicated region
        $region89: #{tpu_custom_call.1} parent=59 // pred_check
          %p2440 = pneg %p2439
        $region90: #{tpu_custom_call.1} parent=59 // pred_check_branch
          %2442 = sbr.rel (%p2440) target = $region92
        $region91: #{tpu_custom_call.1} parent=59 // pred_region
          %v2443 = vld [vmem:[#allocation2] sm:$0xff]
          %v2444 = vld [vmem:[#allocation2 + $0x8] sm:$0xff]
          %v2445 = vld [vmem:[#allocation2 + $0x10] sm:$0xff]
          %v2446 = vld [vmem:[#allocation2 + $0x18] sm:$0xff]
          %v2447 = vld [vmem:[#allocation2 + $0x20] sm:$0xff]
          %v2448 = vld [vmem:[#allocation2 + $0x28] sm:$0xff]
          %v2449 = vld [vmem:[#allocation2 + $0x30] sm:$0xff]
          %v2450 = vld [vmem:[#allocation2 + $0x38] sm:$0xff]
          %v2451 = vld [vmem:[#allocation8] sm:$0xf]
          %v2453 = vperm.slane %v2451, 0
          %v2454 = vperm.slane %v2451, 1
          %v2455 = vperm.slane %v2451, 2
          %v2456 = vperm.slane %v2451, 3
          %v2461 = vmul.f32 %v2443, %v2453
          %v2462 = vmul.f32 %v2444, %v2454
          %v2463 = vmul.f32 %v2445, %v2455
          %v2464 = vmul.f32 %v2446, %v2456
          %v2465 = vmul.f32 %v2447, %v2453
          %v2466 = vmul.f32 %v2448, %v2454
          %v2467 = vmul.f32 %v2449, %v2455
          %v2468 = vmul.f32 %v2450, %v2456
          %v2469 = vld [vmem:[#allocation9] sm:$0xf]
          %v2471 = vperm.slane %v2469, 0
          %v2472 = vperm.slane %v2469, 1
          %v2473 = vperm.slane %v2469, 2
          %v2474 = vperm.slane %v2469, 3
          %v2479 = vadd.f32 %v2461, %v2471
          %v2480 = vadd.f32 %v2462, %v2472
          %v2481 = vadd.f32 %v2463, %v2473
          %v2482 = vadd.f32 %v2464, %v2474
          %v2483 = vadd.f32 %v2465, %v2471
          %v2484 = vadd.f32 %v2466, %v2472
          %v2485 = vadd.f32 %v2467, %v2473
          %v2486 = vadd.f32 %v2468, %v2474
          %v2487 = vmax.f32 %v2479, 0.0
          %v2488 = vmax.f32 %v2480, 0.0
          %v2489 = vmax.f32 %v2481, 0.0
          %v2490 = vmax.f32 %v2482, 0.0
          %v2491 = vmax.f32 %v2483, 0.0
          %v2492 = vmax.f32 %v2484, 0.0
          %v2493 = vmax.f32 %v2485, 0.0
          %v2494 = vmax.f32 %v2486, 0.0
          %v2495 = vpack.c.bf16 %v2491, %v2487
          %v2496 = vpack.c.bf16 %v2492, %v2488
          %v2497 = vpack.c.bf16 %v2493, %v2489
          %v2498 = vpack.c.bf16 %v2494, %v2490
          %v2499 = vld [vmem:[#allocation11] sm:$0xff]
          %v2500 = vld [vmem:[#allocation11 + $0x8] sm:$0xff]
          %v2501 = vld [vmem:[#allocation11 + $0x10] sm:$0xff]
          %v2502 = vld [vmem:[#allocation11 + $0x18] sm:$0xff]
          %v2503 = vld [vmem:[#allocation11 + $0x20] sm:$0xff]
          %v2504 = vld [vmem:[#allocation11 + $0x28] sm:$0xff]
          %v2505 = vld [vmem:[#allocation11 + $0x30] sm:$0xff]
          %v2506 = vld [vmem:[#allocation11 + $0x38] sm:$0xff]
          %v2507 = vld [vmem:[#allocation11 + $0x40] sm:$0xff]
          %v2508 = vld [vmem:[#allocation11 + $0x48] sm:$0xff]
          %v2509 = vld [vmem:[#allocation11 + $0x50] sm:$0xff]
          %v2510 = vld [vmem:[#allocation11 + $0x58] sm:$0xff]
          %v2511 = vld [vmem:[#allocation11 + $0x60] sm:$0xff]
          %v2512 = vld [vmem:[#allocation11 + $0x68] sm:$0xff]
          %v2513 = vld [vmem:[#allocation11 + $0x70] sm:$0xff]
          %v2514 = vld [vmem:[#allocation11 + $0x78] sm:$0xff]
          %v2515 = vld [vmem:[#allocation11 + $0x80] sm:$0xff]
          %v2516 = vld [vmem:[#allocation11 + $0x88] sm:$0xff]
          %v2517 = vld [vmem:[#allocation11 + $0x90] sm:$0xff]
          %v2518 = vld [vmem:[#allocation11 + $0x98] sm:$0xff]
          %v2519 = vld [vmem:[#allocation11 + $0xa0] sm:$0xff]
          %v2520 = vld [vmem:[#allocation11 + $0xa8] sm:$0xff]
          %v2521 = vld [vmem:[#allocation11 + $0xb0] sm:$0xff]
          %v2522 = vld [vmem:[#allocation11 + $0xb8] sm:$0xff]
          %v2523 = vld [vmem:[#allocation11 + $0xc0] sm:$0xff]
          %v2524 = vld [vmem:[#allocation11 + $0xc8] sm:$0xff]
          %v2525 = vld [vmem:[#allocation11 + $0xd0] sm:$0xff]
          %v2526 = vld [vmem:[#allocation11 + $0xd8] sm:$0xff]
          %v2527 = vld [vmem:[#allocation11 + $0xe0] sm:$0xff]
          %v2528 = vld [vmem:[#allocation11 + $0xe8] sm:$0xff]
          %v2529 = vld [vmem:[#allocation11 + $0xf0] sm:$0xff]
          %v2530 = vld [vmem:[#allocation11 + $0xf8] sm:$0xff]
          %v2531 = vunpack.c.0.s8 %v2499
          %v2532 = vunpack.c.0.s8 %v2500
          %v2533 = vunpack.c.1.s8 %v2499
          %v2534 = vunpack.c.1.s8 %v2500
          %v2535 = vunpack.c.2.s8 %v2499
          %v2536 = vunpack.c.2.s8 %v2500
          %v2537 = vunpack.c.3.s8 %v2499
          %v2538 = vunpack.c.3.s8 %v2500
          %v2539 = vunpack.c.0.s8 %v2501
          %v2540 = vunpack.c.0.s8 %v2502
          %v2541 = vunpack.c.1.s8 %v2501
          %v2542 = vunpack.c.1.s8 %v2502
          %v2543 = vunpack.c.2.s8 %v2501
          %v2544 = vunpack.c.2.s8 %v2502
          %v2545 = vunpack.c.3.s8 %v2501
          %v2546 = vunpack.c.3.s8 %v2502
          %v2547 = vunpack.c.0.s8 %v2503
          %v2548 = vunpack.c.0.s8 %v2504
          %v2549 = vunpack.c.1.s8 %v2503
          %v2550 = vunpack.c.1.s8 %v2504
          %v2551 = vunpack.c.2.s8 %v2503
          %v2552 = vunpack.c.2.s8 %v2504
          %v2553 = vunpack.c.3.s8 %v2503
          %v2554 = vunpack.c.3.s8 %v2504
          %v2555 = vunpack.c.0.s8 %v2505
          %v2556 = vunpack.c.0.s8 %v2506
          %v2557 = vunpack.c.1.s8 %v2505
          %v2558 = vunpack.c.1.s8 %v2506
          %v2559 = vunpack.c.2.s8 %v2505
          %v2560 = vunpack.c.2.s8 %v2506
          %v2561 = vunpack.c.3.s8 %v2505
          %v2562 = vunpack.c.3.s8 %v2506
          %v2563 = vunpack.c.0.s8 %v2507
          %v2564 = vunpack.c.0.s8 %v2508
          %v2565 = vunpack.c.1.s8 %v2507
          %v2566 = vunpack.c.1.s8 %v2508
          %v2567 = vunpack.c.2.s8 %v2507
          %v2568 = vunpack.c.2.s8 %v2508
          %v2569 = vunpack.c.3.s8 %v2507
          %v2570 = vunpack.c.3.s8 %v2508
          %v2571 = vunpack.c.0.s8 %v2509
          %v2572 = vunpack.c.0.s8 %v2510
          %v2573 = vunpack.c.1.s8 %v2509
          %v2574 = vunpack.c.1.s8 %v2510
          %v2575 = vunpack.c.2.s8 %v2509
          %v2576 = vunpack.c.2.s8 %v2510
          %v2577 = vunpack.c.3.s8 %v2509
          %v2578 = vunpack.c.3.s8 %v2510
          %v2579 = vunpack.c.0.s8 %v2511
          %v2580 = vunpack.c.0.s8 %v2512
          %v2581 = vunpack.c.1.s8 %v2511
          %v2582 = vunpack.c.1.s8 %v2512
          %v2583 = vunpack.c.2.s8 %v2511
          %v2584 = vunpack.c.2.s8 %v2512
          %v2585 = vunpack.c.3.s8 %v2511
          %v2586 = vunpack.c.3.s8 %v2512
          %v2587 = vunpack.c.0.s8 %v2513
          %v2588 = vunpack.c.0.s8 %v2514
          %v2589 = vunpack.c.1.s8 %v2513
          %v2590 = vunpack.c.1.s8 %v2514
          %v2591 = vunpack.c.2.s8 %v2513
          %v2592 = vunpack.c.2.s8 %v2514
          %v2593 = vunpack.c.3.s8 %v2513
          %v2594 = vunpack.c.3.s8 %v2514
          %v2595 = vunpack.c.0.s8 %v2515
          %v2596 = vunpack.c.0.s8 %v2516
          %v2597 = vunpack.c.1.s8 %v2515
          %v2598 = vunpack.c.1.s8 %v2516
          %v2599 = vunpack.c.2.s8 %v2515
          %v2600 = vunpack.c.2.s8 %v2516
          %v2601 = vunpack.c.3.s8 %v2515
          %v2602 = vunpack.c.3.s8 %v2516
          %v2603 = vunpack.c.0.s8 %v2517
          %v2604 = vunpack.c.0.s8 %v2518
          %v2605 = vunpack.c.1.s8 %v2517
          %v2606 = vunpack.c.1.s8 %v2518
          %v2607 = vunpack.c.2.s8 %v2517
          %v2608 = vunpack.c.2.s8 %v2518
          %v2609 = vunpack.c.3.s8 %v2517
          %v2610 = vunpack.c.3.s8 %v2518
          %v2611 = vunpack.c.0.s8 %v2519
          %v2612 = vunpack.c.0.s8 %v2520
          %v2613 = vunpack.c.1.s8 %v2519
          %v2614 = vunpack.c.1.s8 %v2520
          %v2615 = vunpack.c.2.s8 %v2519
          %v2616 = vunpack.c.2.s8 %v2520
          %v2617 = vunpack.c.3.s8 %v2519
          %v2618 = vunpack.c.3.s8 %v2520
          %v2619 = vunpack.c.0.s8 %v2521
          %v2620 = vunpack.c.0.s8 %v2522
          %v2621 = vunpack.c.1.s8 %v2521
          %v2622 = vunpack.c.1.s8 %v2522
          %v2623 = vunpack.c.2.s8 %v2521
          %v2624 = vunpack.c.2.s8 %v2522
          %v2625 = vunpack.c.3.s8 %v2521
          %v2626 = vunpack.c.3.s8 %v2522
          %v2627 = vunpack.c.0.s8 %v2523
          %v2628 = vunpack.c.0.s8 %v2524
          %v2629 = vunpack.c.1.s8 %v2523
          %v2630 = vunpack.c.1.s8 %v2524
          %v2631 = vunpack.c.2.s8 %v2523
          %v2632 = vunpack.c.2.s8 %v2524
          %v2633 = vunpack.c.3.s8 %v2523
          %v2634 = vunpack.c.3.s8 %v2524
          %v2635 = vunpack.c.0.s8 %v2525
          %v2636 = vunpack.c.0.s8 %v2526
          %v2637 = vunpack.c.1.s8 %v2525
          %v2638 = vunpack.c.1.s8 %v2526
          %v2639 = vunpack.c.2.s8 %v2525
          %v2640 = vunpack.c.2.s8 %v2526
          %v2641 = vunpack.c.3.s8 %v2525
          %v2642 = vunpack.c.3.s8 %v2526
          %v2643 = vunpack.c.0.s8 %v2527
          %v2644 = vunpack.c.0.s8 %v2528
          %v2645 = vunpack.c.1.s8 %v2527
          %v2646 = vunpack.c.1.s8 %v2528
          %v2647 = vunpack.c.2.s8 %v2527
          %v2648 = vunpack.c.2.s8 %v2528
          %v2649 = vunpack.c.3.s8 %v2527
          %v2650 = vunpack.c.3.s8 %v2528
          %v2651 = vunpack.c.0.s8 %v2529
          %v2652 = vunpack.c.0.s8 %v2530
          %v2653 = vunpack.c.1.s8 %v2529
          %v2654 = vunpack.c.1.s8 %v2530
          %v2655 = vunpack.c.2.s8 %v2529
          %v2656 = vunpack.c.2.s8 %v2530
          %v2657 = vunpack.c.3.s8 %v2529
          %v2658 = vunpack.c.3.s8 %v2530
          %v2659 = vcvt.s32.f32 %v2531
          %v2660 = vcvt.s32.f32 %v2532
          %v2661 = vcvt.s32.f32 %v2533
          %v2662 = vcvt.s32.f32 %v2534
          %v2663 = vcvt.s32.f32 %v2535
          %v2664 = vcvt.s32.f32 %v2536
          %v2665 = vcvt.s32.f32 %v2537
          %v2666 = vcvt.s32.f32 %v2538
          %v2667 = vcvt.s32.f32 %v2539
          %v2668 = vcvt.s32.f32 %v2540
          %v2669 = vcvt.s32.f32 %v2541
          %v2670 = vcvt.s32.f32 %v2542
          %v2671 = vcvt.s32.f32 %v2543
          %v2672 = vcvt.s32.f32 %v2544
          %v2673 = vcvt.s32.f32 %v2545
          %v2674 = vcvt.s32.f32 %v2546
          %v2675 = vcvt.s32.f32 %v2547
          %v2676 = vcvt.s32.f32 %v2548
          %v2677 = vcvt.s32.f32 %v2549
          %v2678 = vcvt.s32.f32 %v2550
          %v2679 = vcvt.s32.f32 %v2551
          %v2680 = vcvt.s32.f32 %v2552
          %v2681 = vcvt.s32.f32 %v2553
          %v2682 = vcvt.s32.f32 %v2554
          %v2683 = vcvt.s32.f32 %v2555
          %v2684 = vcvt.s32.f32 %v2556
          %v2685 = vcvt.s32.f32 %v2557
          %v2686 = vcvt.s32.f32 %v2558
          %v2687 = vcvt.s32.f32 %v2559
          %v2688 = vcvt.s32.f32 %v2560
          %v2689 = vcvt.s32.f32 %v2561
          %v2690 = vcvt.s32.f32 %v2562
          %v2691 = vcvt.s32.f32 %v2563
          %v2692 = vcvt.s32.f32 %v2564
          %v2693 = vcvt.s32.f32 %v2565
          %v2694 = vcvt.s32.f32 %v2566
          %v2695 = vcvt.s32.f32 %v2567
          %v2696 = vcvt.s32.f32 %v2568
          %v2697 = vcvt.s32.f32 %v2569
          %v2698 = vcvt.s32.f32 %v2570
          %v2699 = vcvt.s32.f32 %v2571
          %v2700 = vcvt.s32.f32 %v2572
          %v2701 = vcvt.s32.f32 %v2573
          %v2702 = vcvt.s32.f32 %v2574
          %v2703 = vcvt.s32.f32 %v2575
          %v2704 = vcvt.s32.f32 %v2576
          %v2705 = vcvt.s32.f32 %v2577
          %v2706 = vcvt.s32.f32 %v2578
          %v2707 = vcvt.s32.f32 %v2579
          %v2708 = vcvt.s32.f32 %v2580
          %v2709 = vcvt.s32.f32 %v2581
          %v2710 = vcvt.s32.f32 %v2582
          %v2711 = vcvt.s32.f32 %v2583
          %v2712 = vcvt.s32.f32 %v2584
          %v2713 = vcvt.s32.f32 %v2585
          %v2714 = vcvt.s32.f32 %v2586
          %v2715 = vcvt.s32.f32 %v2587
          %v2716 = vcvt.s32.f32 %v2588
          %v2717 = vcvt.s32.f32 %v2589
          %v2718 = vcvt.s32.f32 %v2590
          %v2719 = vcvt.s32.f32 %v2591
          %v2720 = vcvt.s32.f32 %v2592
          %v2721 = vcvt.s32.f32 %v2593
          %v2722 = vcvt.s32.f32 %v2594
          %v2723 = vcvt.s32.f32 %v2595
          %v2724 = vcvt.s32.f32 %v2596
          %v2725 = vcvt.s32.f32 %v2597
          %v2726 = vcvt.s32.f32 %v2598
          %v2727 = vcvt.s32.f32 %v2599
          %v2728 = vcvt.s32.f32 %v2600
          %v2729 = vcvt.s32.f32 %v2601
          %v2730 = vcvt.s32.f32 %v2602
          %v2731 = vcvt.s32.f32 %v2603
          %v2732 = vcvt.s32.f32 %v2604
          %v2733 = vcvt.s32.f32 %v2605
          %v2734 = vcvt.s32.f32 %v2606
          %v2735 = vcvt.s32.f32 %v2607
          %v2736 = vcvt.s32.f32 %v2608
          %v2737 = vcvt.s32.f32 %v2609
          %v2738 = vcvt.s32.f32 %v2610
          %v2739 = vcvt.s32.f32 %v2611
          %v2740 = vcvt.s32.f32 %v2612
          %v2741 = vcvt.s32.f32 %v2613
          %v2742 = vcvt.s32.f32 %v2614
          %v2743 = vcvt.s32.f32 %v2615
          %v2744 = vcvt.s32.f32 %v2616
          %v2745 = vcvt.s32.f32 %v2617
          %v2746 = vcvt.s32.f32 %v2618
          %v2747 = vcvt.s32.f32 %v2619
          %v2748 = vcvt.s32.f32 %v2620
          %v2749 = vcvt.s32.f32 %v2621
          %v2750 = vcvt.s32.f32 %v2622
          %v2751 = vcvt.s32.f32 %v2623
          %v2752 = vcvt.s32.f32 %v2624
          %v2753 = vcvt.s32.f32 %v2625
          %v2754 = vcvt.s32.f32 %v2626
          %v2755 = vcvt.s32.f32 %v2627
          %v2756 = vcvt.s32.f32 %v2628
          %v2757 = vcvt.s32.f32 %v2629
          %v2758 = vcvt.s32.f32 %v2630
          %v2759 = vcvt.s32.f32 %v2631
          %v2760 = vcvt.s32.f32 %v2632
          %v2761 = vcvt.s32.f32 %v2633
          %v2762 = vcvt.s32.f32 %v2634
          %v2763 = vcvt.s32.f32 %v2635
          %v2764 = vcvt.s32.f32 %v2636
          %v2765 = vcvt.s32.f32 %v2637
          %v2766 = vcvt.s32.f32 %v2638
          %v2767 = vcvt.s32.f32 %v2639
          %v2768 = vcvt.s32.f32 %v2640
          %v2769 = vcvt.s32.f32 %v2641
          %v2770 = vcvt.s32.f32 %v2642
          %v2771 = vcvt.s32.f32 %v2643
          %v2772 = vcvt.s32.f32 %v2644
          %v2773 = vcvt.s32.f32 %v2645
          %v2774 = vcvt.s32.f32 %v2646
          %v2775 = vcvt.s32.f32 %v2647
          %v2776 = vcvt.s32.f32 %v2648
          %v2777 = vcvt.s32.f32 %v2649
          %v2778 = vcvt.s32.f32 %v2650
          %v2779 = vcvt.s32.f32 %v2651
          %v2780 = vcvt.s32.f32 %v2652
          %v2781 = vcvt.s32.f32 %v2653
          %v2782 = vcvt.s32.f32 %v2654
          %v2783 = vcvt.s32.f32 %v2655
          %v2784 = vcvt.s32.f32 %v2656
          %v2785 = vcvt.s32.f32 %v2657
          %v2786 = vcvt.s32.f32 %v2658
          %v2787 = vpack.c.bf16 %v2661, %v2659
          %v2788 = vpack.c.bf16 %v2662, %v2660
          %v2789 = vpack.c.bf16 %v2665, %v2663
          %v2790 = vpack.c.bf16 %v2666, %v2664
          %v2791 = vpack.c.bf16 %v2669, %v2667
          %v2792 = vpack.c.bf16 %v2670, %v2668
          %v2793 = vpack.c.bf16 %v2673, %v2671
          %v2794 = vpack.c.bf16 %v2674, %v2672
          %v2795 = vpack.c.bf16 %v2677, %v2675
          %v2796 = vpack.c.bf16 %v2678, %v2676
          %v2797 = vpack.c.bf16 %v2681, %v2679
          %v2798 = vpack.c.bf16 %v2682, %v2680
          %v2799 = vpack.c.bf16 %v2685, %v2683
          %v2800 = vpack.c.bf16 %v2686, %v2684
          %v2801 = vpack.c.bf16 %v2689, %v2687
          %v2802 = vpack.c.bf16 %v2690, %v2688
          %v2803 = vpack.c.bf16 %v2693, %v2691
          %v2804 = vpack.c.bf16 %v2694, %v2692
          %v2805 = vpack.c.bf16 %v2697, %v2695
          %v2806 = vpack.c.bf16 %v2698, %v2696
          %v2807 = vpack.c.bf16 %v2701, %v2699
          %v2808 = vpack.c.bf16 %v2702, %v2700
          %v2809 = vpack.c.bf16 %v2705, %v2703
          %v2810 = vpack.c.bf16 %v2706, %v2704
          %v2811 = vpack.c.bf16 %v2709, %v2707
          %v2812 = vpack.c.bf16 %v2710, %v2708
          %v2813 = vpack.c.bf16 %v2713, %v2711
          %v2814 = vpack.c.bf16 %v2714, %v2712
          %v2815 = vpack.c.bf16 %v2717, %v2715
          %v2816 = vpack.c.bf16 %v2718, %v2716
          %v2817 = vpack.c.bf16 %v2721, %v2719
          %v2818 = vpack.c.bf16 %v2722, %v2720
          %v2819 = vpack.c.bf16 %v2725, %v2723
          %v2820 = vpack.c.bf16 %v2726, %v2724
          %v2821 = vpack.c.bf16 %v2729, %v2727
          %v2822 = vpack.c.bf16 %v2730, %v2728
          %v2823 = vpack.c.bf16 %v2733, %v2731
          %v2824 = vpack.c.bf16 %v2734, %v2732
          %v2825 = vpack.c.bf16 %v2737, %v2735
          %v2826 = vpack.c.bf16 %v2738, %v2736
          %v2827 = vpack.c.bf16 %v2741, %v2739
          %v2828 = vpack.c.bf16 %v2742, %v2740
          %v2829 = vpack.c.bf16 %v2745, %v2743
          %v2830 = vpack.c.bf16 %v2746, %v2744
          %v2831 = vpack.c.bf16 %v2749, %v2747
          %v2832 = vpack.c.bf16 %v2750, %v2748
          %v2833 = vpack.c.bf16 %v2753, %v2751
          %v2834 = vpack.c.bf16 %v2754, %v2752
          %v2835 = vpack.c.bf16 %v2757, %v2755
          %v2836 = vpack.c.bf16 %v2758, %v2756
          %v2837 = vpack.c.bf16 %v2761, %v2759
          %v2838 = vpack.c.bf16 %v2762, %v2760
          %v2839 = vpack.c.bf16 %v2765, %v2763
          %v2840 = vpack.c.bf16 %v2766, %v2764
          %v2841 = vpack.c.bf16 %v2769, %v2767
          %v2842 = vpack.c.bf16 %v2770, %v2768
          %v2843 = vpack.c.bf16 %v2773, %v2771
          %v2844 = vpack.c.bf16 %v2774, %v2772
          %v2845 = vpack.c.bf16 %v2777, %v2775
          %v2846 = vpack.c.bf16 %v2778, %v2776
          %v2847 = vpack.c.bf16 %v2781, %v2779
          %v2848 = vpack.c.bf16 %v2782, %v2780
          %v2849 = vpack.c.bf16 %v2785, %v2783
          %v2850 = vpack.c.bf16 %v2786, %v2784
          %2851 = vmatpush.bf16.msra.mxu0 %v2801
          %2852 = vmatpush.bf16.msra.mxu0 %v2799
          %2853 = vmatpush.bf16.msra.mxu0 %v2797
          %2854 = vmatpush.bf16.msra.mxu0 %v2795
          %2855 = vmatpush.bf16.msra.mxu0 %v2793
          %2856 = vmatpush.bf16.msra.mxu0 %v2791
          %2857 = vmatpush.bf16.msra.mxu0 %v2789
          %2858 = vmatpush.bf16.msra.mxu0 %v2787
          %2859 = vmatmul.bf16.gmra.mxu0 %v2495
          %v2860 = vpop.f32.mrf.mxu0
          %v2861 = vadd.f32 0.0, %v2860
          %v2862 = vpop.f32.mrf.mxu0
          %v2863 = vadd.f32 0.0, %v2862
          %2864 = vdwg.mxu0
          %2865 = vmatpush.bf16.msra.mxu0 %v2817
          %2866 = vmatpush.bf16.msra.mxu0 %v2815
          %2867 = vmatpush.bf16.msra.mxu0 %v2813
          %2868 = vmatpush.bf16.msra.mxu0 %v2811
          %2869 = vmatpush.bf16.msra.mxu0 %v2809
          %2870 = vmatpush.bf16.msra.mxu0 %v2807
          %2871 = vmatpush.bf16.msra.mxu0 %v2805
          %2872 = vmatpush.bf16.msra.mxu0 %v2803
          %2873 = vmatmul.bf16.gmra.mxu0 %v2496
          %v2874 = vpop.f32.mrf.mxu0
          %v2875 = vadd.f32 %v2861, %v2874
          %v2876 = vpop.f32.mrf.mxu0
          %v2877 = vadd.f32 %v2863, %v2876
          %2878 = vdwg.mxu0
          %2879 = vmatpush.bf16.msra.mxu0 %v2833
          %2880 = vmatpush.bf16.msra.mxu0 %v2831
          %2881 = vmatpush.bf16.msra.mxu0 %v2829
          %2882 = vmatpush.bf16.msra.mxu0 %v2827
          %2883 = vmatpush.bf16.msra.mxu0 %v2825
          %2884 = vmatpush.bf16.msra.mxu0 %v2823
          %2885 = vmatpush.bf16.msra.mxu0 %v2821
          %2886 = vmatpush.bf16.msra.mxu0 %v2819
          %2887 = vmatmul.bf16.gmra.mxu0 %v2497
          %v2888 = vpop.f32.mrf.mxu0
          %v2889 = vadd.f32 %v2875, %v2888
          %v2890 = vpop.f32.mrf.mxu0
          %v2891 = vadd.f32 %v2877, %v2890
          %2892 = vdwg.mxu0
          %2893 = vmatpush.bf16.msra.mxu0 %v2849
          %2894 = vmatpush.bf16.msra.mxu0 %v2847
          %2895 = vmatpush.bf16.msra.mxu0 %v2845
          %2896 = vmatpush.bf16.msra.mxu0 %v2843
          %2897 = vmatpush.bf16.msra.mxu0 %v2841
          %2898 = vmatpush.bf16.msra.mxu0 %v2839
          %2899 = vmatpush.bf16.msra.mxu0 %v2837
          %2900 = vmatpush.bf16.msra.mxu0 %v2835
          %2901 = vmatmul.bf16.gmra.mxu0 %v2498
          %v2902 = vpop.f32.mrf.mxu0
          %v2903 = vadd.f32 %v2889, %v2902
          %v2904 = vpop.f32.mrf.mxu0
          %v2905 = vadd.f32 %v2891, %v2904
          %2906 = vdwg.mxu0
          %2907 = vmatpush.bf16.msra.mxu0 %v2802
          %2908 = vmatpush.bf16.msra.mxu0 %v2800
          %2909 = vmatpush.bf16.msra.mxu0 %v2798
          %2910 = vmatpush.bf16.msra.mxu0 %v2796
          %2911 = vmatpush.bf16.msra.mxu0 %v2794
          %2912 = vmatpush.bf16.msra.mxu0 %v2792
          %2913 = vmatpush.bf16.msra.mxu0 %v2790
          %2914 = vmatpush.bf16.msra.mxu0 %v2788
          %2915 = vmatmul.bf16.gmra.mxu0 %v2495
          %v2916 = vpop.f32.mrf.mxu0
          %v2917 = vadd.f32 0.0, %v2916
          %v2918 = vpop.f32.mrf.mxu0
          %v2919 = vadd.f32 0.0, %v2918
          %2920 = vdwg.mxu0
          %2921 = vmatpush.bf16.msra.mxu0 %v2818
          %2922 = vmatpush.bf16.msra.mxu0 %v2816
          %2923 = vmatpush.bf16.msra.mxu0 %v2814
          %2924 = vmatpush.bf16.msra.mxu0 %v2812
          %2925 = vmatpush.bf16.msra.mxu0 %v2810
          %2926 = vmatpush.bf16.msra.mxu0 %v2808
          %2927 = vmatpush.bf16.msra.mxu0 %v2806
          %2928 = vmatpush.bf16.msra.mxu0 %v2804
          %2929 = vmatmul.bf16.gmra.mxu0 %v2496
          %v2930 = vpop.f32.mrf.mxu0
          %v2931 = vadd.f32 %v2917, %v2930
          %v2932 = vpop.f32.mrf.mxu0
          %v2933 = vadd.f32 %v2919, %v2932
          %2934 = vdwg.mxu0
          %2935 = vmatpush.bf16.msra.mxu0 %v2834
          %2936 = vmatpush.bf16.msra.mxu0 %v2832
          %2937 = vmatpush.bf16.msra.mxu0 %v2830
          %2938 = vmatpush.bf16.msra.mxu0 %v2828
          %2939 = vmatpush.bf16.msra.mxu0 %v2826
          %2940 = vmatpush.bf16.msra.mxu0 %v2824
          %2941 = vmatpush.bf16.msra.mxu0 %v2822
          %2942 = vmatpush.bf16.msra.mxu0 %v2820
          %2943 = vmatmul.bf16.gmra.mxu0 %v2497
          %v2944 = vpop.f32.mrf.mxu0
          %v2945 = vadd.f32 %v2931, %v2944
          %v2946 = vpop.f32.mrf.mxu0
          %v2947 = vadd.f32 %v2933, %v2946
          %2948 = vdwg.mxu0
          %2949 = vmatpush.bf16.msra.mxu0 %v2850
          %2950 = vmatpush.bf16.msra.mxu0 %v2848
          %2951 = vmatpush.bf16.msra.mxu0 %v2846
          %2952 = vmatpush.bf16.msra.mxu0 %v2844
          %2953 = vmatpush.bf16.msra.mxu0 %v2842
          %2954 = vmatpush.bf16.msra.mxu0 %v2840
          %2955 = vmatpush.bf16.msra.mxu0 %v2838
          %2956 = vmatpush.bf16.msra.mxu0 %v2836
          %2957 = vmatmul.bf16.gmra.mxu0 %v2498
          %v2958 = vpop.f32.mrf.mxu0
          %v2959 = vadd.f32 %v2945, %v2958
          %v2960 = vpop.f32.mrf.mxu0
          %v2961 = vadd.f32 %v2947, %v2960
          %2962 = vdwg.mxu0
          %v2963 = vld [vmem:[%s5] sm:$0x3]
          %v2965 = vperm.slane %v2963, 0
          %v2966 = vperm.slane %v2963, 1
          %v2969 = vmul.f32 %v2903, %v2965
          %v2970 = vmul.f32 %v2959, %v2966
          %v2971 = vmul.f32 %v2905, %v2965
          %v2972 = vmul.f32 %v2961, %v2966
          %v2973 = vld [vmem:[%s6] sm:$0x3]
          %v2975 = vperm.slane %v2973, 0
          %v2976 = vperm.slane %v2973, 1
          %v2979 = vadd.f32 %v2969, %v2975
          %v2980 = vadd.f32 %v2970, %v2976
          %v2981 = vadd.f32 %v2971, %v2975
          %v2982 = vadd.f32 %v2972, %v2976
          %v2983 = vmax.f32 %v2979, 0.0
          %v2984 = vmax.f32 %v2980, 0.0
          %v2985 = vmax.f32 %v2981, 0.0
          %v2986 = vmax.f32 %v2982, 0.0
          %v2987 = vpack.c.bf16 %v2985, %v2983
          %v2988 = vpack.c.bf16 %v2986, %v2984
          %v2989 = vld [vmem:[#allocation12] sm:$0xff]
          %v2990 = vld [vmem:[#allocation12 + $0x8] sm:$0xff]
          %v2991 = vld [vmem:[#allocation12 + $0x10] sm:$0xff]
          %v2992 = vld [vmem:[#allocation12 + $0x18] sm:$0xff]
          %v2993 = vld [vmem:[#allocation12 + $0x20] sm:$0xff]
          %v2994 = vld [vmem:[#allocation12 + $0x28] sm:$0xff]
          %v2995 = vld [vmem:[#allocation12 + $0x30] sm:$0xff]
          %v2996 = vld [vmem:[#allocation12 + $0x38] sm:$0xff]
          %v2997 = vunpack.c.0.s8 %v2989
          %v2998 = vunpack.c.1.s8 %v2989
          %v2999 = vunpack.c.2.s8 %v2989
          %v3000 = vunpack.c.3.s8 %v2989
          %v3001 = vunpack.c.0.s8 %v2990
          %v3002 = vunpack.c.1.s8 %v2990
          %v3003 = vunpack.c.2.s8 %v2990
          %v3004 = vunpack.c.3.s8 %v2990
          %v3005 = vunpack.c.0.s8 %v2991
          %v3006 = vunpack.c.1.s8 %v2991
          %v3007 = vunpack.c.2.s8 %v2991
          %v3008 = vunpack.c.3.s8 %v2991
          %v3009 = vunpack.c.0.s8 %v2992
          %v3010 = vunpack.c.1.s8 %v2992
          %v3011 = vunpack.c.2.s8 %v2992
          %v3012 = vunpack.c.3.s8 %v2992
          %v3013 = vunpack.c.0.s8 %v2993
          %v3014 = vunpack.c.1.s8 %v2993
          %v3015 = vunpack.c.2.s8 %v2993
          %v3016 = vunpack.c.3.s8 %v2993
          %v3017 = vunpack.c.0.s8 %v2994
          %v3018 = vunpack.c.1.s8 %v2994
          %v3019 = vunpack.c.2.s8 %v2994
          %v3020 = vunpack.c.3.s8 %v2994
          %v3021 = vunpack.c.0.s8 %v2995
          %v3022 = vunpack.c.1.s8 %v2995
          %v3023 = vunpack.c.2.s8 %v2995
          %v3024 = vunpack.c.3.s8 %v2995
          %v3025 = vunpack.c.0.s8 %v2996
          %v3026 = vunpack.c.1.s8 %v2996
          %v3027 = vunpack.c.2.s8 %v2996
          %v3028 = vunpack.c.3.s8 %v2996
          %v3029 = vcvt.s32.f32 %v2997
          %v3030 = vcvt.s32.f32 %v2998
          %v3031 = vcvt.s32.f32 %v2999
          %v3032 = vcvt.s32.f32 %v3000
          %v3033 = vcvt.s32.f32 %v3001
          %v3034 = vcvt.s32.f32 %v3002
          %v3035 = vcvt.s32.f32 %v3003
          %v3036 = vcvt.s32.f32 %v3004
          %v3037 = vcvt.s32.f32 %v3005
          %v3038 = vcvt.s32.f32 %v3006
          %v3039 = vcvt.s32.f32 %v3007
          %v3040 = vcvt.s32.f32 %v3008
          %v3041 = vcvt.s32.f32 %v3009
          %v3042 = vcvt.s32.f32 %v3010
          %v3043 = vcvt.s32.f32 %v3011
          %v3044 = vcvt.s32.f32 %v3012
          %v3045 = vcvt.s32.f32 %v3013
          %v3046 = vcvt.s32.f32 %v3014
          %v3047 = vcvt.s32.f32 %v3015
          %v3048 = vcvt.s32.f32 %v3016
          %v3049 = vcvt.s32.f32 %v3017
          %v3050 = vcvt.s32.f32 %v3018
          %v3051 = vcvt.s32.f32 %v3019
          %v3052 = vcvt.s32.f32 %v3020
          %v3053 = vcvt.s32.f32 %v3021
          %v3054 = vcvt.s32.f32 %v3022
          %v3055 = vcvt.s32.f32 %v3023
          %v3056 = vcvt.s32.f32 %v3024
          %v3057 = vcvt.s32.f32 %v3025
          %v3058 = vcvt.s32.f32 %v3026
          %v3059 = vcvt.s32.f32 %v3027
          %v3060 = vcvt.s32.f32 %v3028
          %v3061 = vpack.c.bf16 %v3030, %v3029
          %v3062 = vpack.c.bf16 %v3032, %v3031
          %v3063 = vpack.c.bf16 %v3034, %v3033
          %v3064 = vpack.c.bf16 %v3036, %v3035
          %v3065 = vpack.c.bf16 %v3038, %v3037
          %v3066 = vpack.c.bf16 %v3040, %v3039
          %v3067 = vpack.c.bf16 %v3042, %v3041
          %v3068 = vpack.c.bf16 %v3044, %v3043
          %v3069 = vpack.c.bf16 %v3046, %v3045
          %v3070 = vpack.c.bf16 %v3048, %v3047
          %v3071 = vpack.c.bf16 %v3050, %v3049
          %v3072 = vpack.c.bf16 %v3052, %v3051
          %v3073 = vpack.c.bf16 %v3054, %v3053
          %v3074 = vpack.c.bf16 %v3056, %v3055
          %v3075 = vpack.c.bf16 %v3058, %v3057
          %v3076 = vpack.c.bf16 %v3060, %v3059
          %3077 = vmatpush.bf16.msra.mxu0 %v3068
          %3078 = vmatpush.bf16.msra.mxu0 %v3067
          %3079 = vmatpush.bf16.msra.mxu0 %v3066
          %3080 = vmatpush.bf16.msra.mxu0 %v3065
          %3081 = vmatpush.bf16.msra.mxu0 %v3064
          %3082 = vmatpush.bf16.msra.mxu0 %v3063
          %3083 = vmatpush.bf16.msra.mxu0 %v3062
          %3084 = vmatpush.bf16.msra.mxu0 %v3061
          %3085 = vmatmul.bf16.gmra.mxu0 %v2987
          %v3086 = vpop.f32.mrf.mxu0
          %v3087 = vadd.f32 0.0, %v3086
          %v3088 = vpop.f32.mrf.mxu0
          %v3089 = vadd.f32 0.0, %v3088
          %3090 = vdwg.mxu0
          %3091 = vmatpush.bf16.msra.mxu0 %v3076
          %3092 = vmatpush.bf16.msra.mxu0 %v3075
          %3093 = vmatpush.bf16.msra.mxu0 %v3074
          %3094 = vmatpush.bf16.msra.mxu0 %v3073
          %3095 = vmatpush.bf16.msra.mxu0 %v3072
          %3096 = vmatpush.bf16.msra.mxu0 %v3071
          %3097 = vmatpush.bf16.msra.mxu0 %v3070
          %3098 = vmatpush.bf16.msra.mxu0 %v3069
          %3099 = vmatmul.bf16.gmra.mxu0 %v2988
          %v3100 = vpop.f32.mrf.mxu0
          %v3101 = vadd.f32 %v3087, %v3100
          %v3102 = vpop.f32.mrf.mxu0
          %v3103 = vadd.f32 %v3089, %v3102
          %3104 = vdwg.mxu0
          %v3105 = vld [vmem:[%s8] sm:$0x1]
          %v3107 = vperm.slane %v3105, 0
          %v3109 = vmul.f32 %v3101, %v3107
          %v3110 = vmul.f32 %v3103, %v3107
          %v3111 = vld [vmem:[%s9] sm:$0x1]
          %v3113 = vperm.slane %v3111, 0
          %v3115 = vadd.f32 %v3109, %v3113
          %v3116 = vadd.f32 %v3110, %v3113
          %v3117 = vmul.f32 %v3115, %v3115
          %v3118 = vmul.f32 %v3116, %v3116
          %3119 = vadd.xlane.f32.xlu0 %v3117
          %v3120 = vpop.xlane.xlu0 %3119
          %3121 = vadd.xlane.f32.xlu0 %v3118
          %v3122 = vpop.xlane.xlu0 %3121
          %v3123 = vmax.f32 %v3120, 1e-24
          %v3124 = vmax.f32 %v3122, 1e-24
          %v3125 = vrsqrt.pop %v3123
          %v3126 = vmul.f32 %v3125, %v3123
          %v3127 = vmul.f32 %v3126, %v3125
          %v3128 = vmul.f32 0.5, %v3127
          %v3129 = vsub.f32 1.5, %v3128
          %v3130 = vmul.f32 %v3125, %v3129
          %vm3131 = vweird.f32 %v3123
          %vm3132 = vweird.f32 %v3125
          %vm3133 = vmor %vm3131, %vm3132
          %v3134 = vsel %vm3133, %v3125, %v3130
          %v3135 = vrsqrt.pop %v3124
          %v3136 = vmul.f32 %v3135, %v3124
          %v3137 = vmul.f32 %v3136, %v3135
          %v3138 = vmul.f32 0.5, %v3137
          %v3139 = vsub.f32 1.5, %v3138
          %v3140 = vmul.f32 %v3135, %v3139
          %vm3141 = vweird.f32 %v3124
          %vm3142 = vweird.f32 %v3135
          %vm3143 = vmor %vm3141, %vm3142
          %v3144 = vsel %vm3143, %v3135, %v3140
          %v3145 = vmul.f32 %v3115, %v3134
          %v3146 = vmul.f32 %v3116, %v3144
          %3147 = vst [vmem:[#allocation14] sm:$0xff] %v3145
          %3148 = vst [vmem:[#allocation14 + $0x8] sm:$0xff] %v3146
        $region92: #{tpu_custom_call.1} parent=59 // pred_fallthru
          _
        // Predicated region
        $region93: #{tpu_custom_call.1} parent=59 // pred_check
          %p3149 = pneg %p282
        $region94: #{tpu_custom_call.1} parent=59 // pred_check_branch
          %3151 = sbr.rel (%p3149) target = $region96
        $region95: #{tpu_custom_call.1} parent=59 // pred_region
          %s3152 = smul.u32 2, %s34
          %3154 = vsyncadd [#allocation5], 0
          %s3155 = smul.addr %s3152, 8
          %s3156 = scalar_lea.hbm %s10, %s3155
          %s3157 = sshll.u32 [#allocation14], 4
          %s3158 = int_to_ptr.vmem [resolvable:$true] %s3157
          %s3159 = sshll.u32 %s3156, 4
          %s3160 = int_to_ptr.hbm [resolvable:$true] %s3159
          %3165 = dma.vmem_to_hbm [thread:$0]  %s3158, 256, %s3160, [#allocation5], 128, 128, 8
        $region96: #{tpu_custom_call.1} parent=59 // pred_fallthru
          _
        // Predicated region
        $region97: #{tpu_custom_call.1} parent=59 // pred_check
          %p3166 = pneg %p282
        $region98: #{tpu_custom_call.1} parent=59 // pred_check_branch
          %3168 = sbr.rel (%p3166) target = $region100
        $region99: #{tpu_custom_call.1} parent=59 // pred_region
          %3170 = dma.done [#allocation5], 256
        $region100: #{tpu_custom_call.1} parent=59 // pred_fallthru
          _
      $region60: #{tpu_custom_call.1} parent=5 // pred_fallthru
        _
      %p3171 = scmp.le.s32.totalorder 2, %s25
      // Predicated region
      $region101: #{tpu_custom_call.1} parent=5 // pred_check
        %p3172 = pneg %p3171
      $region102: #{tpu_custom_call.1} parent=5 // pred_check_branch
        %3174 = sbr.rel (%p3172) target = $region104
      $region103: #{tpu_custom_call.1} parent=5 // pred_region
        %s3175 = ssub.s32 %s25, 2
      $region104: #{tpu_custom_call.1} parent=5 // pred_fallthru
        _
    $region6: #{tpu_custom_call.1} parent=1 // loop_footer
      %s29 = sadd.s32 1, %s25
    $region7: #{tpu_custom_call.1} parent=1 // loop_footer_branch
      %24 = sbr.rel target = $region3
    $region8: #{tpu_custom_call.1} parent=1 // loop_exit
      _
    %3176 = vsyncpa [#allocation4], 1
    %s3177 = scalar_lea.sflag [#allocation4], 1
    %3178 = vsyncpa %s3177, 1
    %3179 = vsyncpa [#allocation7], 1
    %s3180 = scalar_lea.sflag [#allocation7], 1
    %3181 = vsyncpa %s3180, 1
    %3182 = vsyncpa [#allocation10], 1
    %3183 = vsyncpa [#allocation13], 1
    %3184 = vsyncpa [#allocation5], 1
    %s3185 = scalar_lea.sflag [#allocation5], 1
    %3186 = vsyncpa %s3185, 1

</llo_original>
